<compile_context>
chip_gen: v7x
topology: tpu7x:2x2x1
jax: 0.10.0
libtpu: 0.0.40
codegen_flags: <defaults>
</compile_context>

<pallas_src>
import functools

import numpy as np
import jax
import jax.numpy as jnp
from jax.experimental import pallas as pl
from jax.experimental.pallas import tpu as pltpu

LEAKY_SLOPE = 0.2
BN_EPS = 1e-5


# --------------------------- Pallas kernels ---------------------------

def _conv_act_kernel(w_ref, x_ref, o_ref):
    # y = leaky_relu( w @ x ), w: (Cout, K) bf16, x: (K, tm) bf16, out: (Cout, tm) f32.
    y = jnp.dot(w_ref[...], x_ref[...], preferred_element_type=jnp.float32)
    o_ref[...] = jnp.where(y > 0, y, LEAKY_SLOPE * y)


def _conv_bn_act_kernel(w_ref, x_ref, g_ref, b_ref, o_ref, *, inv_m):
    # Fused: conv-matmul + BatchNorm (training-mode batch stats) + LeakyReLU, single pass.
    # w: (Cout, K) bf16, x: (K, M) bf16, gamma/beta: (Cout, 1) f32, out: (Cout, M) f32.
    y = jnp.dot(w_ref[...], x_ref[...], preferred_element_type=jnp.float32)  # (Cout, M)
    mean = jnp.sum(y, axis=1, keepdims=True) * inv_m                         # (Cout, 1)
    var = jnp.sum(y * y, axis=1, keepdims=True) * inv_m - mean * mean        # biased var
    scale = g_ref[...] * jax.lax.rsqrt(var + BN_EPS)
    yn = (y - mean) * scale + b_ref[...]
    o_ref[...] = jnp.where(yn > 0, yn, LEAKY_SLOPE * yn)


def _tail_kernel(w5_ref, x5_ref, g_ref, b_ref, w6_ref, sel_ref, o_ref, *, inv_m):
    # Fused tail: layer-5 conv + BN + LeakyReLU, then the final 4x4 conv (-> 1 channel,
    # 1x1 spatial) + Sigmoid, all in VMEM.
    #   w5: (C5, K5) bf16, x5: (K5, M5) bf16 with M5 = N*16 (4x4 spatial per sample)
    #   w6: (C5, M5) f32  = final conv weight tiled across the batch
    #   sel: (M5, N) f32  = block-diagonal ones (segment-sum selector, avoids reshapes)
    #   out: (1, N) f32
    y = jnp.dot(w5_ref[...], x5_ref[...], preferred_element_type=jnp.float32)  # (C5, M5)
    mean = jnp.sum(y, axis=1, keepdims=True) * inv_m
    var = jnp.sum(y * y, axis=1, keepdims=True) * inv_m - mean * mean
    scale = g_ref[...] * jax.lax.rsqrt(var + BN_EPS)
    yn = (y - mean) * scale + b_ref[...]
    ya = jnp.where(yn > 0, yn, LEAKY_SLOPE * yn)                               # (C5, M5)

    z = ya * w6_ref[...]                                                       # (C5, M5)
    per = jnp.dot(z, sel_ref[...], preferred_element_type=jnp.float32)         # (C5, N)
    logits = jnp.sum(per, axis=0, keepdims=True)                               # (1, N)
    o_ref[...] = jax.nn.sigmoid(logits)


# --------------------------- Pallas wrappers ---------------------------

def _conv_act_pallas(w2, xcolT, tm):
    Cout, K = w2.shape
    M = xcolT.shape[1]
    assert M % tm == 0
    return pl.pallas_call(
        _conv_act_kernel,
        out_shape=jax.ShapeDtypeStruct((Cout, M), jnp.float32),
        grid=(M // tm,),
        in_specs=[
            pl.BlockSpec((Cout, K), lambda i: (0, 0)),
            pl.BlockSpec((K, tm), lambda i: (0, i)),
        ],
        out_specs=pl.BlockSpec((Cout, tm), lambda i: (0, i)),
        compiler_params=pltpu.CompilerParams(dimension_semantics=("parallel",)),
    )(w2, xcolT)


def _conv_bn_act_pallas(w2, xcolT, gamma, beta):
    Cout, K = w2.shape
    M = xcolT.shape[1]
    return pl.pallas_call(
        functools.partial(_conv_bn_act_kernel, inv_m=float(1.0 / M)),
        out_shape=jax.ShapeDtypeStruct((Cout, M), jnp.float32),
        grid=(1,),
        in_specs=[
            pl.BlockSpec((Cout, K), lambda i: (0, 0)),
            pl.BlockSpec((K, M), lambda i: (0, 0)),
            pl.BlockSpec((Cout, 1), lambda i: (0, 0)),
            pl.BlockSpec((Cout, 1), lambda i: (0, 0)),
        ],
        out_specs=pl.BlockSpec((Cout, M), lambda i: (0, 0)),
        compiler_params=pltpu.CompilerParams(dimension_semantics=("arbitrary",)),
    )(w2, xcolT, gamma, beta)


def _tail_pallas(w5, xcol5, gamma, beta, w6t, sel):
    C5, K5 = w5.shape
    M5 = xcol5.shape[1]
    N = sel.shape[1]
    return pl.pallas_call(
        functools.partial(_tail_kernel, inv_m=float(1.0 / M5)),
        out_shape=jax.ShapeDtypeStruct((1, N), jnp.float32),
        grid=(1,),
        in_specs=[
            pl.BlockSpec((C5, K5), lambda i: (0, 0)),
            pl.BlockSpec((K5, M5), lambda i: (0, 0)),
            pl.BlockSpec((C5, 1), lambda i: (0, 0)),
            pl.BlockSpec((C5, 1), lambda i: (0, 0)),
            pl.BlockSpec((C5, M5), lambda i: (0, 0)),
            pl.BlockSpec((M5, N), lambda i: (0, 0)),
        ],
        out_specs=pl.BlockSpec((1, N), lambda i: (0, 0)),
        compiler_params=pltpu.CompilerParams(dimension_semantics=("arbitrary",)),
    )(w5, xcol5, gamma, beta, w6t, sel)


# --------------------------- JAX glue (layout only) ---------------------------

def _im2col_cnhw(x, k, stride, pad):
    # x: (C, N, H, W)  ->  (K, M) with K ordered (c, kh, kw) and M ordered (n, oh, ow).
    if pad:
        x = jnp.pad(x, ((0, 0), (0, 0), (pad, pad), (pad, pad)))
    C, N, Hp, Wp = x.shape
    OH = (Hp - k) // stride + 1
    OW = (Wp - k) // stride + 1
    patches = []
    for kh in range(k):
        for kw in range(k):
            patches.append(
                x[:, :, kh:kh + stride * (OH - 1) + 1:stride,
                        kw:kw + stride * (OW - 1) + 1:stride])
    xcol = jnp.stack(patches, axis=1)                     # (C, k*k, N, OH, OW)
    return xcol.reshape(C * k * k, N * OH * OW), OH, OW


def _pick_tile(M, target=2048):
    if M <= target:
        return M
    t = target
    while M % t != 0:
        t //= 2
    return t


# --------------------------- full forward (Pallas path) ---------------------------

def discriminator_stage2(x_nchw, params):
    N = x_nchw.shape[0]
    x = jnp.transpose(x_nchw, (1, 0, 2, 3))               # NCHW -> CNHW (channel-major)

    # Layer 1: Conv(stride 2, pad 1) + LeakyReLU, tiled over the lane (M) axis.
    xcol, OH, OW = _im2col_cnhw(x, 4, 2, 1)
    w1 = params["w1"].reshape(params["w1"].shape[0], -1)   # (Cout, Cin*16)
    y = _conv_act_pallas(w1.astype(jnp.bfloat16), xcol.astype(jnp.bfloat16),
                         tm=_pick_tile(xcol.shape[1]))
    x = y.reshape(-1, N, OH, OW)

    # Layers 2-4: fused Conv + BatchNorm(batch stats) + LeakyReLU, one kernel each.
    for li in range(2, 5):
        w = params[f"w{li}"]
        g = params[f"g{li}"].reshape(-1, 1)
        b = params[f"b{li}"].reshape(-1, 1)
        xcol, OH, OW = _im2col_cnhw(x, 4, 2, 1)
        y = _conv_bn_act_pallas(w.reshape(w.shape[0], -1).astype(jnp.bfloat16),
                                xcol.astype(jnp.bfloat16), g, b)
        x = y.reshape(-1, N, OH, OW)

    # Layers 5+6 fused: Conv5 + BN + LeakyReLU + final 4x4 Conv (-> 1) + Sigmoid.
    xcol5, OH, OW = _im2col_cnhw(x, 4, 2, 1)               # (C4*16, N*16), OH=OW=4
    w5 = params["w5"].reshape(params["w5"].shape[0], -1)   # (128, 1024)
    g5 = params["g5"].reshape(-1, 1)
    b5 = params["b5"].reshape(-1, 1)
    C5 = w5.shape[0]
    spatial = OH * OW                                      # 16
    w6rs = params["w6"].reshape(C5, spatial)               # (128, 16), (c, kh*4+kw)
    w6t = jnp.tile(w6rs, (1, N))                           # (128, N*16), matches M order
    sel = jnp.repeat(jnp.eye(N, dtype=jnp.float32), spatial, axis=0)   # (N*16, N)
    y = _tail_pallas(w5.astype(jnp.bfloat16), xcol5.astype(jnp.bfloat16),
                     g5, b5, w6t, sel)                     # (1, N)
    return y.reshape(N, 1, 1, 1)


# --------------------------- pure-JAX reference ---------------------------

def _ref_forward(x, params):
    def conv(h, w, stride, pad):
        return jax.lax.conv_general_dilated(
            h, w, window_strides=(stride, stride),
            padding=[(pad, pad), (pad, pad)],
            dimension_numbers=("NCHW", "OIHW", "NCHW"))

    def bn(h, g, b):
        mean = jnp.mean(h, axis=(0, 2, 3), keepdims=True)
        var = jnp.mean(h * h, axis=(0, 2, 3), keepdims=True) - mean * mean
        return (h - mean) * (g.reshape(1, -1, 1, 1) / jnp.sqrt(var + BN_EPS)) \
            + b.reshape(1, -1, 1, 1)

    def leaky(h):
        return jnp.where(h > 0, h, LEAKY_SLOPE * h)

    h = leaky(conv(x, params["w1"], 2, 1))
    for li in range(2, 6):
        h = leaky(bn(conv(h, params[f"w{li}"], 2, 1), params[f"g{li}"], params[f"b{li}"]))
    return jax.nn.sigmoid(conv(h, params["w6"], 1, 0))


# --------------------------- params ---------------------------

def init_params(key, nc=3, ndf=8):
    ks = jax.random.split(key, 6)

    def conv_w(k, cout, cin):
        return 0.02 * jax.random.normal(k, (cout, cin, 4, 4), jnp.float32)

    p = {"w1": conv_w(ks[0], ndf, nc)}
    chans = [ndf, ndf * 2, ndf * 4, ndf * 8, ndf * 16]
    for li in range(1, 5):
        cin, cout = chans[li - 1], chans[li]
        p[f"w{li + 1}"] = conv_w(ks[li], cout, cin)
        p[f"g{li + 1}"] = jnp.ones((cout,), jnp.float32)   # BatchNorm default weight
        p[f"b{li + 1}"] = jnp.zeros((cout,), jnp.float32)  # BatchNorm default bias
    p["w6"] = conv_w(ks[5], 1, ndf * 16)
    return p


if __name__ == "__main__":
    key = jax.random.PRNGKey(0)
    pkey, xkey = jax.random.split(key)

    nc, ndf = 3, 8
    N, S = 2, 128   # architecture requires 128x128 input to reach the final 4x4 -> 1x1 conv
    params = init_params(pkey, nc=nc, ndf=ndf)
    x = jax.random.normal(xkey, (N, nc, S, S), jnp.float32)

    fwd = jax.jit(discriminator_stage2)
    out = jax.block_until_ready(fwd(x, params))
    assert out.shape == (N, 1, 1, 1), out.shape

    ref = jax.block_until_ready(jax.jit(_ref_forward)(x, params))
    np.testing.assert_allclose(np.asarray(out), np.asarray(ref), atol=2e-2, rtol=2e-2)

    print("KERNEL_OK")
</pallas_src>

<mosaic_0001>
module attributes {stable_mosaic.version = 11 : i64} {
  func.func @_conv_act_kernel(%arg0: i32, %arg1: memref<8x48xbf16, #tpu.memory_space<vmem>>, %arg2: memref<48x2048xbf16, #tpu.memory_space<vmem>>, %arg3: memref<8x2048xf32, #tpu.memory_space<vmem>>) attributes {dimension_semantics = [#tpu.dimension_semantics<parallel>], iteration_bounds = array<i64: 4>, scalar_prefetch = 0 : i64, scratch_operands = 0 : i64, tpu.core_type = #tpu.core_type<tc>, window_params = [{pipeline_mode = #tpu.pipeline_mode<synchronous>, transform_indices = @transform_0, window_bounds = array<i64: 8, 48>}, {transform_indices = @transform_1, window_bounds = array<i64: 48, 2048>}, {transform_indices = @transform_2, window_bounds = array<i64: 8, 2048>}]} {
    %c0 = arith.constant 0 : index
    %c0_0 = arith.constant 0 : index
    %0 = vector.load %arg1[%c0, %c0_0] : memref<8x48xbf16, #tpu.memory_space<vmem>>, vector<8x48xbf16>
    %c0_1 = arith.constant 0 : index
    %c0_2 = arith.constant 0 : index
    %1 = vector.load %arg2[%c0_1, %c0_2] : memref<48x2048xbf16, #tpu.memory_space<vmem>>, vector<48x2048xbf16>
    %cst = arith.constant dense<0.000000e+00> : vector<8x2048xf32>
    %2 = tpu.matmul %0, %1, %cst {dimension_numbers = #tpu.dot_dimension_numbers<[1], [0], [0], [1], [0, 0, 1, 1], [], []>} : vector<8x48xbf16>, vector<48x2048xbf16>, vector<8x2048xf32> -> vector<8x2048xf32>
    %cst_3 = arith.constant 0.000000e+00 : f32
    %3 = vector.broadcast %cst_3 : f32 to vector<8x2048xf32>
    %4 = arith.cmpf ogt, %2, %3 : vector<8x2048xf32>
    %cst_4 = arith.constant 2.000000e-01 : f32
    %5 = vector.broadcast %cst_4 : f32 to vector<8x2048xf32>
    %6 = arith.mulf %5, %2 : vector<8x2048xf32>
    %7 = arith.select %4, %2, %6 : vector<8x2048xi1>, vector<8x2048xf32>
    %c0_5 = arith.constant 0 : index
    %c0_6 = arith.constant 0 : index
    %8 = vector.load %arg3[%c0_5, %c0_6] : memref<8x2048xf32, #tpu.memory_space<vmem>>, vector<8x2048xf32>
    tpu.vector_store %arg3[%c0_5, %c0_6], %7 {strides = array<i32>} : memref<8x2048xf32, #tpu.memory_space<vmem>>, vector<8x2048xf32>,
    return
  }
  func.func @transform_0(%arg0: i32) -> (i32, i32) {
    %c0_i32 = arith.constant 0 : i32
    %c0_i32_0 = arith.constant 0 : i32
    %c0_i32_1 = arith.constant 0 : i32
    return %c0_i32, %c0_i32_0 : i32, i32
  }
  func.func @transform_1(%arg0: i32) -> (i32, i32) {
    %c0_i32 = arith.constant 0 : i32
    %c0_i32_0 = arith.constant 0 : i32
    return %c0_i32, %arg0 : i32, i32
  }
  func.func @transform_2(%arg0: i32) -> (i32, i32) {
    %c0_i32 = arith.constant 0 : i32
    %c0_i32_0 = arith.constant 0 : i32
    return %c0_i32, %arg0 : i32, i32
  }
}

module attributes {stable_mosaic.version = 11 : i64} {
  func.func @_conv_bn_act_kernel(%arg0: i32, %arg1: memref<16x128xbf16, #tpu.memory_space<vmem>>, %arg2: memref<128x2048xbf16, #tpu.memory_space<vmem>>, %arg3: memref<16x1xf32, #tpu.memory_space<vmem>>, %arg4: memref<16x1xf32, #tpu.memory_space<vmem>>, %arg5: memref<16x2048xf32, #tpu.memory_space<vmem>>) attributes {dimension_semantics = [#tpu.dimension_semantics<arbitrary>], iteration_bounds = array<i64: 1>, scalar_prefetch = 0 : i64, scratch_operands = 0 : i64, tpu.core_type = #tpu.core_type<tc>, window_params = [{pipeline_mode = #tpu.pipeline_mode<synchronous>, transform_indices = @transform_0, window_bounds = array<i64: 16, 128>}, {pipeline_mode = #tpu.pipeline_mode<synchronous>, transform_indices = @transform_1, window_bounds = array<i64: 128, 2048>}, {pipeline_mode = #tpu.pipeline_mode<synchronous>, transform_indices = @transform_2, window_bounds = array<i64: 16, 1>}, {pipeline_mode = #tpu.pipeline_mode<synchronous>, transform_indices = @transform_3, window_bounds = array<i64: 16, 1>}, {pipeline_mode = #tpu.pipeline_mode<synchronous>, transform_indices = @transform_4, window_bounds = array<i64: 16, 2048>}]} {
    %c0 = arith.constant 0 : index
    %c0_0 = arith.constant 0 : index
    %0 = vector.load %arg1[%c0, %c0_0] : memref<16x128xbf16, #tpu.memory_space<vmem>>, vector<16x128xbf16>
    %c0_1 = arith.constant 0 : index
    %c0_2 = arith.constant 0 : index
    %1 = vector.load %arg2[%c0_1, %c0_2] : memref<128x2048xbf16, #tpu.memory_space<vmem>>, vector<128x2048xbf16>
    %cst = arith.constant dense<0.000000e+00> : vector<16x2048xf32>
    %2 = tpu.matmul %0, %1, %cst {dimension_numbers = #tpu.dot_dimension_numbers<[1], [0], [0], [1], [0, 0, 1, 1], [], []>} : vector<16x128xbf16>, vector<128x2048xbf16>, vector<16x2048xf32> -> vector<16x2048xf32>
    %cst_3 = arith.constant dense<0.000000e+00> : vector<16xf32>
    %3 = vector.multi_reduction <add>, %2, %cst_3 [1] : vector<16x2048xf32> to vector<16xf32>
    %4 = vector.shape_cast %3 : vector<16xf32> to vector<16x1xf32>
    %cst_4 = arith.constant 4.8828125E-4 : f32
    %5 = vector.broadcast %cst_4 : f32 to vector<16x1xf32>
    %6 = arith.mulf %4, %5 : vector<16x1xf32>
    %7 = arith.mulf %2, %2 : vector<16x2048xf32>
    %cst_5 = arith.constant dense<0.000000e+00> : vector<16xf32>
    %8 = vector.multi_reduction <add>, %7, %cst_5 [1] : vector<16x2048xf32> to vector<16xf32>
    %9 = vector.shape_cast %8 : vector<16xf32> to vector<16x1xf32>
    %cst_6 = arith.constant 4.8828125E-4 : f32
    %10 = vector.broadcast %cst_6 : f32 to vector<16x1xf32>
    %11 = arith.mulf %9, %10 : vector<16x1xf32>
    %12 = arith.mulf %6, %6 : vector<16x1xf32>
    %13 = arith.subf %11, %12 : vector<16x1xf32>
    %c0_7 = arith.constant 0 : index
    %c0_8 = arith.constant 0 : index
    %14 = vector.load %arg3[%c0_7, %c0_8] : memref<16x1xf32, #tpu.memory_space<vmem>>, vector<16x1xf32>
    %cst_9 = arith.constant 9.99999974E-6 : f32
    %15 = vector.broadcast %cst_9 : f32 to vector<16x1xf32>
    %16 = arith.addf %13, %15 : vector<16x1xf32>
    %17 = math.rsqrt %16 : vector<16x1xf32>
    %18 = arith.mulf %14, %17 : vector<16x1xf32>
    %19 = vector.broadcast %6 : vector<16x1xf32> to vector<16x2048xf32>
    %20 = arith.subf %2, %19 : vector<16x2048xf32>
    %21 = vector.broadcast %18 : vector<16x1xf32> to vector<16x2048xf32>
    %22 = arith.mulf %20, %21 : vector<16x2048xf32>
    %c0_10 = arith.constant 0 : index
    %c0_11 = arith.constant 0 : index
    %23 = vector.load %arg4[%c0_10, %c0_11] : memref<16x1xf32, #tpu.memory_space<vmem>>, vector<16x1xf32>
    %24 = vector.broadcast %23 : vector<16x1xf32> to vector<16x2048xf32>
    %25 = arith.addf %22, %24 : vector<16x2048xf32>
    %cst_12 = arith.constant 0.000000e+00 : f32
    %26 = vector.broadcast %cst_12 : f32 to vector<16x2048xf32>
    %27 = arith.cmpf ogt, %25, %26 : vector<16x2048xf32>
    %cst_13 = arith.constant 2.000000e-01 : f32
    %28 = vector.broadcast %cst_13 : f32 to vector<16x2048xf32>
    %29 = arith.mulf %28, %25 : vector<16x2048xf32>
    %30 = arith.select %27, %25, %29 : vector<16x2048xi1>, vector<16x2048xf32>
    %c0_14 = arith.constant 0 : index
    %c0_15 = arith.constant 0 : index
    %31 = vector.load %arg5[%c0_14, %c0_15] : memref<16x2048xf32, #tpu.memory_space<vmem>>, vector<16x2048xf32>
    tpu.vector_store %arg5[%c0_14, %c0_15], %30 {strides = array<i32>} : memref<16x2048xf32, #tpu.memory_space<vmem>>, vector<16x2048xf32>,
    return
  }
  func.func @transform_0(%arg0: i32) -> (i32, i32) {
    %c0_i32 = arith.constant 0 : i32
    %c0_i32_0 = arith.constant 0 : i32
    %c0_i32_1 = arith.constant 0 : i32
    return %c0_i32, %c0_i32_0 : i32, i32
  }
  func.func @transform_1(%arg0: i32) -> (i32, i32) {
    %c0_i32 = arith.constant 0 : i32
    %c0_i32_0 = arith.constant 0 : i32
    %c0_i32_1 = arith.constant 0 : i32
    return %c0_i32, %c0_i32_0 : i32, i32
  }
  func.func @transform_2(%arg0: i32) -> (i32, i32) {
    %c0_i32 = arith.constant 0 : i32
    %c0_i32_0 = arith.constant 0 : i32
    %c0_i32_1 = arith.constant 0 : i32
    return %c0_i32, %c0_i32_0 : i32, i32
  }
  func.func @transform_3(%arg0: i32) -> (i32, i32) {
    %c0_i32 = arith.constant 0 : i32
    %c0_i32_0 = arith.constant 0 : i32
    %c0_i32_1 = arith.constant 0 : i32
    return %c0_i32, %c0_i32_0 : i32, i32
  }
  func.func @transform_4(%arg0: i32) -> (i32, i32) {
    %c0_i32 = arith.constant 0 : i32
    %c0_i32_0 = arith.constant 0 : i32
    %c0_i32_1 = arith.constant 0 : i32
    return %c0_i32, %c0_i32_0 : i32, i32
  }
}

module attributes {stable_mosaic.version = 11 : i64} {
  func.func @_conv_bn_act_kernel(%arg0: i32, %arg1: memref<32x256xbf16, #tpu.memory_space<vmem>>, %arg2: memref<256x512xbf16, #tpu.memory_space<vmem>>, %arg3: memref<32x1xf32, #tpu.memory_space<vmem>>, %arg4: memref<32x1xf32, #tpu.memory_space<vmem>>, %arg5: memref<32x512xf32, #tpu.memory_space<vmem>>) attributes {dimension_semantics = [#tpu.dimension_semantics<arbitrary>], iteration_bounds = array<i64: 1>, scalar_prefetch = 0 : i64, scratch_operands = 0 : i64, tpu.core_type = #tpu.core_type<tc>, window_params = [{pipeline_mode = #tpu.pipeline_mode<synchronous>, transform_indices = @transform_0, window_bounds = array<i64: 32, 256>}, {pipeline_mode = #tpu.pipeline_mode<synchronous>, transform_indices = @transform_1, window_bounds = array<i64: 256, 512>}, {pipeline_mode = #tpu.pipeline_mode<synchronous>, transform_indices = @transform_2, window_bounds = array<i64: 32, 1>}, {pipeline_mode = #tpu.pipeline_mode<synchronous>, transform_indices = @transform_3, window_bounds = array<i64: 32, 1>}, {pipeline_mode = #tpu.pipeline_mode<synchronous>, transform_indices = @transform_4, window_bounds = array<i64: 32, 512>}]} {
    %c0 = arith.constant 0 : index
    %c0_0 = arith.constant 0 : index
    %0 = vector.load %arg1[%c0, %c0_0] : memref<32x256xbf16, #tpu.memory_space<vmem>>, vector<32x256xbf16>
    %c0_1 = arith.constant 0 : index
    %c0_2 = arith.constant 0 : index
    %1 = vector.load %arg2[%c0_1, %c0_2] : memref<256x512xbf16, #tpu.memory_space<vmem>>, vector<256x512xbf16>
    %cst = arith.constant dense<0.000000e+00> : vector<32x512xf32>
    %2 = tpu.matmul %0, %1, %cst {dimension_numbers = #tpu.dot_dimension_numbers<[1], [0], [0], [1], [0, 0, 1, 1], [], []>} : vector<32x256xbf16>, vector<256x512xbf16>, vector<32x512xf32> -> vector<32x512xf32>
    %cst_3 = arith.constant dense<0.000000e+00> : vector<32xf32>
    %3 = vector.multi_reduction <add>, %2, %cst_3 [1] : vector<32x512xf32> to vector<32xf32>
    %4 = vector.shape_cast %3 : vector<32xf32> to vector<32x1xf32>
    %cst_4 = arith.constant 0.001953125 : f32
    %5 = vector.broadcast %cst_4 : f32 to vector<32x1xf32>
    %6 = arith.mulf %4, %5 : vector<32x1xf32>
    %7 = arith.mulf %2, %2 : vector<32x512xf32>
    %cst_5 = arith.constant dense<0.000000e+00> : vector<32xf32>
    %8 = vector.multi_reduction <add>, %7, %cst_5 [1] : vector<32x512xf32> to vector<32xf32>
    %9 = vector.shape_cast %8 : vector<32xf32> to vector<32x1xf32>
    %cst_6 = arith.constant 0.001953125 : f32
    %10 = vector.broadcast %cst_6 : f32 to vector<32x1xf32>
    %11 = arith.mulf %9, %10 : vector<32x1xf32>
    %12 = arith.mulf %6, %6 : vector<32x1xf32>
    %13 = arith.subf %11, %12 : vector<32x1xf32>
    %c0_7 = arith.constant 0 : index
    %c0_8 = arith.constant 0 : index
    %14 = vector.load %arg3[%c0_7, %c0_8] : memref<32x1xf32, #tpu.memory_space<vmem>>, vector<32x1xf32>
    %cst_9 = arith.constant 9.99999974E-6 : f32
    %15 = vector.broadcast %cst_9 : f32 to vector<32x1xf32>
    %16 = arith.addf %13, %15 : vector<32x1xf32>
    %17 = math.rsqrt %16 : vector<32x1xf32>
    %18 = arith.mulf %14, %17 : vector<32x1xf32>
    %19 = vector.broadcast %6 : vector<32x1xf32> to vector<32x512xf32>
    %20 = arith.subf %2, %19 : vector<32x512xf32>
    %21 = vector.broadcast %18 : vector<32x1xf32> to vector<32x512xf32>
    %22 = arith.mulf %20, %21 : vector<32x512xf32>
    %c0_10 = arith.constant 0 : index
    %c0_11 = arith.constant 0 : index
    %23 = vector.load %arg4[%c0_10, %c0_11] : memref<32x1xf32, #tpu.memory_space<vmem>>, vector<32x1xf32>
    %24 = vector.broadcast %23 : vector<32x1xf32> to vector<32x512xf32>
    %25 = arith.addf %22, %24 : vector<32x512xf32>
    %cst_12 = arith.constant 0.000000e+00 : f32
    %26 = vector.broadcast %cst_12 : f32 to vector<32x512xf32>
    %27 = arith.cmpf ogt, %25, %26 : vector<32x512xf32>
    %cst_13 = arith.constant 2.000000e-01 : f32
    %28 = vector.broadcast %cst_13 : f32 to vector<32x512xf32>
    %29 = arith.mulf %28, %25 : vector<32x512xf32>
    %30 = arith.select %27, %25, %29 : vector<32x512xi1>, vector<32x512xf32>
    %c0_14 = arith.constant 0 : index
    %c0_15 = arith.constant 0 : index
    %31 = vector.load %arg5[%c0_14, %c0_15] : memref<32x512xf32, #tpu.memory_space<vmem>>, vector<32x512xf32>
    tpu.vector_store %arg5[%c0_14, %c0_15], %30 {strides = array<i32>} : memref<32x512xf32, #tpu.memory_space<vmem>>, vector<32x512xf32>,
    return
  }
  func.func @transform_0(%arg0: i32) -> (i32, i32) {
    %c0_i32 = arith.constant 0 : i32
    %c0_i32_0 = arith.constant 0 : i32
    %c0_i32_1 = arith.constant 0 : i32
    return %c0_i32, %c0_i32_0 : i32, i32
  }
  func.func @transform_1(%arg0: i32) -> (i32, i32) {
    %c0_i32 = arith.constant 0 : i32
    %c0_i32_0 = arith.constant 0 : i32
    %c0_i32_1 = arith.constant 0 : i32
    return %c0_i32, %c0_i32_0 : i32, i32
  }
  func.func @transform_2(%arg0: i32) -> (i32, i32) {
    %c0_i32 = arith.constant 0 : i32
    %c0_i32_0 = arith.constant 0 : i32
    %c0_i32_1 = arith.constant 0 : i32
    return %c0_i32, %c0_i32_0 : i32, i32
  }
  func.func @transform_3(%arg0: i32) -> (i32, i32) {
    %c0_i32 = arith.constant 0 : i32
    %c0_i32_0 = arith.constant 0 : i32
    %c0_i32_1 = arith.constant 0 : i32
    return %c0_i32, %c0_i32_0 : i32, i32
  }
  func.func @transform_4(%arg0: i32) -> (i32, i32) {
    %c0_i32 = arith.constant 0 : i32
    %c0_i32_0 = arith.constant 0 : i32
    %c0_i32_1 = arith.constant 0 : i32
    return %c0_i32, %c0_i32_0 : i32, i32
  }
}

module attributes {stable_mosaic.version = 11 : i64} {
  func.func @_conv_bn_act_kernel(%arg0: i32, %arg1: memref<64x512xbf16, #tpu.memory_space<vmem>>, %arg2: memref<512x128xbf16, #tpu.memory_space<vmem>>, %arg3: memref<64x1xf32, #tpu.memory_space<vmem>>, %arg4: memref<64x1xf32, #tpu.memory_space<vmem>>, %arg5: memref<64x128xf32, #tpu.memory_space<vmem>>) attributes {dimension_semantics = [#tpu.dimension_semantics<arbitrary>], iteration_bounds = array<i64: 1>, scalar_prefetch = 0 : i64, scratch_operands = 0 : i64, tpu.core_type = #tpu.core_type<tc>, window_params = [{pipeline_mode = #tpu.pipeline_mode<synchronous>, transform_indices = @transform_0, window_bounds = array<i64: 64, 512>}, {pipeline_mode = #tpu.pipeline_mode<synchronous>, transform_indices = @transform_1, window_bounds = array<i64: 512, 128>}, {pipeline_mode = #tpu.pipeline_mode<synchronous>, transform_indices = @transform_2, window_bounds = array<i64: 64, 1>}, {pipeline_mode = #tpu.pipeline_mode<synchronous>, transform_indices = @transform_3, window_bounds = array<i64: 64, 1>}, {pipeline_mode = #tpu.pipeline_mode<synchronous>, transform_indices = @transform_4, window_bounds = array<i64: 64, 128>}]} {
    %c0 = arith.constant 0 : index
    %c0_0 = arith.constant 0 : index
    %0 = vector.load %arg1[%c0, %c0_0] : memref<64x512xbf16, #tpu.memory_space<vmem>>, vector<64x512xbf16>
    %c0_1 = arith.constant 0 : index
    %c0_2 = arith.constant 0 : index
    %1 = vector.load %arg2[%c0_1, %c0_2] : memref<512x128xbf16, #tpu.memory_space<vmem>>, vector<512x128xbf16>
    %cst = arith.constant dense<0.000000e+00> : vector<64x128xf32>
    %2 = tpu.matmul %0, %1, %cst {dimension_numbers = #tpu.dot_dimension_numbers<[1], [0], [0], [1], [0, 0, 1, 1], [], []>} : vector<64x512xbf16>, vector<512x128xbf16>, vector<64x128xf32> -> vector<64x128xf32>
    %cst_3 = arith.constant dense<0.000000e+00> : vector<64xf32>
    %3 = vector.multi_reduction <add>, %2, %cst_3 [1] : vector<64x128xf32> to vector<64xf32>
    %4 = vector.shape_cast %3 : vector<64xf32> to vector<64x1xf32>
    %cst_4 = arith.constant 7.812500e-03 : f32
    %5 = vector.broadcast %cst_4 : f32 to vector<64x1xf32>
    %6 = arith.mulf %4, %5 : vector<64x1xf32>
    %7 = arith.mulf %2, %2 : vector<64x128xf32>
    %cst_5 = arith.constant dense<0.000000e+00> : vector<64xf32>
    %8 = vector.multi_reduction <add>, %7, %cst_5 [1] : vector<64x128xf32> to vector<64xf32>
    %9 = vector.shape_cast %8 : vector<64xf32> to vector<64x1xf32>
    %cst_6 = arith.constant 7.812500e-03 : f32
    %10 = vector.broadcast %cst_6 : f32 to vector<64x1xf32>
    %11 = arith.mulf %9, %10 : vector<64x1xf32>
    %12 = arith.mulf %6, %6 : vector<64x1xf32>
    %13 = arith.subf %11, %12 : vector<64x1xf32>
    %c0_7 = arith.constant 0 : index
    %c0_8 = arith.constant 0 : index
    %14 = vector.load %arg3[%c0_7, %c0_8] : memref<64x1xf32, #tpu.memory_space<vmem>>, vector<64x1xf32>
    %cst_9 = arith.constant 9.99999974E-6 : f32
    %15 = vector.broadcast %cst_9 : f32 to vector<64x1xf32>
    %16 = arith.addf %13, %15 : vector<64x1xf32>
    %17 = math.rsqrt %16 : vector<64x1xf32>
    %18 = arith.mulf %14, %17 : vector<64x1xf32>
    %19 = vector.broadcast %6 : vector<64x1xf32> to vector<64x128xf32>
    %20 = arith.subf %2, %19 : vector<64x128xf32>
    %21 = vector.broadcast %18 : vector<64x1xf32> to vector<64x128xf32>
    %22 = arith.mulf %20, %21 : vector<64x128xf32>
    %c0_10 = arith.constant 0 : index
    %c0_11 = arith.constant 0 : index
    %23 = vector.load %arg4[%c0_10, %c0_11] : memref<64x1xf32, #tpu.memory_space<vmem>>, vector<64x1xf32>
    %24 = vector.broadcast %23 : vector<64x1xf32> to vector<64x128xf32>
    %25 = arith.addf %22, %24 : vector<64x128xf32>
    %cst_12 = arith.constant 0.000000e+00 : f32
    %26 = vector.broadcast %cst_12 : f32 to vector<64x128xf32>
    %27 = arith.cmpf ogt, %25, %26 : vector<64x128xf32>
    %cst_13 = arith.constant 2.000000e-01 : f32
    %28 = vector.broadcast %cst_13 : f32 to vector<64x128xf32>
    %29 = arith.mulf %28, %25 : vector<64x128xf32>
    %30 = arith.select %27, %25, %29 : vector<64x128xi1>, vector<64x128xf32>
    %c0_14 = arith.constant 0 : index
    %c0_15 = arith.constant 0 : index
    %31 = vector.load %arg5[%c0_14, %c0_15] : memref<64x128xf32, #tpu.memory_space<vmem>>, vector<64x128xf32>
    tpu.vector_store %arg5[%c0_14, %c0_15], %30 {strides = array<i32>} : memref<64x128xf32, #tpu.memory_space<vmem>>, vector<64x128xf32>,
    return
  }
  func.func @transform_0(%arg0: i32) -> (i32, i32) {
    %c0_i32 = arith.constant 0 : i32
    %c0_i32_0 = arith.constant 0 : i32
    %c0_i32_1 = arith.constant 0 : i32
    return %c0_i32, %c0_i32_0 : i32, i32
  }
  func.func @transform_1(%arg0: i32) -> (i32, i32) {
    %c0_i32 = arith.constant 0 : i32
    %c0_i32_0 = arith.constant 0 : i32
    %c0_i32_1 = arith.constant 0 : i32
    return %c0_i32, %c0_i32_0 : i32, i32
  }
  func.func @transform_2(%arg0: i32) -> (i32, i32) {
    %c0_i32 = arith.constant 0 : i32
    %c0_i32_0 = arith.constant 0 : i32
    %c0_i32_1 = arith.constant 0 : i32
    return %c0_i32, %c0_i32_0 : i32, i32
  }
  func.func @transform_3(%arg0: i32) -> (i32, i32) {
    %c0_i32 = arith.constant 0 : i32
    %c0_i32_0 = arith.constant 0 : i32
    %c0_i32_1 = arith.constant 0 : i32
    return %c0_i32, %c0_i32_0 : i32, i32
  }
  func.func @transform_4(%arg0: i32) -> (i32, i32) {
    %c0_i32 = arith.constant 0 : i32
    %c0_i32_0 = arith.constant 0 : i32
    %c0_i32_1 = arith.constant 0 : i32
    return %c0_i32, %c0_i32_0 : i32, i32
  }
}

module attributes {stable_mosaic.version = 11 : i64} {
  func.func @_tail_kernel(%arg0: i32, %arg1: memref<128x1024xbf16, #tpu.memory_space<vmem>>, %arg2: memref<1024x32xbf16, #tpu.memory_space<vmem>>, %arg3: memref<128x1xf32, #tpu.memory_space<vmem>>, %arg4: memref<128x1xf32, #tpu.memory_space<vmem>>, %arg5: memref<128x32xf32, #tpu.memory_space<vmem>>, %arg6: memref<32x2xf32, #tpu.memory_space<vmem>>, %arg7: memref<1x2xf32, #tpu.memory_space<vmem>>) attributes {dimension_semantics = [#tpu.dimension_semantics<arbitrary>], iteration_bounds = array<i64: 1>, scalar_prefetch = 0 : i64, scratch_operands = 0 : i64, tpu.core_type = #tpu.core_type<tc>, window_params = [{pipeline_mode = #tpu.pipeline_mode<synchronous>, transform_indices = @transform_0, window_bounds = array<i64: 128, 1024>}, {pipeline_mode = #tpu.pipeline_mode<synchronous>, transform_indices = @transform_1, window_bounds = array<i64: 1024, 32>}, {pipeline_mode = #tpu.pipeline_mode<synchronous>, transform_indices = @transform_2, window_bounds = array<i64: 128, 1>}, {pipeline_mode = #tpu.pipeline_mode<synchronous>, transform_indices = @transform_3, window_bounds = array<i64: 128, 1>}, {pipeline_mode = #tpu.pipeline_mode<synchronous>, transform_indices = @transform_4, window_bounds = array<i64: 128, 32>}, {pipeline_mode = #tpu.pipeline_mode<synchronous>, transform_indices = @transform_5, window_bounds = array<i64: 32, 2>}, {pipeline_mode = #tpu.pipeline_mode<synchronous>, transform_indices = @transform_6, window_bounds = array<i64: 1, 2>}]} {
    %c0 = arith.constant 0 : index
    %c0_0 = arith.constant 0 : index
    %0 = vector.load %arg1[%c0, %c0_0] : memref<128x1024xbf16, #tpu.memory_space<vmem>>, vector<128x1024xbf16>
    %c0_1 = arith.constant 0 : index
    %c0_2 = arith.constant 0 : index
    %1 = vector.load %arg2[%c0_1, %c0_2] : memref<1024x32xbf16, #tpu.memory_space<vmem>>, vector<1024x32xbf16>
    %cst = arith.constant dense<0.000000e+00> : vector<128x32xf32>
    %2 = tpu.matmul %0, %1, %cst {dimension_numbers = #tpu.dot_dimension_numbers<[1], [0], [0], [1], [0, 0, 1, 1], [], []>} : vector<128x1024xbf16>, vector<1024x32xbf16>, vector<128x32xf32> -> vector<128x32xf32>
    %cst_3 = arith.constant dense<0.000000e+00> : vector<128xf32>
    %3 = vector.multi_reduction <add>, %2, %cst_3 [1] : vector<128x32xf32> to vector<128xf32>
    %4 = vector.shape_cast %3 : vector<128xf32> to vector<128x1xf32>
    %cst_4 = arith.constant 3.125000e-02 : f32
    %5 = vector.broadcast %cst_4 : f32 to vector<128x1xf32>
    %6 = arith.mulf %4, %5 : vector<128x1xf32>
    %7 = arith.mulf %2, %2 : vector<128x32xf32>
    %cst_5 = arith.constant dense<0.000000e+00> : vector<128xf32>
    %8 = vector.multi_reduction <add>, %7, %cst_5 [1] : vector<128x32xf32> to vector<128xf32>
    %9 = vector.shape_cast %8 : vector<128xf32> to vector<128x1xf32>
    %cst_6 = arith.constant 3.125000e-02 : f32
    %10 = vector.broadcast %cst_6 : f32 to vector<128x1xf32>
    %11 = arith.mulf %9, %10 : vector<128x1xf32>
    %12 = arith.mulf %6, %6 : vector<128x1xf32>
    %13 = arith.subf %11, %12 : vector<128x1xf32>
    %c0_7 = arith.constant 0 : index
    %c0_8 = arith.constant 0 : index
    %14 = vector.load %arg3[%c0_7, %c0_8] : memref<128x1xf32, #tpu.memory_space<vmem>>, vector<128x1xf32>
    %cst_9 = arith.constant 9.99999974E-6 : f32
    %15 = vector.broadcast %cst_9 : f32 to vector<128x1xf32>
    %16 = arith.addf %13, %15 : vector<128x1xf32>
    %17 = math.rsqrt %16 : vector<128x1xf32>
    %18 = arith.mulf %14, %17 : vector<128x1xf32>
    %19 = vector.broadcast %6 : vector<128x1xf32> to vector<128x32xf32>
    %20 = arith.subf %2, %19 : vector<128x32xf32>
    %21 = vector.broadcast %18 : vector<128x1xf32> to vector<128x32xf32>
    %22 = arith.mulf %20, %21 : vector<128x32xf32>
    %c0_10 = arith.constant 0 : index
    %c0_11 = arith.constant 0 : index
    %23 = vector.load %arg4[%c0_10, %c0_11] : memref<128x1xf32, #tpu.memory_space<vmem>>, vector<128x1xf32>
    %24 = vector.broadcast %23 : vector<128x1xf32> to vector<128x32xf32>
    %25 = arith.addf %22, %24 : vector<128x32xf32>
    %cst_12 = arith.constant 0.000000e+00 : f32
    %26 = vector.broadcast %cst_12 : f32 to vector<128x32xf32>
    %27 = arith.cmpf ogt, %25, %26 : vector<128x32xf32>
    %cst_13 = arith.constant 2.000000e-01 : f32
    %28 = vector.broadcast %cst_13 : f32 to vector<128x32xf32>
    %29 = arith.mulf %28, %25 : vector<128x32xf32>
    %30 = arith.select %27, %25, %29 : vector<128x32xi1>, vector<128x32xf32>
    %c0_14 = arith.constant 0 : index
    %c0_15 = arith.constant 0 : index
    %31 = vector.load %arg5[%c0_14, %c0_15] : memref<128x32xf32, #tpu.memory_space<vmem>>, vector<128x32xf32>
    %32 = arith.mulf %30, %31 : vector<128x32xf32>
    %c0_16 = arith.constant 0 : index
    %c0_17 = arith.constant 0 : index
    %33 = vector.load %arg6[%c0_16, %c0_17] : memref<32x2xf32, #tpu.memory_space<vmem>>, vector<32x2xf32>
    %cst_18 = arith.constant dense<0.000000e+00> : vector<128x2xf32>
    %34 = tpu.matmul %32, %33, %cst_18 {dimension_numbers = #tpu.dot_dimension_numbers<[1], [0], [0], [1], [0, 0, 1, 1], [], []>} : vector<128x32xf32>, vector<32x2xf32>, vector<128x2xf32> -> vector<128x2xf32>
    %cst_19 = arith.constant dense<0.000000e+00> : vector<2xf32>
    %35 = vector.multi_reduction <add>, %34, %cst_19 [0] : vector<128x2xf32> to vector<2xf32>
    %36 = vector.shape_cast %35 : vector<2xf32> to vector<1x2xf32>
    %37 = arith.negf %36 : vector<1x2xf32>
    %38 = math.exp %37 : vector<1x2xf32>
    %cst_20 = arith.constant 1.000000e+00 : f32
    %39 = vector.broadcast %cst_20 : f32 to vector<1x2xf32>
    %40 = arith.addf %39, %38 : vector<1x2xf32>
    %41 = arith.divf %39, %40 : vector<1x2xf32>
    %c0_21 = arith.constant 0 : index
    %c0_22 = arith.constant 0 : index
    %42 = vector.load %arg7[%c0_21, %c0_22] : memref<1x2xf32, #tpu.memory_space<vmem>>, vector<1x2xf32>
    tpu.vector_store %arg7[%c0_21, %c0_22], %41 {strides = array<i32>} : memref<1x2xf32, #tpu.memory_space<vmem>>, vector<1x2xf32>,
    return
  }
  func.func @transform_0(%arg0: i32) -> (i32, i32) {
    %c0_i32 = arith.constant 0 : i32
    %c0_i32_0 = arith.constant 0 : i32
    %c0_i32_1 = arith.constant 0 : i32
    return %c0_i32, %c0_i32_0 : i32, i32
  }
  func.func @transform_1(%arg0: i32) -> (i32, i32) {
    %c0_i32 = arith.constant 0 : i32
    %c0_i32_0 = arith.constant 0 : i32
    %c0_i32_1 = arith.constant 0 : i32
    return %c0_i32, %c0_i32_0 : i32, i32
  }
  func.func @transform_2(%arg0: i32) -> (i32, i32) {
    %c0_i32 = arith.constant 0 : i32
    %c0_i32_0 = arith.constant 0 : i32
    %c0_i32_1 = arith.constant 0 : i32
    return %c0_i32, %c0_i32_0 : i32, i32
  }
  func.func @transform_3(%arg0: i32) -> (i32, i32) {
    %c0_i32 = arith.constant 0 : i32
    %c0_i32_0 = arith.constant 0 : i32
    %c0_i32_1 = arith.constant 0 : i32
    return %c0_i32, %c0_i32_0 : i32, i32
  }
  func.func @transform_4(%arg0: i32) -> (i32, i32) {
    %c0_i32 = arith.constant 0 : i32
    %c0_i32_0 = arith.constant 0 : i32
    %c0_i32_1 = arith.constant 0 : i32
    return %c0_i32, %c0_i32_0 : i32, i32
  }
  func.func @transform_5(%arg0: i32) -> (i32, i32) {
    %c0_i32 = arith.constant 0 : i32
    %c0_i32_0 = arith.constant 0 : i32
    %c0_i32_1 = arith.constant 0 : i32
    return %c0_i32, %c0_i32_0 : i32, i32
  }
  func.func @transform_6(%arg0: i32) -> (i32, i32) {
    %c0_i32 = arith.constant 0 : i32
    %c0_i32_0 = arith.constant 0 : i32
    %c0_i32_1 = arith.constant 0 : i32
    return %c0_i32, %c0_i32_0 : i32, i32
  }
}

</mosaic_0001>

<llo_original>
// kernel: discriminator_stage2.5
$region0: #{discriminator_stage2.5}
  #allocation0 [shape = 'u32[]', space=smem, size = 0x4, offset = 0x4, fixed_abs, tag = 'smem constant byte address 0x4 - core index']
  #allocation1 [shape = 'u32[144,128]{1,0:T(1,128)}', space=vmem, size = 0x12000, scoped, tag = 'internal scratch']
  %s0 = inlined_call_operand.vmem [shape: bf16[8,48], index: 0, kind: input, shape index: {}]
  %s1 = inlined_call_operand.vmem [shape: bf16[48,8192], index: 1, kind: input, shape index: {}]
  %s2 = inlined_call_operand.vmem [shape: f32[8,8192], index: 2, kind: output, shape index: {}]
  %s3 = sld [smem:[#allocation0]]
  $region64: #{discriminator_stage2.5} parent=0
    _
  %s5 = ssub.s32 1, %s3
  %s6 = scalar_select 0, %s5, %s3
  $region1: #{discriminator_stage2.5} parent=0
    #allocation2 [shape = 'u8[393216]{0}', space=vmem, size = 0x60000, scoped, tag = 'input window, operand 1']
    loop: start=0, step=1, limit=6
    $region2: #{discriminator_stage2.5} parent=1 // loop_pre_header
      _
    $region3: #{discriminator_stage2.5} parent=1 // loop_header
      %s8 = sphi 0, %s12
      %p9 = scmp.ge.s32.totalorder %s8, 6
      %s16 = sphi 0, %s16
      %s18 = sphi 0, %s16
      %s19 = sphi 0, %s18
      %s33 = sphi 0, %s19
      %s39 = sphi 0, %s41
      %s42 = sphi 0, %s39
      %s43 = sphi 0, %s42
      %s59 = sphi 0, %s43
      %s65 = sphi 0, %s67
      %s68 = sphi 0, %s65
      %s69 = sphi 0, %s68
      %s85 = sphi 0, %s69
    $region4: #{discriminator_stage2.5} parent=1 // loop_header_branch
      %11 = sbr.rel (%p9) target = $region8
    $region5: #{discriminator_stage2.5} parent=1 // loop_body
      %s13 = ssub.s32 %s8, 1
      %s14 = ssub.s32 %s8, 2
      %s15 = sadd.s32 %s8, 1
      %s17 = sadd.s32 %s16, 1
      %p20 = scmp.eq.s32.totalorder %s8, 3
      %p21 = scmp.ne.s32.totalorder %s16, %s18
      %p22 = scmp.eq.s32.totalorder %s8, 0
      %p23 = por %p21, %p22
      %p24 = scmp.ne.s32.totalorder %s16, %s18
      %p25 = scmp.eq.s32.totalorder %s13, 3
      %p26 = por %p24, %p25
      %p27 = scmp.ne.s32.totalorder %s18, %s19
      %p28 = scmp.eq.s32.totalorder %s13, 0
      %p29 = por %p27, %p28
      %p30 = scmp.ne.s32.totalorder %s18, %s19
      %p31 = scmp.eq.s32.totalorder %s14, 3
      %p32 = por %p30, %p31
      %p34 = scmp.ne.s32.totalorder %s19, %s33
      %p35 = scmp.eq.s32.totalorder %s14, 0
      %p36 = por %p34, %p35
      %s37 = ssub.s32 %s8, %s15
      %p38 = scmp.eq.s32.totalorder %s37, 0
      %s40 = sadd.s32 %s39, 1
      %s41 = scalar_select %p38, %s39, %s40
      %p44 = pneg %p38
      %p45 = scmp.eq.s32.totalorder %s8, 3
      %p46 = por %p44, %p45
      %p47 = scmp.ne.s32.totalorder %s39, %s42
      %p48 = scmp.eq.s32.totalorder %s8, 0
      %p49 = por %p47, %p48
      %p50 = scmp.ne.s32.totalorder %s39, %s42
      %p51 = scmp.eq.s32.totalorder %s13, 3
      %p52 = por %p50, %p51
      %p53 = scmp.ne.s32.totalorder %s42, %s43
      %p54 = scmp.eq.s32.totalorder %s13, 0
      %p55 = por %p53, %p54
      %p56 = scmp.ne.s32.totalorder %s42, %s43
      %p57 = scmp.eq.s32.totalorder %s14, 3
      %p58 = por %p56, %p57
      %p60 = scmp.ne.s32.totalorder %s43, %s59
      %p61 = scmp.eq.s32.totalorder %s14, 0
      %p62 = por %p60, %p61
      %s63 = ssub.s32 %s8, %s15
      %p64 = scmp.eq.s32.totalorder %s63, 0
      %s66 = sadd.s32 %s65, 1
      %s67 = scalar_select %p64, %s65, %s66
      %p70 = pneg %p64
      %p71 = scmp.eq.s32.totalorder %s8, 3
      %p72 = por %p70, %p71
      %p73 = scmp.ne.s32.totalorder %s65, %s68
      %p74 = scmp.eq.s32.totalorder %s8, 0
      %p75 = por %p73, %p74
      %p76 = scmp.ne.s32.totalorder %s65, %s68
      %p77 = scmp.eq.s32.totalorder %s13, 3
      %p78 = por %p76, %p77
      %p79 = scmp.ne.s32.totalorder %s68, %s69
      %p80 = scmp.eq.s32.totalorder %s13, 0
      %p81 = por %p79, %p80
      %p82 = scmp.ne.s32.totalorder %s68, %s69
      %p83 = scmp.eq.s32.totalorder %s14, 3
      %p84 = por %p82, %p83
      %p86 = scmp.ne.s32.totalorder %s69, %s85
      %p87 = scmp.eq.s32.totalorder %s14, 0
      %p88 = por %p86, %p87
      %p89 = scmp.le.s32.totalorder 1, %s8
      %p90 = scmp.lt.s32.totalorder %s8, 5
      %p91 = pnand %p89, %p90
      %p92 = pneg %p91
      // Predicated region
      $region9: #{discriminator_stage2.5} parent=5 // pred_check
        _
      $region10: #{discriminator_stage2.5} parent=5 // pred_check_branch
        %94 = sbr.rel (%p91) target = $region12
      $region11: #{discriminator_stage2.5} parent=5 // pred_region
        %s95 = ssub.s32 %s8, 1
        // Predicated region
        $region13: #{discriminator_stage2.5} parent=11 // pred_check
          %p96 = pneg %p29
        $region14: #{discriminator_stage2.5} parent=11 // pred_check_branch
          %98 = sbr.rel (%p96) target = $region16
        $region15: #{discriminator_stage2.5} parent=11 // pred_region
          _
        $region16: #{discriminator_stage2.5} parent=11 // pred_fallthru
          _
      $region12: #{discriminator_stage2.5} parent=5 // pred_fallthru
        _
      %p99 = scmp.lt.s32.totalorder %s8, 4
      // Predicated region
      $region17: #{discriminator_stage2.5} parent=5 // pred_check
        %p100 = pneg %p99
      $region18: #{discriminator_stage2.5} parent=5 // pred_check_branch
        %102 = sbr.rel (%p100) target = $region20
      $region19: #{discriminator_stage2.5} parent=5 // pred_region
        // Predicated region
        $region21: #{discriminator_stage2.5} parent=19 // pred_check
          %p103 = pneg %p49
        $region22: #{discriminator_stage2.5} parent=19 // pred_check_branch
          %105 = sbr.rel (%p103) target = $region24
        $region23: #{discriminator_stage2.5} parent=19 // pred_region
          %s106 = sand.u32 %s39, 1
          %s107 = sand.u32 %s39, 1
          %s108 = smul.addr %s107, 384
          %s109 = scalar_lea.vmem [#allocation2], %s108
          %s110 = smul.u32 16, %s8
          %s111 = smul.addr %s110, 4
          %s112 = scalar_lea.vmem %s1, %s111
          // Predicated region
          $region25: #{discriminator_stage2.5} parent=23 // pred_check
            _
          $region26: #{discriminator_stage2.5} parent=23 // pred_check_branch
            %114 = sbr.rel (0) target = $region28
          $region27: #{discriminator_stage2.5} parent=23 // pred_region
            // Predicated region
            $region29: #{discriminator_stage2.5} parent=27 // pred_check
              _
            $region30: #{discriminator_stage2.5} parent=27 // pred_check_branch
              %116 = sbr.rel (0) target = $region32
            $region31: #{discriminator_stage2.5} parent=27 // pred_region
              loop: start=0, step=1, limit=1
              $region33: #{discriminator_stage2.5} parent=31 // loop_pre_header
                _
              $region34: #{discriminator_stage2.5} parent=31 // loop_header
                %s118 = sphi 0, %s122
                %p119 = scmp.ge.s32.totalorder %s118, 1
                %s123 = sphi %s112, %s112
                %s124 = sphi %s109, %s109
              $region35: #{discriminator_stage2.5} parent=31 // loop_header_branch
                %121 = sbr.rel (%p119) target = $region39
              $region36: #{discriminator_stage2.5} parent=31 // loop_body
                %v125 = vld [vmem:[%s123] sm:$0xff]
                %126 = vst [vmem:[%s124] sm:$0xff] %v125
                %v127 = vld [vmem:[%s123 + $0x8] sm:$0xff]
                %128 = vst [vmem:[%s124 + $0x8] sm:$0xff] %v127
                %v129 = vld [vmem:[%s123 + $0x10] sm:$0xff]
                %130 = vst [vmem:[%s124 + $0x10] sm:$0xff] %v129
                %v131 = vld [vmem:[%s123 + $0x18] sm:$0xff]
                %132 = vst [vmem:[%s124 + $0x18] sm:$0xff] %v131
                %v133 = vld [vmem:[%s123 + $0x20] sm:$0xff]
                %134 = vst [vmem:[%s124 + $0x20] sm:$0xff] %v133
                %v135 = vld [vmem:[%s123 + $0x28] sm:$0xff]
                %136 = vst [vmem:[%s124 + $0x28] sm:$0xff] %v135
                %v137 = vld [vmem:[%s123 + $0x30] sm:$0xff]
                %138 = vst [vmem:[%s124 + $0x30] sm:$0xff] %v137
                %v139 = vld [vmem:[%s123 + $0x38] sm:$0xff]
                %140 = vst [vmem:[%s124 + $0x38] sm:$0xff] %v139
                %v141 = vld [vmem:[%s123 + $0x100] sm:$0xff]
                %142 = vst [vmem:[%s124 + $0x40] sm:$0xff] %v141
                %v143 = vld [vmem:[%s123 + $0x108] sm:$0xff]
                %144 = vst [vmem:[%s124 + $0x48] sm:$0xff] %v143
                %v145 = vld [vmem:[%s123 + $0x110] sm:$0xff]
                %146 = vst [vmem:[%s124 + $0x50] sm:$0xff] %v145
                %v147 = vld [vmem:[%s123 + $0x118] sm:$0xff]
                %148 = vst [vmem:[%s124 + $0x58] sm:$0xff] %v147
                %v149 = vld [vmem:[%s123 + $0x120] sm:$0xff]
                %150 = vst [vmem:[%s124 + $0x60] sm:$0xff] %v149
                %v151 = vld [vmem:[%s123 + $0x128] sm:$0xff]
                %152 = vst [vmem:[%s124 + $0x68] sm:$0xff] %v151
                %v153 = vld [vmem:[%s123 + $0x130] sm:$0xff]
                %154 = vst [vmem:[%s124 + $0x70] sm:$0xff] %v153
                %v155 = vld [vmem:[%s123 + $0x138] sm:$0xff]
                %156 = vst [vmem:[%s124 + $0x78] sm:$0xff] %v155
                %v157 = vld [vmem:[%s123 + $0x200] sm:$0xff]
                %158 = vst [vmem:[%s124 + $0x80] sm:$0xff] %v157
                %v159 = vld [vmem:[%s123 + $0x208] sm:$0xff]
                %160 = vst [vmem:[%s124 + $0x88] sm:$0xff] %v159
                %v161 = vld [vmem:[%s123 + $0x210] sm:$0xff]
                %162 = vst [vmem:[%s124 + $0x90] sm:$0xff] %v161
                %v163 = vld [vmem:[%s123 + $0x218] sm:$0xff]
                %164 = vst [vmem:[%s124 + $0x98] sm:$0xff] %v163
                %v165 = vld [vmem:[%s123 + $0x220] sm:$0xff]
                %166 = vst [vmem:[%s124 + $0xa0] sm:$0xff] %v165
                %v167 = vld [vmem:[%s123 + $0x228] sm:$0xff]
                %168 = vst [vmem:[%s124 + $0xa8] sm:$0xff] %v167
                %v169 = vld [vmem:[%s123 + $0x230] sm:$0xff]
                %170 = vst [vmem:[%s124 + $0xb0] sm:$0xff] %v169
                %v171 = vld [vmem:[%s123 + $0x238] sm:$0xff]
                %172 = vst [vmem:[%s124 + $0xb8] sm:$0xff] %v171
                %v173 = vld [vmem:[%s123 + $0x300] sm:$0xff]
                %174 = vst [vmem:[%s124 + $0xc0] sm:$0xff] %v173
                %v175 = vld [vmem:[%s123 + $0x308] sm:$0xff]
                %176 = vst [vmem:[%s124 + $0xc8] sm:$0xff] %v175
                %v177 = vld [vmem:[%s123 + $0x310] sm:$0xff]
                %178 = vst [vmem:[%s124 + $0xd0] sm:$0xff] %v177
                %v179 = vld [vmem:[%s123 + $0x318] sm:$0xff]
                %180 = vst [vmem:[%s124 + $0xd8] sm:$0xff] %v179
                %v181 = vld [vmem:[%s123 + $0x320] sm:$0xff]
                %182 = vst [vmem:[%s124 + $0xe0] sm:$0xff] %v181
                %v183 = vld [vmem:[%s123 + $0x328] sm:$0xff]
                %184 = vst [vmem:[%s124 + $0xe8] sm:$0xff] %v183
                %v185 = vld [vmem:[%s123 + $0x330] sm:$0xff]
                %186 = vst [vmem:[%s124 + $0xf0] sm:$0xff] %v185
                %v187 = vld [vmem:[%s123 + $0x338] sm:$0xff]
                %188 = vst [vmem:[%s124 + $0xf8] sm:$0xff] %v187
                %v189 = vld [vmem:[%s123 + $0x400] sm:$0xff]
                %190 = vst [vmem:[%s124 + $0x100] sm:$0xff] %v189
                %v191 = vld [vmem:[%s123 + $0x408] sm:$0xff]
                %192 = vst [vmem:[%s124 + $0x108] sm:$0xff] %v191
                %v193 = vld [vmem:[%s123 + $0x410] sm:$0xff]
                %194 = vst [vmem:[%s124 + $0x110] sm:$0xff] %v193
                %v195 = vld [vmem:[%s123 + $0x418] sm:$0xff]
                %196 = vst [vmem:[%s124 + $0x118] sm:$0xff] %v195
                %v197 = vld [vmem:[%s123 + $0x420] sm:$0xff]
                %198 = vst [vmem:[%s124 + $0x120] sm:$0xff] %v197
                %v199 = vld [vmem:[%s123 + $0x428] sm:$0xff]
                %200 = vst [vmem:[%s124 + $0x128] sm:$0xff] %v199
                %v201 = vld [vmem:[%s123 + $0x430] sm:$0xff]
                %202 = vst [vmem:[%s124 + $0x130] sm:$0xff] %v201
                %v203 = vld [vmem:[%s123 + $0x438] sm:$0xff]
                %204 = vst [vmem:[%s124 + $0x138] sm:$0xff] %v203
                %v205 = vld [vmem:[%s123 + $0x500] sm:$0xff]
                %206 = vst [vmem:[%s124 + $0x140] sm:$0xff] %v205
                %v207 = vld [vmem:[%s123 + $0x508] sm:$0xff]
                %208 = vst [vmem:[%s124 + $0x148] sm:$0xff] %v207
                %v209 = vld [vmem:[%s123 + $0x510] sm:$0xff]
                %210 = vst [vmem:[%s124 + $0x150] sm:$0xff] %v209
                %v211 = vld [vmem:[%s123 + $0x518] sm:$0xff]
                %212 = vst [vmem:[%s124 + $0x158] sm:$0xff] %v211
                %v213 = vld [vmem:[%s123 + $0x520] sm:$0xff]
                %214 = vst [vmem:[%s124 + $0x160] sm:$0xff] %v213
                %v215 = vld [vmem:[%s123 + $0x528] sm:$0xff]
                %216 = vst [vmem:[%s124 + $0x168] sm:$0xff] %v215
                %v217 = vld [vmem:[%s123 + $0x530] sm:$0xff]
                %218 = vst [vmem:[%s124 + $0x170] sm:$0xff] %v217
                %v219 = vld [vmem:[%s123 + $0x538] sm:$0xff]
                %220 = vst [vmem:[%s124 + $0x178] sm:$0xff] %v219
              $region37: #{discriminator_stage2.5} parent=31 // loop_footer
                %s122 = sadd.s32 1, %s118
              $region38: #{discriminator_stage2.5} parent=31 // loop_footer_branch
                %117 = sbr.rel target = $region34
              $region39: #{discriminator_stage2.5} parent=31 // loop_exit
                _
            $region32: #{discriminator_stage2.5} parent=27 // pred_fallthru
              _
            // Predicated region
            $region40: #{discriminator_stage2.5} parent=27 // pred_check
              _
            $region41: #{discriminator_stage2.5} parent=27 // pred_check_branch
              %222 = sbr.rel target = $region43
            $region42: #{discriminator_stage2.5} parent=27 // pred_region
              _
            $region43: #{discriminator_stage2.5} parent=27 // pred_fallthru
              _
          $region28: #{discriminator_stage2.5} parent=23 // pred_fallthru
            _
          %223 = vnop
        $region24: #{discriminator_stage2.5} parent=19 // pred_fallthru
          _
      $region20: #{discriminator_stage2.5} parent=5 // pred_fallthru
        _
      %p224 = scmp.le.s32.totalorder 1, %s8
      %p225 = scmp.lt.s32.totalorder %s8, 5
      %p226 = pnand %p224, %p225
      %p227 = pneg %p226
      // Predicated region
      $region44: #{discriminator_stage2.5} parent=5 // pred_check
        _
      $region45: #{discriminator_stage2.5} parent=5 // pred_check_branch
        %229 = sbr.rel (%p226) target = $region47
      $region46: #{discriminator_stage2.5} parent=5 // pred_region
        %s230 = ssub.s32 %s8, 1
        %s231 = sand.u32 %s42, 1
        %s232 = sand.u32 %s42, 1
        %s233 = smul.addr %s232, 384
        %s234 = scalar_lea.vmem [#allocation2], %s233
        // Predicated region
        $region48: #{discriminator_stage2.5} parent=46 // pred_check
          %p235 = pneg %p55
        $region49: #{discriminator_stage2.5} parent=46 // pred_check_branch
          %237 = sbr.rel (%p235) target = $region51
        $region50: #{discriminator_stage2.5} parent=46 // pred_region
          _
        $region51: #{discriminator_stage2.5} parent=46 // pred_fallthru
          _
        %p238 = pneg %p29
        %p239 = pneg %p26
        %s240 = sand.u32 %s42, 1
        %s241 = sand.u32 %s42, 1
        %s242 = smul.addr %s241, 384
        %s243 = scalar_lea.vmem [#allocation2], %s242
        %p244 = pneg %p55
        %p245 = pneg %p52
        %p246 = pneg %p81
        %p247 = pneg %p78
        %s248 = smul.u32 16, %s13
        %p249 = scmp.lt.s32.totalorder %s248, 63
        %s250 = scalar_select %p249, %s248, 63
        %s251 = smul.addr %s250, 8
        %s252 = scalar_lea.vmem %s2, %s251
        %s253 = smul.u32 16, %s13
        %s254 = smul.u32 16, %s13
        %p255 = scmp.lt.s32.totalorder %s254, 63
        %s256 = scalar_select %p255, %s254, 63
        %s257 = smul.addr %s256, 8
        %s258 = scalar_lea.vmem %s2, %s257
        %s259 = smul.u32 16, %s13
        %v261 = vld [vmem:[%s0] sm:$0xf]
        %v262 = vld [vmem:[%s234] sm:$0xff]
        %v263 = vld [vmem:[%s234 + $0x8] sm:$0xff]
        %v264 = vld [vmem:[%s234 + $0x10] sm:$0xff]
        %v265 = vld [vmem:[%s234 + $0x18] sm:$0xff]
        %v266 = vld [vmem:[%s234 + $0x20] sm:$0xff]
        %v267 = vld [vmem:[%s234 + $0x28] sm:$0xff]
        %v268 = vld [vmem:[%s234 + $0x30] sm:$0xff]
        %v269 = vld [vmem:[%s234 + $0x38] sm:$0xff]
        %v270 = vld [vmem:[%s234 + $0x40] sm:$0xff]
        %v271 = vld [vmem:[%s234 + $0x48] sm:$0xff]
        %v272 = vld [vmem:[%s234 + $0x50] sm:$0xff]
        %v273 = vld [vmem:[%s234 + $0x58] sm:$0xff]
        %v274 = vld [vmem:[%s234 + $0x60] sm:$0xff]
        %v275 = vld [vmem:[%s234 + $0x68] sm:$0xff]
        %v276 = vld [vmem:[%s234 + $0x70] sm:$0xff]
        %v277 = vld [vmem:[%s234 + $0x78] sm:$0xff]
        %v278 = vld [vmem:[%s234 + $0x80] sm:$0xff]
        %v279 = vld [vmem:[%s234 + $0x88] sm:$0xff]
        %v280 = vld [vmem:[%s234 + $0x90] sm:$0xff]
        %v281 = vld [vmem:[%s234 + $0x98] sm:$0xff]
        %v282 = vld [vmem:[%s234 + $0xa0] sm:$0xff]
        %v283 = vld [vmem:[%s234 + $0xa8] sm:$0xff]
        %v284 = vld [vmem:[%s234 + $0xb0] sm:$0xff]
        %v285 = vld [vmem:[%s234 + $0xb8] sm:$0xff]
        %v286 = vld [vmem:[%s234 + $0xc0] sm:$0xff]
        %v287 = vld [vmem:[%s234 + $0xc8] sm:$0xff]
        %v288 = vld [vmem:[%s234 + $0xd0] sm:$0xff]
        %v289 = vld [vmem:[%s234 + $0xd8] sm:$0xff]
        %v290 = vld [vmem:[%s234 + $0xe0] sm:$0xff]
        %v291 = vld [vmem:[%s234 + $0xe8] sm:$0xff]
        %v292 = vld [vmem:[%s234 + $0xf0] sm:$0xff]
        %v293 = vld [vmem:[%s234 + $0xf8] sm:$0xff]
        %v294 = vld [vmem:[%s234 + $0x100] sm:$0xff]
        %v295 = vld [vmem:[%s234 + $0x108] sm:$0xff]
        %v296 = vld [vmem:[%s234 + $0x110] sm:$0xff]
        %v297 = vld [vmem:[%s234 + $0x118] sm:$0xff]
        %v298 = vld [vmem:[%s234 + $0x120] sm:$0xff]
        %v299 = vld [vmem:[%s234 + $0x128] sm:$0xff]
        %v300 = vld [vmem:[%s234 + $0x130] sm:$0xff]
        %v301 = vld [vmem:[%s234 + $0x138] sm:$0xff]
        %v302 = vld [vmem:[%s234 + $0x140] sm:$0xff]
        %v303 = vld [vmem:[%s234 + $0x148] sm:$0xff]
        %v304 = vld [vmem:[%s234 + $0x150] sm:$0xff]
        %v305 = vld [vmem:[%s234 + $0x158] sm:$0xff]
        %v306 = vld [vmem:[%s234 + $0x160] sm:$0xff]
        %v307 = vld [vmem:[%s234 + $0x168] sm:$0xff]
        %v308 = vld [vmem:[%s234 + $0x170] sm:$0xff]
        %v309 = vld [vmem:[%s234 + $0x178] sm:$0xff]
        %v358 = vunpack.c.l.b16 %v262
        %v359 = vunpack.c.h.b16 %v262
        %v360 = vunpack.c.l.b16 %v263
        %v361 = vunpack.c.h.b16 %v263
        %v362 = vunpack.c.l.b16 %v264
        %v363 = vunpack.c.h.b16 %v264
        %v364 = vunpack.c.l.b16 %v265
        %v365 = vunpack.c.h.b16 %v265
        %v366 = vunpack.c.l.b16 %v266
        %v367 = vunpack.c.h.b16 %v266
        %v368 = vunpack.c.l.b16 %v267
        %v369 = vunpack.c.h.b16 %v267
        %v370 = vunpack.c.l.b16 %v268
        %v371 = vunpack.c.h.b16 %v268
        %v372 = vunpack.c.l.b16 %v269
        %v373 = vunpack.c.h.b16 %v269
        %v374 = vunpack.c.l.b16 %v270
        %v375 = vunpack.c.h.b16 %v270
        %v376 = vunpack.c.l.b16 %v271
        %v377 = vunpack.c.h.b16 %v271
        %v378 = vunpack.c.l.b16 %v272
        %v379 = vunpack.c.h.b16 %v272
        %v380 = vunpack.c.l.b16 %v273
        %v381 = vunpack.c.h.b16 %v273
        %v382 = vunpack.c.l.b16 %v274
        %v383 = vunpack.c.h.b16 %v274
        %v384 = vunpack.c.l.b16 %v275
        %v385 = vunpack.c.h.b16 %v275
        %v386 = vunpack.c.l.b16 %v276
        %v387 = vunpack.c.h.b16 %v276
        %v388 = vunpack.c.l.b16 %v277
        %v389 = vunpack.c.h.b16 %v277
        %v390 = vunpack.c.l.b16 %v278
        %v391 = vunpack.c.h.b16 %v278
        %v392 = vunpack.c.l.b16 %v279
        %v393 = vunpack.c.h.b16 %v279
        %v394 = vunpack.c.l.b16 %v280
        %v395 = vunpack.c.h.b16 %v280
        %v396 = vunpack.c.l.b16 %v281
        %v397 = vunpack.c.h.b16 %v281
        %v398 = vunpack.c.l.b16 %v282
        %v399 = vunpack.c.h.b16 %v282
        %v400 = vunpack.c.l.b16 %v283
        %v401 = vunpack.c.h.b16 %v283
        %v402 = vunpack.c.l.b16 %v284
        %v403 = vunpack.c.h.b16 %v284
        %v404 = vunpack.c.l.b16 %v285
        %v405 = vunpack.c.h.b16 %v285
        %v406 = vunpack.c.l.b16 %v286
        %v407 = vunpack.c.h.b16 %v286
        %v408 = vunpack.c.l.b16 %v287
        %v409 = vunpack.c.h.b16 %v287
        %v410 = vunpack.c.l.b16 %v288
        %v411 = vunpack.c.h.b16 %v288
        %v412 = vunpack.c.l.b16 %v289
        %v413 = vunpack.c.h.b16 %v289
        %v414 = vunpack.c.l.b16 %v290
        %v415 = vunpack.c.h.b16 %v290
        %v416 = vunpack.c.l.b16 %v291
        %v417 = vunpack.c.h.b16 %v291
        %v418 = vunpack.c.l.b16 %v292
        %v419 = vunpack.c.h.b16 %v292
        %v420 = vunpack.c.l.b16 %v293
        %v421 = vunpack.c.h.b16 %v293
        %v422 = vunpack.c.l.b16 %v294
        %v423 = vunpack.c.h.b16 %v294
        %v424 = vunpack.c.l.b16 %v295
        %v425 = vunpack.c.h.b16 %v295
        %v426 = vunpack.c.l.b16 %v296
        %v427 = vunpack.c.h.b16 %v296
        %v428 = vunpack.c.l.b16 %v297
        %v429 = vunpack.c.h.b16 %v297
        %v430 = vunpack.c.l.b16 %v298
        %v431 = vunpack.c.h.b16 %v298
        %v432 = vunpack.c.l.b16 %v299
        %v433 = vunpack.c.h.b16 %v299
        %v434 = vunpack.c.l.b16 %v300
        %v435 = vunpack.c.h.b16 %v300
        %v436 = vunpack.c.l.b16 %v301
        %v437 = vunpack.c.h.b16 %v301
        %v438 = vunpack.c.l.b16 %v302
        %v439 = vunpack.c.h.b16 %v302
        %v440 = vunpack.c.l.b16 %v303
        %v441 = vunpack.c.h.b16 %v303
        %v442 = vunpack.c.l.b16 %v304
        %v443 = vunpack.c.h.b16 %v304
        %v444 = vunpack.c.l.b16 %v305
        %v445 = vunpack.c.h.b16 %v305
        %v446 = vunpack.c.l.b16 %v306
        %v447 = vunpack.c.h.b16 %v306
        %v448 = vunpack.c.l.b16 %v307
        %v449 = vunpack.c.h.b16 %v307
        %v450 = vunpack.c.l.b16 %v308
        %v451 = vunpack.c.h.b16 %v308
        %v452 = vunpack.c.l.b16 %v309
        %v453 = vunpack.c.h.b16 %v309
        %v454 = vpack.c.b16 %v374, %v358
        %v455 = vpack.c.b16 %v375, %v359
        %v456 = vpack.c.b16 %v376, %v360
        %v457 = vpack.c.b16 %v377, %v361
        %v458 = vpack.c.b16 %v378, %v362
        %v459 = vpack.c.b16 %v379, %v363
        %v460 = vpack.c.b16 %v380, %v364
        %v461 = vpack.c.b16 %v381, %v365
        %v462 = vpack.c.b16 %v382, %v366
        %v463 = vpack.c.b16 %v383, %v367
        %v464 = vpack.c.b16 %v384, %v368
        %v465 = vpack.c.b16 %v385, %v369
        %v466 = vpack.c.b16 %v386, %v370
        %v467 = vpack.c.b16 %v387, %v371
        %v468 = vpack.c.b16 %v388, %v372
        %v469 = vpack.c.b16 %v389, %v373
        %v470 = vpack.c.b16 %v406, %v390
        %v471 = vpack.c.b16 %v407, %v391
        %v472 = vpack.c.b16 %v408, %v392
        %v473 = vpack.c.b16 %v409, %v393
        %v474 = vpack.c.b16 %v410, %v394
        %v475 = vpack.c.b16 %v411, %v395
        %v476 = vpack.c.b16 %v412, %v396
        %v477 = vpack.c.b16 %v413, %v397
        %v478 = vpack.c.b16 %v414, %v398
        %v479 = vpack.c.b16 %v415, %v399
        %v480 = vpack.c.b16 %v416, %v400
        %v481 = vpack.c.b16 %v417, %v401
        %v482 = vpack.c.b16 %v418, %v402
        %v483 = vpack.c.b16 %v419, %v403
        %v484 = vpack.c.b16 %v420, %v404
        %v485 = vpack.c.b16 %v421, %v405
        %v486 = vpack.c.b16 %v438, %v422
        %v487 = vpack.c.b16 %v439, %v423
        %v488 = vpack.c.b16 %v440, %v424
        %v489 = vpack.c.b16 %v441, %v425
        %v490 = vpack.c.b16 %v442, %v426
        %v491 = vpack.c.b16 %v443, %v427
        %v492 = vpack.c.b16 %v444, %v428
        %v493 = vpack.c.b16 %v445, %v429
        %v494 = vpack.c.b16 %v446, %v430
        %v495 = vpack.c.b16 %v447, %v431
        %v496 = vpack.c.b16 %v448, %v432
        %v497 = vpack.c.b16 %v449, %v433
        %v498 = vpack.c.b16 %v450, %v434
        %v499 = vpack.c.b16 %v451, %v435
        %v500 = vpack.c.b16 %v452, %v436
        %v501 = vpack.c.b16 %v453, %v437
        %vm550 = vcmask 392192
        %v552 = vsel %vm550, %v261, 0
        %554 = vmatprep.subr.bf16.mxu0 %v455
        %555 = vmatpush1.bf16.msra.mxu0 %v454
        %556 = vmatprep.subr.bf16.mxu0 %v471
        %557 = vmatpush1.bf16.msra.mxu0 %v470
        %558 = vmatprep.subr.bf16.mxu0 %v487
        %559 = vmatpush1.bf16.msra.mxu0 %v486
        %560 = vmatprep.subr.bf16.mxu0 0
        %561 = vmatpush1.bf16.msra.mxu0 0
        %562 = vmatprep.subr.bf16.mxu0 0
        %563 = vmatpush1.bf16.msra.mxu0 0
        %564 = vmatprep.subr.bf16.mxu0 0
        %565 = vmatpush1.bf16.msra.mxu0 0
        %566 = vmatprep.subr.bf16.mxu0 0
        %567 = vmatpush1.bf16.msra.mxu0 0
        %568 = vmatprep.subr.bf16.mxu0 0
        %569 = vmatpush1.bf16.msra.mxu0 0
        %570 = vmatprep.subr.bf16.mxu0 0
        %571 = vmatpush1.bf16.msra.mxu0 0
        %572 = vmatprep.subr.bf16.mxu0 0
        %573 = vmatpush1.bf16.msra.mxu0 0
        %574 = vmatprep.subr.bf16.mxu0 0
        %575 = vmatpush1.bf16.msra.mxu0 0
        %576 = vmatprep.subr.bf16.mxu0 0
        %577 = vmatpush1.bf16.msra.mxu0 0
        %578 = vmatprep.subr.bf16.mxu0 0
        %579 = vmatpush1.bf16.msra.mxu0 0
        %580 = vmatprep.subr.bf16.mxu0 0
        %581 = vmatpush1.bf16.msra.mxu0 0
        %582 = vmatprep.subr.bf16.mxu0 0
        %583 = vmatpush1.bf16.msra.mxu0 0
        %584 = vmatprep.subr.bf16.mxu0 0
        %585 = vmatpush1.bf16.msra.mxu0 0
        %586 = vmatprep.mubr.bf16.mxu0 0
        %587 = vmatmul.mubr.bf16.gmra.mrb[0].mxu0 %v552
        %v588 = vpop.f32.mrb[0].mxu0
        %v589 = vadd.f32 0.0, %v588
        %v590 = vpop.f32.mrb[0].mxu0
        %v591 = vadd.f32 0.0, %v590
        %v592 = vpop.f32.mrb[0].mxu0
        %v593 = vpop.f32.mrb[0].mxu0
        %594 = vdwg.mxu0
        %595 = vmatprep.subr.bf16.mxu0 %v457
        %596 = vmatpush1.bf16.msra.mxu0 %v456
        %597 = vmatprep.subr.bf16.mxu0 %v473
        %598 = vmatpush1.bf16.msra.mxu0 %v472
        %599 = vmatprep.subr.bf16.mxu0 %v489
        %600 = vmatpush1.bf16.msra.mxu0 %v488
        %601 = vmatprep.subr.bf16.mxu0 0
        %602 = vmatpush1.bf16.msra.mxu0 0
        %603 = vmatprep.subr.bf16.mxu0 0
        %604 = vmatpush1.bf16.msra.mxu0 0
        %605 = vmatprep.subr.bf16.mxu0 0
        %606 = vmatpush1.bf16.msra.mxu0 0
        %607 = vmatprep.subr.bf16.mxu0 0
        %608 = vmatpush1.bf16.msra.mxu0 0
        %609 = vmatprep.subr.bf16.mxu0 0
        %610 = vmatpush1.bf16.msra.mxu0 0
        %611 = vmatprep.subr.bf16.mxu0 0
        %612 = vmatpush1.bf16.msra.mxu0 0
        %613 = vmatprep.subr.bf16.mxu0 0
        %614 = vmatpush1.bf16.msra.mxu0 0
        %615 = vmatprep.subr.bf16.mxu0 0
        %616 = vmatpush1.bf16.msra.mxu0 0
        %617 = vmatprep.subr.bf16.mxu0 0
        %618 = vmatpush1.bf16.msra.mxu0 0
        %619 = vmatprep.subr.bf16.mxu0 0
        %620 = vmatpush1.bf16.msra.mxu0 0
        %621 = vmatprep.subr.bf16.mxu0 0
        %622 = vmatpush1.bf16.msra.mxu0 0
        %623 = vmatprep.subr.bf16.mxu0 0
        %624 = vmatpush1.bf16.msra.mxu0 0
        %625 = vmatprep.subr.bf16.mxu0 0
        %626 = vmatpush1.bf16.msra.mxu0 0
        %627 = vmatprep.mubr.bf16.mxu0 0
        %628 = vmatmul.mubr.bf16.gmra.mrb[0].mxu0 %v552
        %v629 = vpop.f32.mrb[0].mxu0
        %v630 = vadd.f32 0.0, %v629
        %v631 = vpop.f32.mrb[0].mxu0
        %v632 = vadd.f32 0.0, %v631
        %v633 = vpop.f32.mrb[0].mxu0
        %v634 = vpop.f32.mrb[0].mxu0
        %635 = vdwg.mxu0
        %636 = vmatprep.subr.bf16.mxu0 %v459
        %637 = vmatpush1.bf16.msra.mxu0 %v458
        %638 = vmatprep.subr.bf16.mxu0 %v475
        %639 = vmatpush1.bf16.msra.mxu0 %v474
        %640 = vmatprep.subr.bf16.mxu0 %v491
        %641 = vmatpush1.bf16.msra.mxu0 %v490
        %642 = vmatprep.subr.bf16.mxu0 0
        %643 = vmatpush1.bf16.msra.mxu0 0
        %644 = vmatprep.subr.bf16.mxu0 0
        %645 = vmatpush1.bf16.msra.mxu0 0
        %646 = vmatprep.subr.bf16.mxu0 0
        %647 = vmatpush1.bf16.msra.mxu0 0
        %648 = vmatprep.subr.bf16.mxu0 0
        %649 = vmatpush1.bf16.msra.mxu0 0
        %650 = vmatprep.subr.bf16.mxu0 0
        %651 = vmatpush1.bf16.msra.mxu0 0
        %652 = vmatprep.subr.bf16.mxu0 0
        %653 = vmatpush1.bf16.msra.mxu0 0
        %654 = vmatprep.subr.bf16.mxu0 0
        %655 = vmatpush1.bf16.msra.mxu0 0
        %656 = vmatprep.subr.bf16.mxu0 0
        %657 = vmatpush1.bf16.msra.mxu0 0
        %658 = vmatprep.subr.bf16.mxu0 0
        %659 = vmatpush1.bf16.msra.mxu0 0
        %660 = vmatprep.subr.bf16.mxu0 0
        %661 = vmatpush1.bf16.msra.mxu0 0
        %662 = vmatprep.subr.bf16.mxu0 0
        %663 = vmatpush1.bf16.msra.mxu0 0
        %664 = vmatprep.subr.bf16.mxu0 0
        %665 = vmatpush1.bf16.msra.mxu0 0
        %666 = vmatprep.subr.bf16.mxu0 0
        %667 = vmatpush1.bf16.msra.mxu0 0
        %668 = vmatprep.mubr.bf16.mxu0 0
        %669 = vmatmul.mubr.bf16.gmra.mrb[0].mxu0 %v552
        %v670 = vpop.f32.mrb[0].mxu0
        %v671 = vadd.f32 0.0, %v670
        %v672 = vpop.f32.mrb[0].mxu0
        %v673 = vadd.f32 0.0, %v672
        %v674 = vpop.f32.mrb[0].mxu0
        %v675 = vpop.f32.mrb[0].mxu0
        %676 = vdwg.mxu0
        %677 = vmatprep.subr.bf16.mxu0 %v461
        %678 = vmatpush1.bf16.msra.mxu0 %v460
        %679 = vmatprep.subr.bf16.mxu0 %v477
        %680 = vmatpush1.bf16.msra.mxu0 %v476
        %681 = vmatprep.subr.bf16.mxu0 %v493
        %682 = vmatpush1.bf16.msra.mxu0 %v492
        %683 = vmatprep.subr.bf16.mxu0 0
        %684 = vmatpush1.bf16.msra.mxu0 0
        %685 = vmatprep.subr.bf16.mxu0 0
        %686 = vmatpush1.bf16.msra.mxu0 0
        %687 = vmatprep.subr.bf16.mxu0 0
        %688 = vmatpush1.bf16.msra.mxu0 0
        %689 = vmatprep.subr.bf16.mxu0 0
        %690 = vmatpush1.bf16.msra.mxu0 0
        %691 = vmatprep.subr.bf16.mxu0 0
        %692 = vmatpush1.bf16.msra.mxu0 0
        %693 = vmatprep.subr.bf16.mxu0 0
        %694 = vmatpush1.bf16.msra.mxu0 0
        %695 = vmatprep.subr.bf16.mxu0 0
        %696 = vmatpush1.bf16.msra.mxu0 0
        %697 = vmatprep.subr.bf16.mxu0 0
        %698 = vmatpush1.bf16.msra.mxu0 0
        %699 = vmatprep.subr.bf16.mxu0 0
        %700 = vmatpush1.bf16.msra.mxu0 0
        %701 = vmatprep.subr.bf16.mxu0 0
        %702 = vmatpush1.bf16.msra.mxu0 0
        %703 = vmatprep.subr.bf16.mxu0 0
        %704 = vmatpush1.bf16.msra.mxu0 0
        %705 = vmatprep.subr.bf16.mxu0 0
        %706 = vmatpush1.bf16.msra.mxu0 0
        %707 = vmatprep.subr.bf16.mxu0 0
        %708 = vmatpush1.bf16.msra.mxu0 0
        %709 = vmatprep.mubr.bf16.mxu0 0
        %710 = vmatmul.mubr.bf16.gmra.mrb[0].mxu0 %v552
        %v711 = vpop.f32.mrb[0].mxu0
        %v712 = vadd.f32 0.0, %v711
        %v713 = vpop.f32.mrb[0].mxu0
        %v714 = vadd.f32 0.0, %v713
        %v715 = vpop.f32.mrb[0].mxu0
        %v716 = vpop.f32.mrb[0].mxu0
        %717 = vdwg.mxu0
        %718 = vmatprep.subr.bf16.mxu0 %v463
        %719 = vmatpush1.bf16.msra.mxu0 %v462
        %720 = vmatprep.subr.bf16.mxu0 %v479
        %721 = vmatpush1.bf16.msra.mxu0 %v478
        %722 = vmatprep.subr.bf16.mxu0 %v495
        %723 = vmatpush1.bf16.msra.mxu0 %v494
        %724 = vmatprep.subr.bf16.mxu0 0
        %725 = vmatpush1.bf16.msra.mxu0 0
        %726 = vmatprep.subr.bf16.mxu0 0
        %727 = vmatpush1.bf16.msra.mxu0 0
        %728 = vmatprep.subr.bf16.mxu0 0
        %729 = vmatpush1.bf16.msra.mxu0 0
        %730 = vmatprep.subr.bf16.mxu0 0
        %731 = vmatpush1.bf16.msra.mxu0 0
        %732 = vmatprep.subr.bf16.mxu0 0
        %733 = vmatpush1.bf16.msra.mxu0 0
        %734 = vmatprep.subr.bf16.mxu0 0
        %735 = vmatpush1.bf16.msra.mxu0 0
        %736 = vmatprep.subr.bf16.mxu0 0
        %737 = vmatpush1.bf16.msra.mxu0 0
        %738 = vmatprep.subr.bf16.mxu0 0
        %739 = vmatpush1.bf16.msra.mxu0 0
        %740 = vmatprep.subr.bf16.mxu0 0
        %741 = vmatpush1.bf16.msra.mxu0 0
        %742 = vmatprep.subr.bf16.mxu0 0
        %743 = vmatpush1.bf16.msra.mxu0 0
        %744 = vmatprep.subr.bf16.mxu0 0
        %745 = vmatpush1.bf16.msra.mxu0 0
        %746 = vmatprep.subr.bf16.mxu0 0
        %747 = vmatpush1.bf16.msra.mxu0 0
        %748 = vmatprep.subr.bf16.mxu0 0
        %749 = vmatpush1.bf16.msra.mxu0 0
        %750 = vmatprep.mubr.bf16.mxu0 0
        %751 = vmatmul.mubr.bf16.gmra.mrb[0].mxu0 %v552
        %v752 = vpop.f32.mrb[0].mxu0
        %v753 = vadd.f32 0.0, %v752
        %v754 = vpop.f32.mrb[0].mxu0
        %v755 = vadd.f32 0.0, %v754
        %v756 = vpop.f32.mrb[0].mxu0
        %v757 = vpop.f32.mrb[0].mxu0
        %758 = vdwg.mxu0
        %759 = vmatprep.subr.bf16.mxu0 %v465
        %760 = vmatpush1.bf16.msra.mxu0 %v464
        %761 = vmatprep.subr.bf16.mxu0 %v481
        %762 = vmatpush1.bf16.msra.mxu0 %v480
        %763 = vmatprep.subr.bf16.mxu0 %v497
        %764 = vmatpush1.bf16.msra.mxu0 %v496
        %765 = vmatprep.subr.bf16.mxu0 0
        %766 = vmatpush1.bf16.msra.mxu0 0
        %767 = vmatprep.subr.bf16.mxu0 0
        %768 = vmatpush1.bf16.msra.mxu0 0
        %769 = vmatprep.subr.bf16.mxu0 0
        %770 = vmatpush1.bf16.msra.mxu0 0
        %771 = vmatprep.subr.bf16.mxu0 0
        %772 = vmatpush1.bf16.msra.mxu0 0
        %773 = vmatprep.subr.bf16.mxu0 0
        %774 = vmatpush1.bf16.msra.mxu0 0
        %775 = vmatprep.subr.bf16.mxu0 0
        %776 = vmatpush1.bf16.msra.mxu0 0
        %777 = vmatprep.subr.bf16.mxu0 0
        %778 = vmatpush1.bf16.msra.mxu0 0
        %779 = vmatprep.subr.bf16.mxu0 0
        %780 = vmatpush1.bf16.msra.mxu0 0
        %781 = vmatprep.subr.bf16.mxu0 0
        %782 = vmatpush1.bf16.msra.mxu0 0
        %783 = vmatprep.subr.bf16.mxu0 0
        %784 = vmatpush1.bf16.msra.mxu0 0
        %785 = vmatprep.subr.bf16.mxu0 0
        %786 = vmatpush1.bf16.msra.mxu0 0
        %787 = vmatprep.subr.bf16.mxu0 0
        %788 = vmatpush1.bf16.msra.mxu0 0
        %789 = vmatprep.subr.bf16.mxu0 0
        %790 = vmatpush1.bf16.msra.mxu0 0
        %791 = vmatprep.mubr.bf16.mxu0 0
        %792 = vmatmul.mubr.bf16.gmra.mrb[0].mxu0 %v552
        %v793 = vpop.f32.mrb[0].mxu0
        %v794 = vadd.f32 0.0, %v793
        %v795 = vpop.f32.mrb[0].mxu0
        %v796 = vadd.f32 0.0, %v795
        %v797 = vpop.f32.mrb[0].mxu0
        %v798 = vpop.f32.mrb[0].mxu0
        %799 = vdwg.mxu0
        %800 = vmatprep.subr.bf16.mxu0 %v467
        %801 = vmatpush1.bf16.msra.mxu0 %v466
        %802 = vmatprep.subr.bf16.mxu0 %v483
        %803 = vmatpush1.bf16.msra.mxu0 %v482
        %804 = vmatprep.subr.bf16.mxu0 %v499
        %805 = vmatpush1.bf16.msra.mxu0 %v498
        %806 = vmatprep.subr.bf16.mxu0 0
        %807 = vmatpush1.bf16.msra.mxu0 0
        %808 = vmatprep.subr.bf16.mxu0 0
        %809 = vmatpush1.bf16.msra.mxu0 0
        %810 = vmatprep.subr.bf16.mxu0 0
        %811 = vmatpush1.bf16.msra.mxu0 0
        %812 = vmatprep.subr.bf16.mxu0 0
        %813 = vmatpush1.bf16.msra.mxu0 0
        %814 = vmatprep.subr.bf16.mxu0 0
        %815 = vmatpush1.bf16.msra.mxu0 0
        %816 = vmatprep.subr.bf16.mxu0 0
        %817 = vmatpush1.bf16.msra.mxu0 0
        %818 = vmatprep.subr.bf16.mxu0 0
        %819 = vmatpush1.bf16.msra.mxu0 0
        %820 = vmatprep.subr.bf16.mxu0 0
        %821 = vmatpush1.bf16.msra.mxu0 0
        %822 = vmatprep.subr.bf16.mxu0 0
        %823 = vmatpush1.bf16.msra.mxu0 0
        %824 = vmatprep.subr.bf16.mxu0 0
        %825 = vmatpush1.bf16.msra.mxu0 0
        %826 = vmatprep.subr.bf16.mxu0 0
        %827 = vmatpush1.bf16.msra.mxu0 0
        %828 = vmatprep.subr.bf16.mxu0 0
        %829 = vmatpush1.bf16.msra.mxu0 0
        %830 = vmatprep.subr.bf16.mxu0 0
        %831 = vmatpush1.bf16.msra.mxu0 0
        %832 = vmatprep.mubr.bf16.mxu0 0
        %833 = vmatmul.mubr.bf16.gmra.mrb[0].mxu0 %v552
        %v834 = vpop.f32.mrb[0].mxu0
        %v835 = vadd.f32 0.0, %v834
        %v836 = vpop.f32.mrb[0].mxu0
        %v837 = vadd.f32 0.0, %v836
        %v838 = vpop.f32.mrb[0].mxu0
        %v839 = vpop.f32.mrb[0].mxu0
        %840 = vdwg.mxu0
        %841 = vmatprep.subr.bf16.mxu0 %v469
        %842 = vmatpush1.bf16.msra.mxu0 %v468
        %843 = vmatprep.subr.bf16.mxu0 %v485
        %844 = vmatpush1.bf16.msra.mxu0 %v484
        %845 = vmatprep.subr.bf16.mxu0 %v501
        %846 = vmatpush1.bf16.msra.mxu0 %v500
        %847 = vmatprep.subr.bf16.mxu0 0
        %848 = vmatpush1.bf16.msra.mxu0 0
        %849 = vmatprep.subr.bf16.mxu0 0
        %850 = vmatpush1.bf16.msra.mxu0 0
        %851 = vmatprep.subr.bf16.mxu0 0
        %852 = vmatpush1.bf16.msra.mxu0 0
        %853 = vmatprep.subr.bf16.mxu0 0
        %854 = vmatpush1.bf16.msra.mxu0 0
        %855 = vmatprep.subr.bf16.mxu0 0
        %856 = vmatpush1.bf16.msra.mxu0 0
        %857 = vmatprep.subr.bf16.mxu0 0
        %858 = vmatpush1.bf16.msra.mxu0 0
        %859 = vmatprep.subr.bf16.mxu0 0
        %860 = vmatpush1.bf16.msra.mxu0 0
        %861 = vmatprep.subr.bf16.mxu0 0
        %862 = vmatpush1.bf16.msra.mxu0 0
        %863 = vmatprep.subr.bf16.mxu0 0
        %864 = vmatpush1.bf16.msra.mxu0 0
        %865 = vmatprep.subr.bf16.mxu0 0
        %866 = vmatpush1.bf16.msra.mxu0 0
        %867 = vmatprep.subr.bf16.mxu0 0
        %868 = vmatpush1.bf16.msra.mxu0 0
        %869 = vmatprep.subr.bf16.mxu0 0
        %870 = vmatpush1.bf16.msra.mxu0 0
        %871 = vmatprep.subr.bf16.mxu0 0
        %872 = vmatpush1.bf16.msra.mxu0 0
        %873 = vmatprep.mubr.bf16.mxu0 0
        %874 = vmatmul.mubr.bf16.gmra.mrb[0].mxu0 %v552
        %v875 = vpop.f32.mrb[0].mxu0
        %v876 = vadd.f32 0.0, %v875
        %v877 = vpop.f32.mrb[0].mxu0
        %v878 = vadd.f32 0.0, %v877
        %v879 = vpop.f32.mrb[0].mxu0
        %v880 = vpop.f32.mrb[0].mxu0
        %881 = vdwg.mxu0
        %vm882 = vcmp.gt.f32.partialorder %v589, 0.0
        %vm883 = vcmp.gt.f32.partialorder %v591, 0.0
        %vm884 = vcmp.gt.f32.partialorder %v630, 0.0
        %vm885 = vcmp.gt.f32.partialorder %v632, 0.0
        %vm886 = vcmp.gt.f32.partialorder %v671, 0.0
        %vm887 = vcmp.gt.f32.partialorder %v673, 0.0
        %vm888 = vcmp.gt.f32.partialorder %v712, 0.0
        %vm889 = vcmp.gt.f32.partialorder %v714, 0.0
        %vm890 = vcmp.gt.f32.partialorder %v753, 0.0
        %vm891 = vcmp.gt.f32.partialorder %v755, 0.0
        %vm892 = vcmp.gt.f32.partialorder %v794, 0.0
        %vm893 = vcmp.gt.f32.partialorder %v796, 0.0
        %vm894 = vcmp.gt.f32.partialorder %v835, 0.0
        %vm895 = vcmp.gt.f32.partialorder %v837, 0.0
        %vm896 = vcmp.gt.f32.partialorder %v876, 0.0
        %vm897 = vcmp.gt.f32.partialorder %v878, 0.0
        %v898 = vmul.f32 %v589, 0.2
        %v899 = vmul.f32 %v591, 0.2
        %v900 = vmul.f32 %v630, 0.2
        %v901 = vmul.f32 %v632, 0.2
        %v902 = vmul.f32 %v671, 0.2
        %v903 = vmul.f32 %v673, 0.2
        %v904 = vmul.f32 %v712, 0.2
        %v905 = vmul.f32 %v714, 0.2
        %v906 = vmul.f32 %v753, 0.2
        %v907 = vmul.f32 %v755, 0.2
        %v908 = vmul.f32 %v794, 0.2
        %v909 = vmul.f32 %v796, 0.2
        %v910 = vmul.f32 %v835, 0.2
        %v911 = vmul.f32 %v837, 0.2
        %v912 = vmul.f32 %v876, 0.2
        %v913 = vmul.f32 %v878, 0.2
        %v914 = vsel %vm882, %v589, %v898
        %v915 = vsel %vm883, %v591, %v899
        %v916 = vsel %vm884, %v630, %v900
        %v917 = vsel %vm885, %v632, %v901
        %v918 = vsel %vm886, %v671, %v902
        %v919 = vsel %vm887, %v673, %v903
        %v920 = vsel %vm888, %v712, %v904
        %v921 = vsel %vm889, %v714, %v905
        %v922 = vsel %vm890, %v753, %v906
        %v923 = vsel %vm891, %v755, %v907
        %v924 = vsel %vm892, %v794, %v908
        %v925 = vsel %vm893, %v796, %v909
        %v926 = vsel %vm894, %v835, %v910
        %v927 = vsel %vm895, %v837, %v911
        %v928 = vsel %vm896, %v876, %v912
        %v929 = vsel %vm897, %v878, %v913
        %930 = vst [vmem:[%s258] sm:$0xff] %v914
        %931 = vst [vmem:[%s258 + $0x8] sm:$0xff] %v915
        %932 = vst [vmem:[%s258 + $0x10] sm:$0xff] %v916
        %933 = vst [vmem:[%s258 + $0x18] sm:$0xff] %v917
        %934 = vst [vmem:[%s258 + $0x20] sm:$0xff] %v918
        %935 = vst [vmem:[%s258 + $0x28] sm:$0xff] %v919
        %936 = vst [vmem:[%s258 + $0x30] sm:$0xff] %v920
        %937 = vst [vmem:[%s258 + $0x38] sm:$0xff] %v921
        %938 = vst [vmem:[%s258 + $0x40] sm:$0xff] %v922
        %939 = vst [vmem:[%s258 + $0x48] sm:$0xff] %v923
        %940 = vst [vmem:[%s258 + $0x50] sm:$0xff] %v924
        %941 = vst [vmem:[%s258 + $0x58] sm:$0xff] %v925
        %942 = vst [vmem:[%s258 + $0x60] sm:$0xff] %v926
        %943 = vst [vmem:[%s258 + $0x68] sm:$0xff] %v927
        %944 = vst [vmem:[%s258 + $0x70] sm:$0xff] %v928
        %945 = vst [vmem:[%s258 + $0x78] sm:$0xff] %v929
        %s946 = smul.u32 16, %s13
        %p947 = scmp.lt.s32.totalorder %s946, 63
        %s948 = scalar_select %p947, %s946, 63
        %s949 = smul.addr %s948, 8
        %s950 = scalar_lea.vmem %s2, %s949
        // Predicated region
        $region52: #{discriminator_stage2.5} parent=46 // pred_check
          %p951 = pneg %p78
        $region53: #{discriminator_stage2.5} parent=46 // pred_check_branch
          %953 = sbr.rel (%p951) target = $region55
        $region54: #{discriminator_stage2.5} parent=46 // pred_region
          %s954 = smul.u32 16, %s13
        $region55: #{discriminator_stage2.5} parent=46 // pred_fallthru
          _
      $region47: #{discriminator_stage2.5} parent=5 // pred_fallthru
        _
      %p955 = scmp.le.s32.totalorder 2, %s8
      // Predicated region
      $region56: #{discriminator_stage2.5} parent=5 // pred_check
        %p956 = pneg %p955
      $region57: #{discriminator_stage2.5} parent=5 // pred_check_branch
        %958 = sbr.rel (%p956) target = $region59
      $region58: #{discriminator_stage2.5} parent=5 // pred_region
        %s959 = ssub.s32 %s8, 2
        // Predicated region
        $region60: #{discriminator_stage2.5} parent=58 // pred_check
          %p960 = pneg %p84
        $region61: #{discriminator_stage2.5} parent=58 // pred_check_branch
          %962 = sbr.rel (%p960) target = $region63
        $region62: #{discriminator_stage2.5} parent=58 // pred_region
          %s963 = smul.u32 16, %s14
          %p964 = scmp.lt.s32.totalorder %s963, 63
          %s965 = scalar_select %p964, %s963, 63
          %s966 = smul.addr %s965, 8
          %s967 = scalar_lea.vmem %s2, %s966
        $region63: #{discriminator_stage2.5} parent=58 // pred_fallthru
          _
      $region59: #{discriminator_stage2.5} parent=5 // pred_fallthru
        _
    $region6: #{discriminator_stage2.5} parent=1 // loop_footer
      %s12 = sadd.s32 1, %s8
    $region7: #{discriminator_stage2.5} parent=1 // loop_footer_branch
      %7 = sbr.rel target = $region3
    $region8: #{discriminator_stage2.5} parent=1 // loop_exit
      _

// kernel: discriminator_stage2.6
$region0: #{discriminator_stage2.6}
  #allocation0 [shape = 'u32[]', space=smem, size = 0x4, offset = 0x4, fixed_abs, tag = 'smem constant byte address 0x4 - core index']
  #allocation1 [shape = 'u32[144,128]{1,0:T(1,128)}', space=vmem, size = 0x12000, scoped, tag = 'internal scratch']
  %s0 = inlined_call_operand.vmem [shape: bf16[16,128], index: 0, kind: input, shape index: {}]
  %s1 = inlined_call_operand.vmem [shape: bf16[128,2048], index: 1, kind: input, shape index: {}]
  %s2 = inlined_call_operand.vmem [shape: f32[16,1], index: 2, kind: input, shape index: {}]
  %s3 = inlined_call_operand.vmem [shape: f32[16,1], index: 3, kind: input, shape index: {}]
  %s4 = inlined_call_operand.vmem [shape: f32[16,2048], index: 4, kind: output, shape index: {}]
  %s5 = sld [smem:[#allocation0]]
  $region26: #{discriminator_stage2.6} parent=0
    _
  %s7 = ssub.s32 1, %s5
  %s8 = scalar_select 0, %s7, %s5
  // Predicated region
  $region2: #{discriminator_stage2.6} parent=0 // pred_check
    _
  $region3: #{discriminator_stage2.6} parent=0 // pred_check_branch
    %10 = sbr.rel (0) target = $region5
  $region4: #{discriminator_stage2.6} parent=0 // pred_region
    _
  $region5: #{discriminator_stage2.6} parent=0 // pred_fallthru
    _
  // Predicated region
  $region6: #{discriminator_stage2.6} parent=0 // pred_check
    _
  $region7: #{discriminator_stage2.6} parent=0 // pred_check_branch
    %12 = sbr.rel (0) target = $region9
  $region8: #{discriminator_stage2.6} parent=0 // pred_region
    _
  $region9: #{discriminator_stage2.6} parent=0 // pred_fallthru
    _
  // Predicated region
  $region10: #{discriminator_stage2.6} parent=0 // pred_check
    _
  $region11: #{discriminator_stage2.6} parent=0 // pred_check_branch
    %14 = sbr.rel (0) target = $region13
  $region12: #{discriminator_stage2.6} parent=0 // pred_region
    _
  $region13: #{discriminator_stage2.6} parent=0 // pred_fallthru
    _
  // Predicated region
  $region14: #{discriminator_stage2.6} parent=0 // pred_check
    _
  $region15: #{discriminator_stage2.6} parent=0 // pred_check_branch
    %16 = sbr.rel (0) target = $region17
  $region16: #{discriminator_stage2.6} parent=0 // pred_region
    _
  $region17: #{discriminator_stage2.6} parent=0 // pred_fallthru
    _
  %v18 = vld [vmem:[%s0] sm:$0xf]
  %v19 = vld [vmem:[%s0 + $0x4] sm:$0xf]
  %v20 = vld [vmem:[%s1] sm:$0xff]
  %v21 = vld [vmem:[%s1 + $0x8] sm:$0xff]
  %v22 = vld [vmem:[%s1 + $0x10] sm:$0xff]
  %v23 = vld [vmem:[%s1 + $0x18] sm:$0xff]
  %v24 = vld [vmem:[%s1 + $0x20] sm:$0xff]
  %v25 = vld [vmem:[%s1 + $0x28] sm:$0xff]
  %v26 = vld [vmem:[%s1 + $0x30] sm:$0xff]
  %v27 = vld [vmem:[%s1 + $0x38] sm:$0xff]
  %v28 = vld [vmem:[%s1 + $0x40] sm:$0xff]
  %v29 = vld [vmem:[%s1 + $0x48] sm:$0xff]
  %v30 = vld [vmem:[%s1 + $0x50] sm:$0xff]
  %v31 = vld [vmem:[%s1 + $0x58] sm:$0xff]
  %v32 = vld [vmem:[%s1 + $0x60] sm:$0xff]
  %v33 = vld [vmem:[%s1 + $0x68] sm:$0xff]
  %v34 = vld [vmem:[%s1 + $0x70] sm:$0xff]
  %v35 = vld [vmem:[%s1 + $0x78] sm:$0xff]
  %v36 = vld [vmem:[%s1 + $0x80] sm:$0xff]
  %v37 = vld [vmem:[%s1 + $0x88] sm:$0xff]
  %v38 = vld [vmem:[%s1 + $0x90] sm:$0xff]
  %v39 = vld [vmem:[%s1 + $0x98] sm:$0xff]
  %v40 = vld [vmem:[%s1 + $0xa0] sm:$0xff]
  %v41 = vld [vmem:[%s1 + $0xa8] sm:$0xff]
  %v42 = vld [vmem:[%s1 + $0xb0] sm:$0xff]
  %v43 = vld [vmem:[%s1 + $0xb8] sm:$0xff]
  %v44 = vld [vmem:[%s1 + $0xc0] sm:$0xff]
  %v45 = vld [vmem:[%s1 + $0xc8] sm:$0xff]
  %v46 = vld [vmem:[%s1 + $0xd0] sm:$0xff]
  %v47 = vld [vmem:[%s1 + $0xd8] sm:$0xff]
  %v48 = vld [vmem:[%s1 + $0xe0] sm:$0xff]
  %v49 = vld [vmem:[%s1 + $0xe8] sm:$0xff]
  %v50 = vld [vmem:[%s1 + $0xf0] sm:$0xff]
  %v51 = vld [vmem:[%s1 + $0xf8] sm:$0xff]
  %v52 = vld [vmem:[%s1 + $0x100] sm:$0xff]
  %v53 = vld [vmem:[%s1 + $0x108] sm:$0xff]
  %v54 = vld [vmem:[%s1 + $0x110] sm:$0xff]
  %v55 = vld [vmem:[%s1 + $0x118] sm:$0xff]
  %v56 = vld [vmem:[%s1 + $0x120] sm:$0xff]
  %v57 = vld [vmem:[%s1 + $0x128] sm:$0xff]
  %v58 = vld [vmem:[%s1 + $0x130] sm:$0xff]
  %v59 = vld [vmem:[%s1 + $0x138] sm:$0xff]
  %v60 = vld [vmem:[%s1 + $0x140] sm:$0xff]
  %v61 = vld [vmem:[%s1 + $0x148] sm:$0xff]
  %v62 = vld [vmem:[%s1 + $0x150] sm:$0xff]
  %v63 = vld [vmem:[%s1 + $0x158] sm:$0xff]
  %v64 = vld [vmem:[%s1 + $0x160] sm:$0xff]
  %v65 = vld [vmem:[%s1 + $0x168] sm:$0xff]
  %v66 = vld [vmem:[%s1 + $0x170] sm:$0xff]
  %v67 = vld [vmem:[%s1 + $0x178] sm:$0xff]
  %v68 = vld [vmem:[%s1 + $0x180] sm:$0xff]
  %v69 = vld [vmem:[%s1 + $0x188] sm:$0xff]
  %v70 = vld [vmem:[%s1 + $0x190] sm:$0xff]
  %v71 = vld [vmem:[%s1 + $0x198] sm:$0xff]
  %v72 = vld [vmem:[%s1 + $0x1a0] sm:$0xff]
  %v73 = vld [vmem:[%s1 + $0x1a8] sm:$0xff]
  %v74 = vld [vmem:[%s1 + $0x1b0] sm:$0xff]
  %v75 = vld [vmem:[%s1 + $0x1b8] sm:$0xff]
  %v76 = vld [vmem:[%s1 + $0x1c0] sm:$0xff]
  %v77 = vld [vmem:[%s1 + $0x1c8] sm:$0xff]
  %v78 = vld [vmem:[%s1 + $0x1d0] sm:$0xff]
  %v79 = vld [vmem:[%s1 + $0x1d8] sm:$0xff]
  %v80 = vld [vmem:[%s1 + $0x1e0] sm:$0xff]
  %v81 = vld [vmem:[%s1 + $0x1e8] sm:$0xff]
  %v82 = vld [vmem:[%s1 + $0x1f0] sm:$0xff]
  %v83 = vld [vmem:[%s1 + $0x1f8] sm:$0xff]
  %v84 = vld [vmem:[%s1 + $0x200] sm:$0xff]
  %v85 = vld [vmem:[%s1 + $0x208] sm:$0xff]
  %v86 = vld [vmem:[%s1 + $0x210] sm:$0xff]
  %v87 = vld [vmem:[%s1 + $0x218] sm:$0xff]
  %v88 = vld [vmem:[%s1 + $0x220] sm:$0xff]
  %v89 = vld [vmem:[%s1 + $0x228] sm:$0xff]
  %v90 = vld [vmem:[%s1 + $0x230] sm:$0xff]
  %v91 = vld [vmem:[%s1 + $0x238] sm:$0xff]
  %v92 = vld [vmem:[%s1 + $0x240] sm:$0xff]
  %v93 = vld [vmem:[%s1 + $0x248] sm:$0xff]
  %v94 = vld [vmem:[%s1 + $0x250] sm:$0xff]
  %v95 = vld [vmem:[%s1 + $0x258] sm:$0xff]
  %v96 = vld [vmem:[%s1 + $0x260] sm:$0xff]
  %v97 = vld [vmem:[%s1 + $0x268] sm:$0xff]
  %v98 = vld [vmem:[%s1 + $0x270] sm:$0xff]
  %v99 = vld [vmem:[%s1 + $0x278] sm:$0xff]
  %v100 = vld [vmem:[%s1 + $0x280] sm:$0xff]
  %v101 = vld [vmem:[%s1 + $0x288] sm:$0xff]
  %v102 = vld [vmem:[%s1 + $0x290] sm:$0xff]
  %v103 = vld [vmem:[%s1 + $0x298] sm:$0xff]
  %v104 = vld [vmem:[%s1 + $0x2a0] sm:$0xff]
  %v105 = vld [vmem:[%s1 + $0x2a8] sm:$0xff]
  %v106 = vld [vmem:[%s1 + $0x2b0] sm:$0xff]
  %v107 = vld [vmem:[%s1 + $0x2b8] sm:$0xff]
  %v108 = vld [vmem:[%s1 + $0x2c0] sm:$0xff]
  %v109 = vld [vmem:[%s1 + $0x2c8] sm:$0xff]
  %v110 = vld [vmem:[%s1 + $0x2d0] sm:$0xff]
  %v111 = vld [vmem:[%s1 + $0x2d8] sm:$0xff]
  %v112 = vld [vmem:[%s1 + $0x2e0] sm:$0xff]
  %v113 = vld [vmem:[%s1 + $0x2e8] sm:$0xff]
  %v114 = vld [vmem:[%s1 + $0x2f0] sm:$0xff]
  %v115 = vld [vmem:[%s1 + $0x2f8] sm:$0xff]
  %v116 = vld [vmem:[%s1 + $0x300] sm:$0xff]
  %v117 = vld [vmem:[%s1 + $0x308] sm:$0xff]
  %v118 = vld [vmem:[%s1 + $0x310] sm:$0xff]
  %v119 = vld [vmem:[%s1 + $0x318] sm:$0xff]
  %v120 = vld [vmem:[%s1 + $0x320] sm:$0xff]
  %v121 = vld [vmem:[%s1 + $0x328] sm:$0xff]
  %v122 = vld [vmem:[%s1 + $0x330] sm:$0xff]
  %v123 = vld [vmem:[%s1 + $0x338] sm:$0xff]
  %v124 = vld [vmem:[%s1 + $0x340] sm:$0xff]
  %v125 = vld [vmem:[%s1 + $0x348] sm:$0xff]
  %v126 = vld [vmem:[%s1 + $0x350] sm:$0xff]
  %v127 = vld [vmem:[%s1 + $0x358] sm:$0xff]
  %v128 = vld [vmem:[%s1 + $0x360] sm:$0xff]
  %v129 = vld [vmem:[%s1 + $0x368] sm:$0xff]
  %v130 = vld [vmem:[%s1 + $0x370] sm:$0xff]
  %v131 = vld [vmem:[%s1 + $0x378] sm:$0xff]
  %v132 = vld [vmem:[%s1 + $0x380] sm:$0xff]
  %v133 = vld [vmem:[%s1 + $0x388] sm:$0xff]
  %v134 = vld [vmem:[%s1 + $0x390] sm:$0xff]
  %v135 = vld [vmem:[%s1 + $0x398] sm:$0xff]
  %v136 = vld [vmem:[%s1 + $0x3a0] sm:$0xff]
  %v137 = vld [vmem:[%s1 + $0x3a8] sm:$0xff]
  %v138 = vld [vmem:[%s1 + $0x3b0] sm:$0xff]
  %v139 = vld [vmem:[%s1 + $0x3b8] sm:$0xff]
  %v140 = vld [vmem:[%s1 + $0x3c0] sm:$0xff]
  %v141 = vld [vmem:[%s1 + $0x3c8] sm:$0xff]
  %v142 = vld [vmem:[%s1 + $0x3d0] sm:$0xff]
  %v143 = vld [vmem:[%s1 + $0x3d8] sm:$0xff]
  %v144 = vld [vmem:[%s1 + $0x3e0] sm:$0xff]
  %v145 = vld [vmem:[%s1 + $0x3e8] sm:$0xff]
  %v146 = vld [vmem:[%s1 + $0x3f0] sm:$0xff]
  %v147 = vld [vmem:[%s1 + $0x3f8] sm:$0xff]
  %v150 = vunpack.c.l.b16 %v18
  %v151 = vunpack.c.l.b16 %v19
  %v152 = vpack.c.b16 %v151, %v150
  %v282 = vunpack.c.l.b16 %v20
  %v283 = vunpack.c.h.b16 %v20
  %v284 = vunpack.c.l.b16 %v21
  %v285 = vunpack.c.h.b16 %v21
  %v286 = vunpack.c.l.b16 %v22
  %v287 = vunpack.c.h.b16 %v22
  %v288 = vunpack.c.l.b16 %v23
  %v289 = vunpack.c.h.b16 %v23
  %v290 = vunpack.c.l.b16 %v24
  %v291 = vunpack.c.h.b16 %v24
  %v292 = vunpack.c.l.b16 %v25
  %v293 = vunpack.c.h.b16 %v25
  %v294 = vunpack.c.l.b16 %v26
  %v295 = vunpack.c.h.b16 %v26
  %v296 = vunpack.c.l.b16 %v27
  %v297 = vunpack.c.h.b16 %v27
  %v298 = vunpack.c.l.b16 %v28
  %v299 = vunpack.c.h.b16 %v28
  %v300 = vunpack.c.l.b16 %v29
  %v301 = vunpack.c.h.b16 %v29
  %v302 = vunpack.c.l.b16 %v30
  %v303 = vunpack.c.h.b16 %v30
  %v304 = vunpack.c.l.b16 %v31
  %v305 = vunpack.c.h.b16 %v31
  %v306 = vunpack.c.l.b16 %v32
  %v307 = vunpack.c.h.b16 %v32
  %v308 = vunpack.c.l.b16 %v33
  %v309 = vunpack.c.h.b16 %v33
  %v310 = vunpack.c.l.b16 %v34
  %v311 = vunpack.c.h.b16 %v34
  %v312 = vunpack.c.l.b16 %v35
  %v313 = vunpack.c.h.b16 %v35
  %v314 = vunpack.c.l.b16 %v36
  %v315 = vunpack.c.h.b16 %v36
  %v316 = vunpack.c.l.b16 %v37
  %v317 = vunpack.c.h.b16 %v37
  %v318 = vunpack.c.l.b16 %v38
  %v319 = vunpack.c.h.b16 %v38
  %v320 = vunpack.c.l.b16 %v39
  %v321 = vunpack.c.h.b16 %v39
  %v322 = vunpack.c.l.b16 %v40
  %v323 = vunpack.c.h.b16 %v40
  %v324 = vunpack.c.l.b16 %v41
  %v325 = vunpack.c.h.b16 %v41
  %v326 = vunpack.c.l.b16 %v42
  %v327 = vunpack.c.h.b16 %v42
  %v328 = vunpack.c.l.b16 %v43
  %v329 = vunpack.c.h.b16 %v43
  %v330 = vunpack.c.l.b16 %v44
  %v331 = vunpack.c.h.b16 %v44
  %v332 = vunpack.c.l.b16 %v45
  %v333 = vunpack.c.h.b16 %v45
  %v334 = vunpack.c.l.b16 %v46
  %v335 = vunpack.c.h.b16 %v46
  %v336 = vunpack.c.l.b16 %v47
  %v337 = vunpack.c.h.b16 %v47
  %v338 = vunpack.c.l.b16 %v48
  %v339 = vunpack.c.h.b16 %v48
  %v340 = vunpack.c.l.b16 %v49
  %v341 = vunpack.c.h.b16 %v49
  %v342 = vunpack.c.l.b16 %v50
  %v343 = vunpack.c.h.b16 %v50
  %v344 = vunpack.c.l.b16 %v51
  %v345 = vunpack.c.h.b16 %v51
  %v346 = vunpack.c.l.b16 %v52
  %v347 = vunpack.c.h.b16 %v52
  %v348 = vunpack.c.l.b16 %v53
  %v349 = vunpack.c.h.b16 %v53
  %v350 = vunpack.c.l.b16 %v54
  %v351 = vunpack.c.h.b16 %v54
  %v352 = vunpack.c.l.b16 %v55
  %v353 = vunpack.c.h.b16 %v55
  %v354 = vunpack.c.l.b16 %v56
  %v355 = vunpack.c.h.b16 %v56
  %v356 = vunpack.c.l.b16 %v57
  %v357 = vunpack.c.h.b16 %v57
  %v358 = vunpack.c.l.b16 %v58
  %v359 = vunpack.c.h.b16 %v58
  %v360 = vunpack.c.l.b16 %v59
  %v361 = vunpack.c.h.b16 %v59
  %v362 = vunpack.c.l.b16 %v60
  %v363 = vunpack.c.h.b16 %v60
  %v364 = vunpack.c.l.b16 %v61
  %v365 = vunpack.c.h.b16 %v61
  %v366 = vunpack.c.l.b16 %v62
  %v367 = vunpack.c.h.b16 %v62
  %v368 = vunpack.c.l.b16 %v63
  %v369 = vunpack.c.h.b16 %v63
  %v370 = vunpack.c.l.b16 %v64
  %v371 = vunpack.c.h.b16 %v64
  %v372 = vunpack.c.l.b16 %v65
  %v373 = vunpack.c.h.b16 %v65
  %v374 = vunpack.c.l.b16 %v66
  %v375 = vunpack.c.h.b16 %v66
  %v376 = vunpack.c.l.b16 %v67
  %v377 = vunpack.c.h.b16 %v67
  %v378 = vunpack.c.l.b16 %v68
  %v379 = vunpack.c.h.b16 %v68
  %v380 = vunpack.c.l.b16 %v69
  %v381 = vunpack.c.h.b16 %v69
  %v382 = vunpack.c.l.b16 %v70
  %v383 = vunpack.c.h.b16 %v70
  %v384 = vunpack.c.l.b16 %v71
  %v385 = vunpack.c.h.b16 %v71
  %v386 = vunpack.c.l.b16 %v72
  %v387 = vunpack.c.h.b16 %v72
  %v388 = vunpack.c.l.b16 %v73
  %v389 = vunpack.c.h.b16 %v73
  %v390 = vunpack.c.l.b16 %v74
  %v391 = vunpack.c.h.b16 %v74
  %v392 = vunpack.c.l.b16 %v75
  %v393 = vunpack.c.h.b16 %v75
  %v394 = vunpack.c.l.b16 %v76
  %v395 = vunpack.c.h.b16 %v76
  %v396 = vunpack.c.l.b16 %v77
  %v397 = vunpack.c.h.b16 %v77
  %v398 = vunpack.c.l.b16 %v78
  %v399 = vunpack.c.h.b16 %v78
  %v400 = vunpack.c.l.b16 %v79
  %v401 = vunpack.c.h.b16 %v79
  %v402 = vunpack.c.l.b16 %v80
  %v403 = vunpack.c.h.b16 %v80
  %v404 = vunpack.c.l.b16 %v81
  %v405 = vunpack.c.h.b16 %v81
  %v406 = vunpack.c.l.b16 %v82
  %v407 = vunpack.c.h.b16 %v82
  %v408 = vunpack.c.l.b16 %v83
  %v409 = vunpack.c.h.b16 %v83
  %v410 = vunpack.c.l.b16 %v84
  %v411 = vunpack.c.h.b16 %v84
  %v412 = vunpack.c.l.b16 %v85
  %v413 = vunpack.c.h.b16 %v85
  %v414 = vunpack.c.l.b16 %v86
  %v415 = vunpack.c.h.b16 %v86
  %v416 = vunpack.c.l.b16 %v87
  %v417 = vunpack.c.h.b16 %v87
  %v418 = vunpack.c.l.b16 %v88
  %v419 = vunpack.c.h.b16 %v88
  %v420 = vunpack.c.l.b16 %v89
  %v421 = vunpack.c.h.b16 %v89
  %v422 = vunpack.c.l.b16 %v90
  %v423 = vunpack.c.h.b16 %v90
  %v424 = vunpack.c.l.b16 %v91
  %v425 = vunpack.c.h.b16 %v91
  %v426 = vunpack.c.l.b16 %v92
  %v427 = vunpack.c.h.b16 %v92
  %v428 = vunpack.c.l.b16 %v93
  %v429 = vunpack.c.h.b16 %v93
  %v430 = vunpack.c.l.b16 %v94
  %v431 = vunpack.c.h.b16 %v94
  %v432 = vunpack.c.l.b16 %v95
  %v433 = vunpack.c.h.b16 %v95
  %v434 = vunpack.c.l.b16 %v96
  %v435 = vunpack.c.h.b16 %v96
  %v436 = vunpack.c.l.b16 %v97
  %v437 = vunpack.c.h.b16 %v97
  %v438 = vunpack.c.l.b16 %v98
  %v439 = vunpack.c.h.b16 %v98
  %v440 = vunpack.c.l.b16 %v99
  %v441 = vunpack.c.h.b16 %v99
  %v442 = vunpack.c.l.b16 %v100
  %v443 = vunpack.c.h.b16 %v100
  %v444 = vunpack.c.l.b16 %v101
  %v445 = vunpack.c.h.b16 %v101
  %v446 = vunpack.c.l.b16 %v102
  %v447 = vunpack.c.h.b16 %v102
  %v448 = vunpack.c.l.b16 %v103
  %v449 = vunpack.c.h.b16 %v103
  %v450 = vunpack.c.l.b16 %v104
  %v451 = vunpack.c.h.b16 %v104
  %v452 = vunpack.c.l.b16 %v105
  %v453 = vunpack.c.h.b16 %v105
  %v454 = vunpack.c.l.b16 %v106
  %v455 = vunpack.c.h.b16 %v106
  %v456 = vunpack.c.l.b16 %v107
  %v457 = vunpack.c.h.b16 %v107
  %v458 = vunpack.c.l.b16 %v108
  %v459 = vunpack.c.h.b16 %v108
  %v460 = vunpack.c.l.b16 %v109
  %v461 = vunpack.c.h.b16 %v109
  %v462 = vunpack.c.l.b16 %v110
  %v463 = vunpack.c.h.b16 %v110
  %v464 = vunpack.c.l.b16 %v111
  %v465 = vunpack.c.h.b16 %v111
  %v466 = vunpack.c.l.b16 %v112
  %v467 = vunpack.c.h.b16 %v112
  %v468 = vunpack.c.l.b16 %v113
  %v469 = vunpack.c.h.b16 %v113
  %v470 = vunpack.c.l.b16 %v114
  %v471 = vunpack.c.h.b16 %v114
  %v472 = vunpack.c.l.b16 %v115
  %v473 = vunpack.c.h.b16 %v115
  %v474 = vunpack.c.l.b16 %v116
  %v475 = vunpack.c.h.b16 %v116
  %v476 = vunpack.c.l.b16 %v117
  %v477 = vunpack.c.h.b16 %v117
  %v478 = vunpack.c.l.b16 %v118
  %v479 = vunpack.c.h.b16 %v118
  %v480 = vunpack.c.l.b16 %v119
  %v481 = vunpack.c.h.b16 %v119
  %v482 = vunpack.c.l.b16 %v120
  %v483 = vunpack.c.h.b16 %v120
  %v484 = vunpack.c.l.b16 %v121
  %v485 = vunpack.c.h.b16 %v121
  %v486 = vunpack.c.l.b16 %v122
  %v487 = vunpack.c.h.b16 %v122
  %v488 = vunpack.c.l.b16 %v123
  %v489 = vunpack.c.h.b16 %v123
  %v490 = vunpack.c.l.b16 %v124
  %v491 = vunpack.c.h.b16 %v124
  %v492 = vunpack.c.l.b16 %v125
  %v493 = vunpack.c.h.b16 %v125
  %v494 = vunpack.c.l.b16 %v126
  %v495 = vunpack.c.h.b16 %v126
  %v496 = vunpack.c.l.b16 %v127
  %v497 = vunpack.c.h.b16 %v127
  %v498 = vunpack.c.l.b16 %v128
  %v499 = vunpack.c.h.b16 %v128
  %v500 = vunpack.c.l.b16 %v129
  %v501 = vunpack.c.h.b16 %v129
  %v502 = vunpack.c.l.b16 %v130
  %v503 = vunpack.c.h.b16 %v130
  %v504 = vunpack.c.l.b16 %v131
  %v505 = vunpack.c.h.b16 %v131
  %v506 = vunpack.c.l.b16 %v132
  %v507 = vunpack.c.h.b16 %v132
  %v508 = vunpack.c.l.b16 %v133
  %v509 = vunpack.c.h.b16 %v133
  %v510 = vunpack.c.l.b16 %v134
  %v511 = vunpack.c.h.b16 %v134
  %v512 = vunpack.c.l.b16 %v135
  %v513 = vunpack.c.h.b16 %v135
  %v514 = vunpack.c.l.b16 %v136
  %v515 = vunpack.c.h.b16 %v136
  %v516 = vunpack.c.l.b16 %v137
  %v517 = vunpack.c.h.b16 %v137
  %v518 = vunpack.c.l.b16 %v138
  %v519 = vunpack.c.h.b16 %v138
  %v520 = vunpack.c.l.b16 %v139
  %v521 = vunpack.c.h.b16 %v139
  %v522 = vunpack.c.l.b16 %v140
  %v523 = vunpack.c.h.b16 %v140
  %v524 = vunpack.c.l.b16 %v141
  %v525 = vunpack.c.h.b16 %v141
  %v526 = vunpack.c.l.b16 %v142
  %v527 = vunpack.c.h.b16 %v142
  %v528 = vunpack.c.l.b16 %v143
  %v529 = vunpack.c.h.b16 %v143
  %v530 = vunpack.c.l.b16 %v144
  %v531 = vunpack.c.h.b16 %v144
  %v532 = vunpack.c.l.b16 %v145
  %v533 = vunpack.c.h.b16 %v145
  %v534 = vunpack.c.l.b16 %v146
  %v535 = vunpack.c.h.b16 %v146
  %v536 = vunpack.c.l.b16 %v147
  %v537 = vunpack.c.h.b16 %v147
  %v538 = vpack.c.b16 %v298, %v282
  %v539 = vpack.c.b16 %v299, %v283
  %v540 = vpack.c.b16 %v300, %v284
  %v541 = vpack.c.b16 %v301, %v285
  %v542 = vpack.c.b16 %v302, %v286
  %v543 = vpack.c.b16 %v303, %v287
  %v544 = vpack.c.b16 %v304, %v288
  %v545 = vpack.c.b16 %v305, %v289
  %v546 = vpack.c.b16 %v306, %v290
  %v547 = vpack.c.b16 %v307, %v291
  %v548 = vpack.c.b16 %v308, %v292
  %v549 = vpack.c.b16 %v309, %v293
  %v550 = vpack.c.b16 %v310, %v294
  %v551 = vpack.c.b16 %v311, %v295
  %v552 = vpack.c.b16 %v312, %v296
  %v553 = vpack.c.b16 %v313, %v297
  %v554 = vpack.c.b16 %v330, %v314
  %v555 = vpack.c.b16 %v331, %v315
  %v556 = vpack.c.b16 %v332, %v316
  %v557 = vpack.c.b16 %v333, %v317
  %v558 = vpack.c.b16 %v334, %v318
  %v559 = vpack.c.b16 %v335, %v319
  %v560 = vpack.c.b16 %v336, %v320
  %v561 = vpack.c.b16 %v337, %v321
  %v562 = vpack.c.b16 %v338, %v322
  %v563 = vpack.c.b16 %v339, %v323
  %v564 = vpack.c.b16 %v340, %v324
  %v565 = vpack.c.b16 %v341, %v325
  %v566 = vpack.c.b16 %v342, %v326
  %v567 = vpack.c.b16 %v343, %v327
  %v568 = vpack.c.b16 %v344, %v328
  %v569 = vpack.c.b16 %v345, %v329
  %v570 = vpack.c.b16 %v362, %v346
  %v571 = vpack.c.b16 %v363, %v347
  %v572 = vpack.c.b16 %v364, %v348
  %v573 = vpack.c.b16 %v365, %v349
  %v574 = vpack.c.b16 %v366, %v350
  %v575 = vpack.c.b16 %v367, %v351
  %v576 = vpack.c.b16 %v368, %v352
  %v577 = vpack.c.b16 %v369, %v353
  %v578 = vpack.c.b16 %v370, %v354
  %v579 = vpack.c.b16 %v371, %v355
  %v580 = vpack.c.b16 %v372, %v356
  %v581 = vpack.c.b16 %v373, %v357
  %v582 = vpack.c.b16 %v374, %v358
  %v583 = vpack.c.b16 %v375, %v359
  %v584 = vpack.c.b16 %v376, %v360
  %v585 = vpack.c.b16 %v377, %v361
  %v586 = vpack.c.b16 %v394, %v378
  %v587 = vpack.c.b16 %v395, %v379
  %v588 = vpack.c.b16 %v396, %v380
  %v589 = vpack.c.b16 %v397, %v381
  %v590 = vpack.c.b16 %v398, %v382
  %v591 = vpack.c.b16 %v399, %v383
  %v592 = vpack.c.b16 %v400, %v384
  %v593 = vpack.c.b16 %v401, %v385
  %v594 = vpack.c.b16 %v402, %v386
  %v595 = vpack.c.b16 %v403, %v387
  %v596 = vpack.c.b16 %v404, %v388
  %v597 = vpack.c.b16 %v405, %v389
  %v598 = vpack.c.b16 %v406, %v390
  %v599 = vpack.c.b16 %v407, %v391
  %v600 = vpack.c.b16 %v408, %v392
  %v601 = vpack.c.b16 %v409, %v393
  %v602 = vpack.c.b16 %v426, %v410
  %v603 = vpack.c.b16 %v427, %v411
  %v604 = vpack.c.b16 %v428, %v412
  %v605 = vpack.c.b16 %v429, %v413
  %v606 = vpack.c.b16 %v430, %v414
  %v607 = vpack.c.b16 %v431, %v415
  %v608 = vpack.c.b16 %v432, %v416
  %v609 = vpack.c.b16 %v433, %v417
  %v610 = vpack.c.b16 %v434, %v418
  %v611 = vpack.c.b16 %v435, %v419
  %v612 = vpack.c.b16 %v436, %v420
  %v613 = vpack.c.b16 %v437, %v421
  %v614 = vpack.c.b16 %v438, %v422
  %v615 = vpack.c.b16 %v439, %v423
  %v616 = vpack.c.b16 %v440, %v424
  %v617 = vpack.c.b16 %v441, %v425
  %v618 = vpack.c.b16 %v458, %v442
  %v619 = vpack.c.b16 %v459, %v443
  %v620 = vpack.c.b16 %v460, %v444
  %v621 = vpack.c.b16 %v461, %v445
  %v622 = vpack.c.b16 %v462, %v446
  %v623 = vpack.c.b16 %v463, %v447
  %v624 = vpack.c.b16 %v464, %v448
  %v625 = vpack.c.b16 %v465, %v449
  %v626 = vpack.c.b16 %v466, %v450
  %v627 = vpack.c.b16 %v467, %v451
  %v628 = vpack.c.b16 %v468, %v452
  %v629 = vpack.c.b16 %v469, %v453
  %v630 = vpack.c.b16 %v470, %v454
  %v631 = vpack.c.b16 %v471, %v455
  %v632 = vpack.c.b16 %v472, %v456
  %v633 = vpack.c.b16 %v473, %v457
  %v634 = vpack.c.b16 %v490, %v474
  %v635 = vpack.c.b16 %v491, %v475
  %v636 = vpack.c.b16 %v492, %v476
  %v637 = vpack.c.b16 %v493, %v477
  %v638 = vpack.c.b16 %v494, %v478
  %v639 = vpack.c.b16 %v495, %v479
  %v640 = vpack.c.b16 %v496, %v480
  %v641 = vpack.c.b16 %v497, %v481
  %v642 = vpack.c.b16 %v498, %v482
  %v643 = vpack.c.b16 %v499, %v483
  %v644 = vpack.c.b16 %v500, %v484
  %v645 = vpack.c.b16 %v501, %v485
  %v646 = vpack.c.b16 %v502, %v486
  %v647 = vpack.c.b16 %v503, %v487
  %v648 = vpack.c.b16 %v504, %v488
  %v649 = vpack.c.b16 %v505, %v489
  %v650 = vpack.c.b16 %v522, %v506
  %v651 = vpack.c.b16 %v523, %v507
  %v652 = vpack.c.b16 %v524, %v508
  %v653 = vpack.c.b16 %v525, %v509
  %v654 = vpack.c.b16 %v526, %v510
  %v655 = vpack.c.b16 %v527, %v511
  %v656 = vpack.c.b16 %v528, %v512
  %v657 = vpack.c.b16 %v529, %v513
  %v658 = vpack.c.b16 %v530, %v514
  %v659 = vpack.c.b16 %v531, %v515
  %v660 = vpack.c.b16 %v532, %v516
  %v661 = vpack.c.b16 %v533, %v517
  %v662 = vpack.c.b16 %v534, %v518
  %v663 = vpack.c.b16 %v535, %v519
  %v664 = vpack.c.b16 %v536, %v520
  %v665 = vpack.c.b16 %v537, %v521
  %794 = vmatprep.subr.bf16.mxu0 %v539
  %795 = vmatpush1.bf16.msra.mxu0 %v538
  %796 = vmatprep.subr.bf16.mxu0 %v555
  %797 = vmatpush1.bf16.msra.mxu0 %v554
  %798 = vmatprep.subr.bf16.mxu0 %v571
  %799 = vmatpush1.bf16.msra.mxu0 %v570
  %800 = vmatprep.subr.bf16.mxu0 %v587
  %801 = vmatpush1.bf16.msra.mxu0 %v586
  %802 = vmatprep.subr.bf16.mxu0 %v603
  %803 = vmatpush1.bf16.msra.mxu0 %v602
  %804 = vmatprep.subr.bf16.mxu0 %v619
  %805 = vmatpush1.bf16.msra.mxu0 %v618
  %806 = vmatprep.subr.bf16.mxu0 %v635
  %807 = vmatpush1.bf16.msra.mxu0 %v634
  %808 = vmatprep.subr.bf16.mxu0 %v651
  %809 = vmatpush1.bf16.msra.mxu0 %v650
  %810 = vmatprep.subr.bf16.mxu0 0
  %811 = vmatpush1.bf16.msra.mxu0 0
  %812 = vmatprep.subr.bf16.mxu0 0
  %813 = vmatpush1.bf16.msra.mxu0 0
  %814 = vmatprep.subr.bf16.mxu0 0
  %815 = vmatpush1.bf16.msra.mxu0 0
  %816 = vmatprep.subr.bf16.mxu0 0
  %817 = vmatpush1.bf16.msra.mxu0 0
  %818 = vmatprep.subr.bf16.mxu0 0
  %819 = vmatpush1.bf16.msra.mxu0 0
  %820 = vmatprep.subr.bf16.mxu0 0
  %821 = vmatpush1.bf16.msra.mxu0 0
  %822 = vmatprep.subr.bf16.mxu0 0
  %823 = vmatpush1.bf16.msra.mxu0 0
  %824 = vmatprep.subr.bf16.mxu0 0
  %825 = vmatpush1.bf16.msra.mxu0 0
  %826 = vmatprep.mubr.bf16.mxu0 0
  %827 = vmatmul.mubr.bf16.gmra.mrb[0].mxu0 %v152
  %v828 = vpop.f32.mrb[0].mxu0
  %v829 = vadd.f32 0.0, %v828
  %v830 = vpop.f32.mrb[0].mxu0
  %v831 = vadd.f32 0.0, %v830
  %v832 = vpop.f32.mrb[0].mxu0
  %v833 = vadd.f32 0.0, %v832
  %v834 = vpop.f32.mrb[0].mxu0
  %v835 = vadd.f32 0.0, %v834
  %836 = vdwg.mxu0
  %837 = vmatprep.subr.bf16.mxu0 %v541
  %838 = vmatpush1.bf16.msra.mxu0 %v540
  %839 = vmatprep.subr.bf16.mxu0 %v557
  %840 = vmatpush1.bf16.msra.mxu0 %v556
  %841 = vmatprep.subr.bf16.mxu0 %v573
  %842 = vmatpush1.bf16.msra.mxu0 %v572
  %843 = vmatprep.subr.bf16.mxu0 %v589
  %844 = vmatpush1.bf16.msra.mxu0 %v588
  %845 = vmatprep.subr.bf16.mxu0 %v605
  %846 = vmatpush1.bf16.msra.mxu0 %v604
  %847 = vmatprep.subr.bf16.mxu0 %v621
  %848 = vmatpush1.bf16.msra.mxu0 %v620
  %849 = vmatprep.subr.bf16.mxu0 %v637
  %850 = vmatpush1.bf16.msra.mxu0 %v636
  %851 = vmatprep.subr.bf16.mxu0 %v653
  %852 = vmatpush1.bf16.msra.mxu0 %v652
  %853 = vmatprep.subr.bf16.mxu0 0
  %854 = vmatpush1.bf16.msra.mxu0 0
  %855 = vmatprep.subr.bf16.mxu0 0
  %856 = vmatpush1.bf16.msra.mxu0 0
  %857 = vmatprep.subr.bf16.mxu0 0
  %858 = vmatpush1.bf16.msra.mxu0 0
  %859 = vmatprep.subr.bf16.mxu0 0
  %860 = vmatpush1.bf16.msra.mxu0 0
  %861 = vmatprep.subr.bf16.mxu0 0
  %862 = vmatpush1.bf16.msra.mxu0 0
  %863 = vmatprep.subr.bf16.mxu0 0
  %864 = vmatpush1.bf16.msra.mxu0 0
  %865 = vmatprep.subr.bf16.mxu0 0
  %866 = vmatpush1.bf16.msra.mxu0 0
  %867 = vmatprep.subr.bf16.mxu0 0
  %868 = vmatpush1.bf16.msra.mxu0 0
  %869 = vmatprep.mubr.bf16.mxu0 0
  %870 = vmatmul.mubr.bf16.gmra.mrb[0].mxu0 %v152
  %v871 = vpop.f32.mrb[0].mxu0
  %v872 = vadd.f32 0.0, %v871
  %v873 = vpop.f32.mrb[0].mxu0
  %v874 = vadd.f32 0.0, %v873
  %v875 = vpop.f32.mrb[0].mxu0
  %v876 = vadd.f32 0.0, %v875
  %v877 = vpop.f32.mrb[0].mxu0
  %v878 = vadd.f32 0.0, %v877
  %879 = vdwg.mxu0
  %880 = vmatprep.subr.bf16.mxu0 %v543
  %881 = vmatpush1.bf16.msra.mxu0 %v542
  %882 = vmatprep.subr.bf16.mxu0 %v559
  %883 = vmatpush1.bf16.msra.mxu0 %v558
  %884 = vmatprep.subr.bf16.mxu0 %v575
  %885 = vmatpush1.bf16.msra.mxu0 %v574
  %886 = vmatprep.subr.bf16.mxu0 %v591
  %887 = vmatpush1.bf16.msra.mxu0 %v590
  %888 = vmatprep.subr.bf16.mxu0 %v607
  %889 = vmatpush1.bf16.msra.mxu0 %v606
  %890 = vmatprep.subr.bf16.mxu0 %v623
  %891 = vmatpush1.bf16.msra.mxu0 %v622
  %892 = vmatprep.subr.bf16.mxu0 %v639
  %893 = vmatpush1.bf16.msra.mxu0 %v638
  %894 = vmatprep.subr.bf16.mxu0 %v655
  %895 = vmatpush1.bf16.msra.mxu0 %v654
  %896 = vmatprep.subr.bf16.mxu0 0
  %897 = vmatpush1.bf16.msra.mxu0 0
  %898 = vmatprep.subr.bf16.mxu0 0
  %899 = vmatpush1.bf16.msra.mxu0 0
  %900 = vmatprep.subr.bf16.mxu0 0
  %901 = vmatpush1.bf16.msra.mxu0 0
  %902 = vmatprep.subr.bf16.mxu0 0
  %903 = vmatpush1.bf16.msra.mxu0 0
  %904 = vmatprep.subr.bf16.mxu0 0
  %905 = vmatpush1.bf16.msra.mxu0 0
  %906 = vmatprep.subr.bf16.mxu0 0
  %907 = vmatpush1.bf16.msra.mxu0 0
  %908 = vmatprep.subr.bf16.mxu0 0
  %909 = vmatpush1.bf16.msra.mxu0 0
  %910 = vmatprep.subr.bf16.mxu0 0
  %911 = vmatpush1.bf16.msra.mxu0 0
  %912 = vmatprep.mubr.bf16.mxu0 0
  %913 = vmatmul.mubr.bf16.gmra.mrb[0].mxu0 %v152
  %v914 = vpop.f32.mrb[0].mxu0
  %v915 = vadd.f32 0.0, %v914
  %v916 = vpop.f32.mrb[0].mxu0
  %v917 = vadd.f32 0.0, %v916
  %v918 = vpop.f32.mrb[0].mxu0
  %v919 = vadd.f32 0.0, %v918
  %v920 = vpop.f32.mrb[0].mxu0
  %v921 = vadd.f32 0.0, %v920
  %922 = vdwg.mxu0
  %923 = vmatprep.subr.bf16.mxu0 %v545
  %924 = vmatpush1.bf16.msra.mxu0 %v544
  %925 = vmatprep.subr.bf16.mxu0 %v561
  %926 = vmatpush1.bf16.msra.mxu0 %v560
  %927 = vmatprep.subr.bf16.mxu0 %v577
  %928 = vmatpush1.bf16.msra.mxu0 %v576
  %929 = vmatprep.subr.bf16.mxu0 %v593
  %930 = vmatpush1.bf16.msra.mxu0 %v592
  %931 = vmatprep.subr.bf16.mxu0 %v609
  %932 = vmatpush1.bf16.msra.mxu0 %v608
  %933 = vmatprep.subr.bf16.mxu0 %v625
  %934 = vmatpush1.bf16.msra.mxu0 %v624
  %935 = vmatprep.subr.bf16.mxu0 %v641
  %936 = vmatpush1.bf16.msra.mxu0 %v640
  %937 = vmatprep.subr.bf16.mxu0 %v657
  %938 = vmatpush1.bf16.msra.mxu0 %v656
  %939 = vmatprep.subr.bf16.mxu0 0
  %940 = vmatpush1.bf16.msra.mxu0 0
  %941 = vmatprep.subr.bf16.mxu0 0
  %942 = vmatpush1.bf16.msra.mxu0 0
  %943 = vmatprep.subr.bf16.mxu0 0
  %944 = vmatpush1.bf16.msra.mxu0 0
  %945 = vmatprep.subr.bf16.mxu0 0
  %946 = vmatpush1.bf16.msra.mxu0 0
  %947 = vmatprep.subr.bf16.mxu0 0
  %948 = vmatpush1.bf16.msra.mxu0 0
  %949 = vmatprep.subr.bf16.mxu0 0
  %950 = vmatpush1.bf16.msra.mxu0 0
  %951 = vmatprep.subr.bf16.mxu0 0
  %952 = vmatpush1.bf16.msra.mxu0 0
  %953 = vmatprep.subr.bf16.mxu0 0
  %954 = vmatpush1.bf16.msra.mxu0 0
  %955 = vmatprep.mubr.bf16.mxu0 0
  %956 = vmatmul.mubr.bf16.gmra.mrb[0].mxu0 %v152
  %v957 = vpop.f32.mrb[0].mxu0
  %v958 = vadd.f32 0.0, %v957
  %v959 = vpop.f32.mrb[0].mxu0
  %v960 = vadd.f32 0.0, %v959
  %v961 = vpop.f32.mrb[0].mxu0
  %v962 = vadd.f32 0.0, %v961
  %v963 = vpop.f32.mrb[0].mxu0
  %v964 = vadd.f32 0.0, %v963
  %965 = vdwg.mxu0
  %966 = vmatprep.subr.bf16.mxu0 %v547
  %967 = vmatpush1.bf16.msra.mxu0 %v546
  %968 = vmatprep.subr.bf16.mxu0 %v563
  %969 = vmatpush1.bf16.msra.mxu0 %v562
  %970 = vmatprep.subr.bf16.mxu0 %v579
  %971 = vmatpush1.bf16.msra.mxu0 %v578
  %972 = vmatprep.subr.bf16.mxu0 %v595
  %973 = vmatpush1.bf16.msra.mxu0 %v594
  %974 = vmatprep.subr.bf16.mxu0 %v611
  %975 = vmatpush1.bf16.msra.mxu0 %v610
  %976 = vmatprep.subr.bf16.mxu0 %v627
  %977 = vmatpush1.bf16.msra.mxu0 %v626
  %978 = vmatprep.subr.bf16.mxu0 %v643
  %979 = vmatpush1.bf16.msra.mxu0 %v642
  %980 = vmatprep.subr.bf16.mxu0 %v659
  %981 = vmatpush1.bf16.msra.mxu0 %v658
  %982 = vmatprep.subr.bf16.mxu0 0
  %983 = vmatpush1.bf16.msra.mxu0 0
  %984 = vmatprep.subr.bf16.mxu0 0
  %985 = vmatpush1.bf16.msra.mxu0 0
  %986 = vmatprep.subr.bf16.mxu0 0
  %987 = vmatpush1.bf16.msra.mxu0 0
  %988 = vmatprep.subr.bf16.mxu0 0
  %989 = vmatpush1.bf16.msra.mxu0 0
  %990 = vmatprep.subr.bf16.mxu0 0
  %991 = vmatpush1.bf16.msra.mxu0 0
  %992 = vmatprep.subr.bf16.mxu0 0
  %993 = vmatpush1.bf16.msra.mxu0 0
  %994 = vmatprep.subr.bf16.mxu0 0
  %995 = vmatpush1.bf16.msra.mxu0 0
  %996 = vmatprep.subr.bf16.mxu0 0
  %997 = vmatpush1.bf16.msra.mxu0 0
  %998 = vmatprep.mubr.bf16.mxu0 0
  %999 = vmatmul.mubr.bf16.gmra.mrb[0].mxu0 %v152
  %v1000 = vpop.f32.mrb[0].mxu0
  %v1001 = vadd.f32 0.0, %v1000
  %v1002 = vpop.f32.mrb[0].mxu0
  %v1003 = vadd.f32 0.0, %v1002
  %v1004 = vpop.f32.mrb[0].mxu0
  %v1005 = vadd.f32 0.0, %v1004
  %v1006 = vpop.f32.mrb[0].mxu0
  %v1007 = vadd.f32 0.0, %v1006
  %1008 = vdwg.mxu0
  %1009 = vmatprep.subr.bf16.mxu0 %v549
  %1010 = vmatpush1.bf16.msra.mxu0 %v548
  %1011 = vmatprep.subr.bf16.mxu0 %v565
  %1012 = vmatpush1.bf16.msra.mxu0 %v564
  %1013 = vmatprep.subr.bf16.mxu0 %v581
  %1014 = vmatpush1.bf16.msra.mxu0 %v580
  %1015 = vmatprep.subr.bf16.mxu0 %v597
  %1016 = vmatpush1.bf16.msra.mxu0 %v596
  %1017 = vmatprep.subr.bf16.mxu0 %v613
  %1018 = vmatpush1.bf16.msra.mxu0 %v612
  %1019 = vmatprep.subr.bf16.mxu0 %v629
  %1020 = vmatpush1.bf16.msra.mxu0 %v628
  %1021 = vmatprep.subr.bf16.mxu0 %v645
  %1022 = vmatpush1.bf16.msra.mxu0 %v644
  %1023 = vmatprep.subr.bf16.mxu0 %v661
  %1024 = vmatpush1.bf16.msra.mxu0 %v660
  %1025 = vmatprep.subr.bf16.mxu0 0
  %1026 = vmatpush1.bf16.msra.mxu0 0
  %1027 = vmatprep.subr.bf16.mxu0 0
  %1028 = vmatpush1.bf16.msra.mxu0 0
  %1029 = vmatprep.subr.bf16.mxu0 0
  %1030 = vmatpush1.bf16.msra.mxu0 0
  %1031 = vmatprep.subr.bf16.mxu0 0
  %1032 = vmatpush1.bf16.msra.mxu0 0
  %1033 = vmatprep.subr.bf16.mxu0 0
  %1034 = vmatpush1.bf16.msra.mxu0 0
  %1035 = vmatprep.subr.bf16.mxu0 0
  %1036 = vmatpush1.bf16.msra.mxu0 0
  %1037 = vmatprep.subr.bf16.mxu0 0
  %1038 = vmatpush1.bf16.msra.mxu0 0
  %1039 = vmatprep.subr.bf16.mxu0 0
  %1040 = vmatpush1.bf16.msra.mxu0 0
  %1041 = vmatprep.mubr.bf16.mxu0 0
  %1042 = vmatmul.mubr.bf16.gmra.mrb[0].mxu0 %v152
  %v1043 = vpop.f32.mrb[0].mxu0
  %v1044 = vadd.f32 0.0, %v1043
  %v1045 = vpop.f32.mrb[0].mxu0
  %v1046 = vadd.f32 0.0, %v1045
  %v1047 = vpop.f32.mrb[0].mxu0
  %v1048 = vadd.f32 0.0, %v1047
  %v1049 = vpop.f32.mrb[0].mxu0
  %v1050 = vadd.f32 0.0, %v1049
  %1051 = vdwg.mxu0
  %1052 = vmatprep.subr.bf16.mxu0 %v551
  %1053 = vmatpush1.bf16.msra.mxu0 %v550
  %1054 = vmatprep.subr.bf16.mxu0 %v567
  %1055 = vmatpush1.bf16.msra.mxu0 %v566
  %1056 = vmatprep.subr.bf16.mxu0 %v583
  %1057 = vmatpush1.bf16.msra.mxu0 %v582
  %1058 = vmatprep.subr.bf16.mxu0 %v599
  %1059 = vmatpush1.bf16.msra.mxu0 %v598
  %1060 = vmatprep.subr.bf16.mxu0 %v615
  %1061 = vmatpush1.bf16.msra.mxu0 %v614
  %1062 = vmatprep.subr.bf16.mxu0 %v631
  %1063 = vmatpush1.bf16.msra.mxu0 %v630
  %1064 = vmatprep.subr.bf16.mxu0 %v647
  %1065 = vmatpush1.bf16.msra.mxu0 %v646
  %1066 = vmatprep.subr.bf16.mxu0 %v663
  %1067 = vmatpush1.bf16.msra.mxu0 %v662
  %1068 = vmatprep.subr.bf16.mxu0 0
  %1069 = vmatpush1.bf16.msra.mxu0 0
  %1070 = vmatprep.subr.bf16.mxu0 0
  %1071 = vmatpush1.bf16.msra.mxu0 0
  %1072 = vmatprep.subr.bf16.mxu0 0
  %1073 = vmatpush1.bf16.msra.mxu0 0
  %1074 = vmatprep.subr.bf16.mxu0 0
  %1075 = vmatpush1.bf16.msra.mxu0 0
  %1076 = vmatprep.subr.bf16.mxu0 0
  %1077 = vmatpush1.bf16.msra.mxu0 0
  %1078 = vmatprep.subr.bf16.mxu0 0
  %1079 = vmatpush1.bf16.msra.mxu0 0
  %1080 = vmatprep.subr.bf16.mxu0 0
  %1081 = vmatpush1.bf16.msra.mxu0 0
  %1082 = vmatprep.subr.bf16.mxu0 0
  %1083 = vmatpush1.bf16.msra.mxu0 0
  %1084 = vmatprep.mubr.bf16.mxu0 0
  %1085 = vmatmul.mubr.bf16.gmra.mrb[0].mxu0 %v152
  %v1086 = vpop.f32.mrb[0].mxu0
  %v1087 = vadd.f32 0.0, %v1086
  %v1088 = vpop.f32.mrb[0].mxu0
  %v1089 = vadd.f32 0.0, %v1088
  %v1090 = vpop.f32.mrb[0].mxu0
  %v1091 = vadd.f32 0.0, %v1090
  %v1092 = vpop.f32.mrb[0].mxu0
  %v1093 = vadd.f32 0.0, %v1092
  %1094 = vdwg.mxu0
  %1095 = vmatprep.subr.bf16.mxu0 %v553
  %1096 = vmatpush1.bf16.msra.mxu0 %v552
  %1097 = vmatprep.subr.bf16.mxu0 %v569
  %1098 = vmatpush1.bf16.msra.mxu0 %v568
  %1099 = vmatprep.subr.bf16.mxu0 %v585
  %1100 = vmatpush1.bf16.msra.mxu0 %v584
  %1101 = vmatprep.subr.bf16.mxu0 %v601
  %1102 = vmatpush1.bf16.msra.mxu0 %v600
  %1103 = vmatprep.subr.bf16.mxu0 %v617
  %1104 = vmatpush1.bf16.msra.mxu0 %v616
  %1105 = vmatprep.subr.bf16.mxu0 %v633
  %1106 = vmatpush1.bf16.msra.mxu0 %v632
  %1107 = vmatprep.subr.bf16.mxu0 %v649
  %1108 = vmatpush1.bf16.msra.mxu0 %v648
  %1109 = vmatprep.subr.bf16.mxu0 %v665
  %1110 = vmatpush1.bf16.msra.mxu0 %v664
  %1111 = vmatprep.subr.bf16.mxu0 0
  %1112 = vmatpush1.bf16.msra.mxu0 0
  %1113 = vmatprep.subr.bf16.mxu0 0
  %1114 = vmatpush1.bf16.msra.mxu0 0
  %1115 = vmatprep.subr.bf16.mxu0 0
  %1116 = vmatpush1.bf16.msra.mxu0 0
  %1117 = vmatprep.subr.bf16.mxu0 0
  %1118 = vmatpush1.bf16.msra.mxu0 0
  %1119 = vmatprep.subr.bf16.mxu0 0
  %1120 = vmatpush1.bf16.msra.mxu0 0
  %1121 = vmatprep.subr.bf16.mxu0 0
  %1122 = vmatpush1.bf16.msra.mxu0 0
  %1123 = vmatprep.subr.bf16.mxu0 0
  %1124 = vmatpush1.bf16.msra.mxu0 0
  %1125 = vmatprep.subr.bf16.mxu0 0
  %1126 = vmatpush1.bf16.msra.mxu0 0
  %1127 = vmatprep.mubr.bf16.mxu0 0
  %1128 = vmatmul.mubr.bf16.gmra.mrb[0].mxu0 %v152
  %v1129 = vpop.f32.mrb[0].mxu0
  %v1130 = vadd.f32 0.0, %v1129
  %v1131 = vpop.f32.mrb[0].mxu0
  %v1132 = vadd.f32 0.0, %v1131
  %v1133 = vpop.f32.mrb[0].mxu0
  %v1134 = vadd.f32 0.0, %v1133
  %v1135 = vpop.f32.mrb[0].mxu0
  %v1136 = vadd.f32 0.0, %v1135
  %1137 = vdwg.mxu0
  %v1138 = vadd.f32 %v829, %v831
  %v1139 = vadd.f32 %v1138, %v872
  %v1140 = vadd.f32 %v1139, %v874
  %v1141 = vadd.f32 %v1140, %v915
  %v1142 = vadd.f32 %v1141, %v917
  %v1143 = vadd.f32 %v1142, %v958
  %v1144 = vadd.f32 %v1143, %v960
  %v1145 = vadd.f32 %v1144, %v1001
  %v1146 = vadd.f32 %v1145, %v1003
  %v1147 = vadd.f32 %v1146, %v1044
  %v1148 = vadd.f32 %v1147, %v1046
  %v1149 = vadd.f32 %v1148, %v1087
  %v1150 = vadd.f32 %v1149, %v1089
  %v1151 = vadd.f32 %v1150, %v1130
  %v1152 = vadd.f32 %v1151, %v1132
  %1153 = vadd.xlane.f32.xlu0 %v1152
  %v1154 = vpop.xlane.xlu0 %1153
  %v1155 = vadd.f32 %v833, %v835
  %v1156 = vadd.f32 %v1155, %v876
  %v1157 = vadd.f32 %v1156, %v878
  %v1158 = vadd.f32 %v1157, %v919
  %v1159 = vadd.f32 %v1158, %v921
  %v1160 = vadd.f32 %v1159, %v962
  %v1161 = vadd.f32 %v1160, %v964
  %v1162 = vadd.f32 %v1161, %v1005
  %v1163 = vadd.f32 %v1162, %v1007
  %v1164 = vadd.f32 %v1163, %v1048
  %v1165 = vadd.f32 %v1164, %v1050
  %v1166 = vadd.f32 %v1165, %v1091
  %v1167 = vadd.f32 %v1166, %v1093
  %v1168 = vadd.f32 %v1167, %v1134
  %v1169 = vadd.f32 %v1168, %v1136
  %1170 = vadd.xlane.f32.xlu0 %v1169
  %v1171 = vpop.xlane.xlu0 %1170
  %v1172 = vmul.f32 %v1154, 0.00048828125
  %v1173 = vmul.f32 %v1171, 0.00048828125
  %v1174 = vmul.f32 %v829, %v829
  %v1175 = vmul.f32 %v831, %v831
  %v1176 = vmul.f32 %v872, %v872
  %v1177 = vmul.f32 %v874, %v874
  %v1178 = vmul.f32 %v915, %v915
  %v1179 = vmul.f32 %v917, %v917
  %v1180 = vmul.f32 %v958, %v958
  %v1181 = vmul.f32 %v960, %v960
  %v1182 = vmul.f32 %v1001, %v1001
  %v1183 = vmul.f32 %v1003, %v1003
  %v1184 = vmul.f32 %v1044, %v1044
  %v1185 = vmul.f32 %v1046, %v1046
  %v1186 = vmul.f32 %v1087, %v1087
  %v1187 = vmul.f32 %v1089, %v1089
  %v1188 = vmul.f32 %v1130, %v1130
  %v1189 = vmul.f32 %v1132, %v1132
  %v1190 = vmul.f32 %v833, %v833
  %v1191 = vmul.f32 %v835, %v835
  %v1192 = vmul.f32 %v876, %v876
  %v1193 = vmul.f32 %v878, %v878
  %v1194 = vmul.f32 %v919, %v919
  %v1195 = vmul.f32 %v921, %v921
  %v1196 = vmul.f32 %v962, %v962
  %v1197 = vmul.f32 %v964, %v964
  %v1198 = vmul.f32 %v1005, %v1005
  %v1199 = vmul.f32 %v1007, %v1007
  %v1200 = vmul.f32 %v1048, %v1048
  %v1201 = vmul.f32 %v1050, %v1050
  %v1202 = vmul.f32 %v1091, %v1091
  %v1203 = vmul.f32 %v1093, %v1093
  %v1204 = vmul.f32 %v1134, %v1134
  %v1205 = vmul.f32 %v1136, %v1136
  %v1206 = vadd.f32 %v1174, %v1175
  %v1207 = vadd.f32 %v1206, %v1176
  %v1208 = vadd.f32 %v1207, %v1177
  %v1209 = vadd.f32 %v1208, %v1178
  %v1210 = vadd.f32 %v1209, %v1179
  %v1211 = vadd.f32 %v1210, %v1180
  %v1212 = vadd.f32 %v1211, %v1181
  %v1213 = vadd.f32 %v1212, %v1182
  %v1214 = vadd.f32 %v1213, %v1183
  %v1215 = vadd.f32 %v1214, %v1184
  %v1216 = vadd.f32 %v1215, %v1185
  %v1217 = vadd.f32 %v1216, %v1186
  %v1218 = vadd.f32 %v1217, %v1187
  %v1219 = vadd.f32 %v1218, %v1188
  %v1220 = vadd.f32 %v1219, %v1189
  %1221 = vadd.xlane.f32.xlu0 %v1220
  %v1222 = vpop.xlane.xlu0 %1221
  %v1223 = vadd.f32 %v1190, %v1191
  %v1224 = vadd.f32 %v1223, %v1192
  %v1225 = vadd.f32 %v1224, %v1193
  %v1226 = vadd.f32 %v1225, %v1194
  %v1227 = vadd.f32 %v1226, %v1195
  %v1228 = vadd.f32 %v1227, %v1196
  %v1229 = vadd.f32 %v1228, %v1197
  %v1230 = vadd.f32 %v1229, %v1198
  %v1231 = vadd.f32 %v1230, %v1199
  %v1232 = vadd.f32 %v1231, %v1200
  %v1233 = vadd.f32 %v1232, %v1201
  %v1234 = vadd.f32 %v1233, %v1202
  %v1235 = vadd.f32 %v1234, %v1203
  %v1236 = vadd.f32 %v1235, %v1204
  %v1237 = vadd.f32 %v1236, %v1205
  %1238 = vadd.xlane.f32.xlu0 %v1237
  %v1239 = vpop.xlane.xlu0 %1238
  %v1240 = vmul.f32 %v1222, 0.00048828125
  %v1241 = vmul.f32 %v1239, 0.00048828125
  %v1242 = vmul.f32 %v1172, %v1172
  %v1243 = vmul.f32 %v1173, %v1173
  %v1244 = vsub.f32 %v1240, %v1242
  %v1245 = vsub.f32 %v1241, %v1243
  %v1246 = vld [vmem:[%s2] sm:$0xff]
  %v1247 = vld [vmem:[%s2 + $0x8] sm:$0xff]
  %v1248 = vadd.f32 %v1244, 1e-05
  %v1249 = vadd.f32 %v1245, 1e-05
  %v1250 = vrsqrt.pop %v1248
  %v1251 = vrsqrt.pop %v1249
  %v1252 = vmul.f32 %v1246, %v1250
  %v1253 = vmul.f32 %v1247, %v1251
  %v1254 = vsub.f32 %v829, %v1172
  %v1255 = vsub.f32 %v831, %v1172
  %v1256 = vsub.f32 %v872, %v1172
  %v1257 = vsub.f32 %v874, %v1172
  %v1258 = vsub.f32 %v915, %v1172
  %v1259 = vsub.f32 %v917, %v1172
  %v1260 = vsub.f32 %v958, %v1172
  %v1261 = vsub.f32 %v960, %v1172
  %v1262 = vsub.f32 %v1001, %v1172
  %v1263 = vsub.f32 %v1003, %v1172
  %v1264 = vsub.f32 %v1044, %v1172
  %v1265 = vsub.f32 %v1046, %v1172
  %v1266 = vsub.f32 %v1087, %v1172
  %v1267 = vsub.f32 %v1089, %v1172
  %v1268 = vsub.f32 %v1130, %v1172
  %v1269 = vsub.f32 %v1132, %v1172
  %v1270 = vsub.f32 %v833, %v1173
  %v1271 = vsub.f32 %v835, %v1173
  %v1272 = vsub.f32 %v876, %v1173
  %v1273 = vsub.f32 %v878, %v1173
  %v1274 = vsub.f32 %v919, %v1173
  %v1275 = vsub.f32 %v921, %v1173
  %v1276 = vsub.f32 %v962, %v1173
  %v1277 = vsub.f32 %v964, %v1173
  %v1278 = vsub.f32 %v1005, %v1173
  %v1279 = vsub.f32 %v1007, %v1173
  %v1280 = vsub.f32 %v1048, %v1173
  %v1281 = vsub.f32 %v1050, %v1173
  %v1282 = vsub.f32 %v1091, %v1173
  %v1283 = vsub.f32 %v1093, %v1173
  %v1284 = vsub.f32 %v1134, %v1173
  %v1285 = vsub.f32 %v1136, %v1173
  %1287 = vset.pattern.permute.xlu0 0
  %1288 = vperm.xlu0 %1287, %v1252
  %v1289 = vpop.permute.xlu0 %1288
  %1292 = vset.pattern.permute.xlu0 0
  %1293 = vperm.xlu0 %1292, %v1253
  %v1294 = vpop.permute.xlu0 %1293
  %v1296 = vmul.f32 %v1254, %v1289
  %v1297 = vmul.f32 %v1255, %v1289
  %v1298 = vmul.f32 %v1256, %v1289
  %v1299 = vmul.f32 %v1257, %v1289
  %v1300 = vmul.f32 %v1258, %v1289
  %v1301 = vmul.f32 %v1259, %v1289
  %v1302 = vmul.f32 %v1260, %v1289
  %v1303 = vmul.f32 %v1261, %v1289
  %v1304 = vmul.f32 %v1262, %v1289
  %v1305 = vmul.f32 %v1263, %v1289
  %v1306 = vmul.f32 %v1264, %v1289
  %v1307 = vmul.f32 %v1265, %v1289
  %v1308 = vmul.f32 %v1266, %v1289
  %v1309 = vmul.f32 %v1267, %v1289
  %v1310 = vmul.f32 %v1268, %v1289
  %v1311 = vmul.f32 %v1269, %v1289
  %v1312 = vmul.f32 %v1270, %v1294
  %v1313 = vmul.f32 %v1271, %v1294
  %v1314 = vmul.f32 %v1272, %v1294
  %v1315 = vmul.f32 %v1273, %v1294
  %v1316 = vmul.f32 %v1274, %v1294
  %v1317 = vmul.f32 %v1275, %v1294
  %v1318 = vmul.f32 %v1276, %v1294
  %v1319 = vmul.f32 %v1277, %v1294
  %v1320 = vmul.f32 %v1278, %v1294
  %v1321 = vmul.f32 %v1279, %v1294
  %v1322 = vmul.f32 %v1280, %v1294
  %v1323 = vmul.f32 %v1281, %v1294
  %v1324 = vmul.f32 %v1282, %v1294
  %v1325 = vmul.f32 %v1283, %v1294
  %v1326 = vmul.f32 %v1284, %v1294
  %v1327 = vmul.f32 %v1285, %v1294
  %v1328 = vld [vmem:[%s3] sm:$0xff]
  %v1329 = vld [vmem:[%s3 + $0x8] sm:$0xff]
  %1331 = vset.pattern.permute.xlu0 0
  %1332 = vperm.xlu0 %1331, %v1328
  %v1333 = vpop.permute.xlu0 %1332
  %1336 = vset.pattern.permute.xlu0 0
  %1337 = vperm.xlu0 %1336, %v1329
  %v1338 = vpop.permute.xlu0 %1337
  %v1340 = vadd.f32 %v1296, %v1333
  %v1341 = vadd.f32 %v1297, %v1333
  %v1342 = vadd.f32 %v1298, %v1333
  %v1343 = vadd.f32 %v1299, %v1333
  %v1344 = vadd.f32 %v1300, %v1333
  %v1345 = vadd.f32 %v1301, %v1333
  %v1346 = vadd.f32 %v1302, %v1333
  %v1347 = vadd.f32 %v1303, %v1333
  %v1348 = vadd.f32 %v1304, %v1333
  %v1349 = vadd.f32 %v1305, %v1333
  %v1350 = vadd.f32 %v1306, %v1333
  %v1351 = vadd.f32 %v1307, %v1333
  %v1352 = vadd.f32 %v1308, %v1333
  %v1353 = vadd.f32 %v1309, %v1333
  %v1354 = vadd.f32 %v1310, %v1333
  %v1355 = vadd.f32 %v1311, %v1333
  %v1356 = vadd.f32 %v1312, %v1338
  %v1357 = vadd.f32 %v1313, %v1338
  %v1358 = vadd.f32 %v1314, %v1338
  %v1359 = vadd.f32 %v1315, %v1338
  %v1360 = vadd.f32 %v1316, %v1338
  %v1361 = vadd.f32 %v1317, %v1338
  %v1362 = vadd.f32 %v1318, %v1338
  %v1363 = vadd.f32 %v1319, %v1338
  %v1364 = vadd.f32 %v1320, %v1338
  %v1365 = vadd.f32 %v1321, %v1338
  %v1366 = vadd.f32 %v1322, %v1338
  %v1367 = vadd.f32 %v1323, %v1338
  %v1368 = vadd.f32 %v1324, %v1338
  %v1369 = vadd.f32 %v1325, %v1338
  %v1370 = vadd.f32 %v1326, %v1338
  %v1371 = vadd.f32 %v1327, %v1338
  %vm1372 = vcmp.gt.f32.partialorder %v1340, 0.0
  %vm1373 = vcmp.gt.f32.partialorder %v1341, 0.0
  %vm1374 = vcmp.gt.f32.partialorder %v1342, 0.0
  %vm1375 = vcmp.gt.f32.partialorder %v1343, 0.0
  %vm1376 = vcmp.gt.f32.partialorder %v1344, 0.0
  %vm1377 = vcmp.gt.f32.partialorder %v1345, 0.0
  %vm1378 = vcmp.gt.f32.partialorder %v1346, 0.0
  %vm1379 = vcmp.gt.f32.partialorder %v1347, 0.0
  %vm1380 = vcmp.gt.f32.partialorder %v1348, 0.0
  %vm1381 = vcmp.gt.f32.partialorder %v1349, 0.0
  %vm1382 = vcmp.gt.f32.partialorder %v1350, 0.0
  %vm1383 = vcmp.gt.f32.partialorder %v1351, 0.0
  %vm1384 = vcmp.gt.f32.partialorder %v1352, 0.0
  %vm1385 = vcmp.gt.f32.partialorder %v1353, 0.0
  %vm1386 = vcmp.gt.f32.partialorder %v1354, 0.0
  %vm1387 = vcmp.gt.f32.partialorder %v1355, 0.0
  %vm1388 = vcmp.gt.f32.partialorder %v1356, 0.0
  %vm1389 = vcmp.gt.f32.partialorder %v1357, 0.0
  %vm1390 = vcmp.gt.f32.partialorder %v1358, 0.0
  %vm1391 = vcmp.gt.f32.partialorder %v1359, 0.0
  %vm1392 = vcmp.gt.f32.partialorder %v1360, 0.0
  %vm1393 = vcmp.gt.f32.partialorder %v1361, 0.0
  %vm1394 = vcmp.gt.f32.partialorder %v1362, 0.0
  %vm1395 = vcmp.gt.f32.partialorder %v1363, 0.0
  %vm1396 = vcmp.gt.f32.partialorder %v1364, 0.0
  %vm1397 = vcmp.gt.f32.partialorder %v1365, 0.0
  %vm1398 = vcmp.gt.f32.partialorder %v1366, 0.0
  %vm1399 = vcmp.gt.f32.partialorder %v1367, 0.0
  %vm1400 = vcmp.gt.f32.partialorder %v1368, 0.0
  %vm1401 = vcmp.gt.f32.partialorder %v1369, 0.0
  %vm1402 = vcmp.gt.f32.partialorder %v1370, 0.0
  %vm1403 = vcmp.gt.f32.partialorder %v1371, 0.0
  %v1404 = vmul.f32 %v1340, 0.2
  %v1405 = vmul.f32 %v1341, 0.2
  %v1406 = vmul.f32 %v1342, 0.2
  %v1407 = vmul.f32 %v1343, 0.2
  %v1408 = vmul.f32 %v1344, 0.2
  %v1409 = vmul.f32 %v1345, 0.2
  %v1410 = vmul.f32 %v1346, 0.2
  %v1411 = vmul.f32 %v1347, 0.2
  %v1412 = vmul.f32 %v1348, 0.2
  %v1413 = vmul.f32 %v1349, 0.2
  %v1414 = vmul.f32 %v1350, 0.2
  %v1415 = vmul.f32 %v1351, 0.2
  %v1416 = vmul.f32 %v1352, 0.2
  %v1417 = vmul.f32 %v1353, 0.2
  %v1418 = vmul.f32 %v1354, 0.2
  %v1419 = vmul.f32 %v1355, 0.2
  %v1420 = vmul.f32 %v1356, 0.2
  %v1421 = vmul.f32 %v1357, 0.2
  %v1422 = vmul.f32 %v1358, 0.2
  %v1423 = vmul.f32 %v1359, 0.2
  %v1424 = vmul.f32 %v1360, 0.2
  %v1425 = vmul.f32 %v1361, 0.2
  %v1426 = vmul.f32 %v1362, 0.2
  %v1427 = vmul.f32 %v1363, 0.2
  %v1428 = vmul.f32 %v1364, 0.2
  %v1429 = vmul.f32 %v1365, 0.2
  %v1430 = vmul.f32 %v1366, 0.2
  %v1431 = vmul.f32 %v1367, 0.2
  %v1432 = vmul.f32 %v1368, 0.2
  %v1433 = vmul.f32 %v1369, 0.2
  %v1434 = vmul.f32 %v1370, 0.2
  %v1435 = vmul.f32 %v1371, 0.2
  %v1436 = vsel %vm1372, %v1340, %v1404
  %v1437 = vsel %vm1373, %v1341, %v1405
  %v1438 = vsel %vm1374, %v1342, %v1406
  %v1439 = vsel %vm1375, %v1343, %v1407
  %v1440 = vsel %vm1376, %v1344, %v1408
  %v1441 = vsel %vm1377, %v1345, %v1409
  %v1442 = vsel %vm1378, %v1346, %v1410
  %v1443 = vsel %vm1379, %v1347, %v1411
  %v1444 = vsel %vm1380, %v1348, %v1412
  %v1445 = vsel %vm1381, %v1349, %v1413
  %v1446 = vsel %vm1382, %v1350, %v1414
  %v1447 = vsel %vm1383, %v1351, %v1415
  %v1448 = vsel %vm1384, %v1352, %v1416
  %v1449 = vsel %vm1385, %v1353, %v1417
  %v1450 = vsel %vm1386, %v1354, %v1418
  %v1451 = vsel %vm1387, %v1355, %v1419
  %v1452 = vsel %vm1388, %v1356, %v1420
  %v1453 = vsel %vm1389, %v1357, %v1421
  %v1454 = vsel %vm1390, %v1358, %v1422
  %v1455 = vsel %vm1391, %v1359, %v1423
  %v1456 = vsel %vm1392, %v1360, %v1424
  %v1457 = vsel %vm1393, %v1361, %v1425
  %v1458 = vsel %vm1394, %v1362, %v1426
  %v1459 = vsel %vm1395, %v1363, %v1427
  %v1460 = vsel %vm1396, %v1364, %v1428
  %v1461 = vsel %vm1397, %v1365, %v1429
  %v1462 = vsel %vm1398, %v1366, %v1430
  %v1463 = vsel %vm1399, %v1367, %v1431
  %v1464 = vsel %vm1400, %v1368, %v1432
  %v1465 = vsel %vm1401, %v1369, %v1433
  %v1466 = vsel %vm1402, %v1370, %v1434
  %v1467 = vsel %vm1403, %v1371, %v1435
  %1468 = vst [vmem:[%s4] sm:$0xff] %v1436
  %1469 = vst [vmem:[%s4 + $0x8] sm:$0xff] %v1437
  %1470 = vst [vmem:[%s4 + $0x10] sm:$0xff] %v1438
  %1471 = vst [vmem:[%s4 + $0x18] sm:$0xff] %v1439
  %1472 = vst [vmem:[%s4 + $0x20] sm:$0xff] %v1440
  %1473 = vst [vmem:[%s4 + $0x28] sm:$0xff] %v1441
  %1474 = vst [vmem:[%s4 + $0x30] sm:$0xff] %v1442
  %1475 = vst [vmem:[%s4 + $0x38] sm:$0xff] %v1443
  %1476 = vst [vmem:[%s4 + $0x40] sm:$0xff] %v1444
  %1477 = vst [vmem:[%s4 + $0x48] sm:$0xff] %v1445
  %1478 = vst [vmem:[%s4 + $0x50] sm:$0xff] %v1446
  %1479 = vst [vmem:[%s4 + $0x58] sm:$0xff] %v1447
  %1480 = vst [vmem:[%s4 + $0x60] sm:$0xff] %v1448
  %1481 = vst [vmem:[%s4 + $0x68] sm:$0xff] %v1449
  %1482 = vst [vmem:[%s4 + $0x70] sm:$0xff] %v1450
  %1483 = vst [vmem:[%s4 + $0x78] sm:$0xff] %v1451
  %1484 = vst [vmem:[%s4 + $0x80] sm:$0xff] %v1452
  %1485 = vst [vmem:[%s4 + $0x88] sm:$0xff] %v1453
  %1486 = vst [vmem:[%s4 + $0x90] sm:$0xff] %v1454
  %1487 = vst [vmem:[%s4 + $0x98] sm:$0xff] %v1455
  %1488 = vst [vmem:[%s4 + $0xa0] sm:$0xff] %v1456
  %1489 = vst [vmem:[%s4 + $0xa8] sm:$0xff] %v1457
  %1490 = vst [vmem:[%s4 + $0xb0] sm:$0xff] %v1458
  %1491 = vst [vmem:[%s4 + $0xb8] sm:$0xff] %v1459
  %1492 = vst [vmem:[%s4 + $0xc0] sm:$0xff] %v1460
  %1493 = vst [vmem:[%s4 + $0xc8] sm:$0xff] %v1461
  %1494 = vst [vmem:[%s4 + $0xd0] sm:$0xff] %v1462
  %1495 = vst [vmem:[%s4 + $0xd8] sm:$0xff] %v1463
  %1496 = vst [vmem:[%s4 + $0xe0] sm:$0xff] %v1464
  %1497 = vst [vmem:[%s4 + $0xe8] sm:$0xff] %v1465
  %1498 = vst [vmem:[%s4 + $0xf0] sm:$0xff] %v1466
  %1499 = vst [vmem:[%s4 + $0xf8] sm:$0xff] %v1467
  // Predicated region
  $region18: #{discriminator_stage2.6} parent=0 // pred_check
    _
  $region19: #{discriminator_stage2.6} parent=0 // pred_check_branch
    %1501 = sbr.rel (0) target = $region21
  $region20: #{discriminator_stage2.6} parent=0 // pred_region
    _
  $region21: #{discriminator_stage2.6} parent=0 // pred_fallthru
    _
  // Predicated region
  $region22: #{discriminator_stage2.6} parent=0 // pred_check
    _
  $region23: #{discriminator_stage2.6} parent=0 // pred_check_branch
    %1503 = sbr.rel (0) target = $region25
  $region24: #{discriminator_stage2.6} parent=0 // pred_region
    _
  $region25: #{discriminator_stage2.6} parent=0 // pred_fallthru
    _

// kernel: discriminator_stage2.7
$region0: #{discriminator_stage2.7}
  #allocation0 [shape = 'u32[]', space=smem, size = 0x4, offset = 0x4, fixed_abs, tag = 'smem constant byte address 0x4 - core index']
  #allocation1 [shape = 'u32[144,128]{1,0:T(1,128)}', space=vmem, size = 0x12000, scoped, tag = 'internal scratch']
  %s0 = inlined_call_operand.vmem [shape: bf16[32,256], index: 0, kind: input, shape index: {}]
  %s1 = inlined_call_operand.vmem [shape: bf16[256,512], index: 1, kind: input, shape index: {}]
  %s2 = inlined_call_operand.vmem [shape: f32[32,1], index: 2, kind: input, shape index: {}]
  %s3 = inlined_call_operand.vmem [shape: f32[32,1], index: 3, kind: input, shape index: {}]
  %s4 = inlined_call_operand.vmem [shape: f32[32,512], index: 4, kind: output, shape index: {}]
  %s5 = sld [smem:[#allocation0]]
  $region26: #{discriminator_stage2.7} parent=0
    _
  %s7 = ssub.s32 1, %s5
  %s8 = scalar_select 0, %s7, %s5
  // Predicated region
  $region2: #{discriminator_stage2.7} parent=0 // pred_check
    _
  $region3: #{discriminator_stage2.7} parent=0 // pred_check_branch
    %10 = sbr.rel (0) target = $region5
  $region4: #{discriminator_stage2.7} parent=0 // pred_region
    _
  $region5: #{discriminator_stage2.7} parent=0 // pred_fallthru
    _
  // Predicated region
  $region6: #{discriminator_stage2.7} parent=0 // pred_check
    _
  $region7: #{discriminator_stage2.7} parent=0 // pred_check_branch
    %12 = sbr.rel (0) target = $region9
  $region8: #{discriminator_stage2.7} parent=0 // pred_region
    _
  $region9: #{discriminator_stage2.7} parent=0 // pred_fallthru
    _
  // Predicated region
  $region10: #{discriminator_stage2.7} parent=0 // pred_check
    _
  $region11: #{discriminator_stage2.7} parent=0 // pred_check_branch
    %14 = sbr.rel (0) target = $region13
  $region12: #{discriminator_stage2.7} parent=0 // pred_region
    _
  $region13: #{discriminator_stage2.7} parent=0 // pred_fallthru
    _
  // Predicated region
  $region14: #{discriminator_stage2.7} parent=0 // pred_check
    _
  $region15: #{discriminator_stage2.7} parent=0 // pred_check_branch
    %16 = sbr.rel (0) target = $region17
  $region16: #{discriminator_stage2.7} parent=0 // pred_region
    _
  $region17: #{discriminator_stage2.7} parent=0 // pred_fallthru
    _
  %v17 = vld [vmem:[%s0] sm:$0xff]
  %v18 = vld [vmem:[%s0 + $0x8] sm:$0xff]
  %v19 = vld [vmem:[%s0 + $0x10] sm:$0xff]
  %v20 = vld [vmem:[%s0 + $0x18] sm:$0xff]
  %v21 = vld [vmem:[%s1] sm:$0xff]
  %v22 = vld [vmem:[%s1 + $0x8] sm:$0xff]
  %v23 = vld [vmem:[%s1 + $0x10] sm:$0xff]
  %v24 = vld [vmem:[%s1 + $0x18] sm:$0xff]
  %v25 = vld [vmem:[%s1 + $0x20] sm:$0xff]
  %v26 = vld [vmem:[%s1 + $0x28] sm:$0xff]
  %v27 = vld [vmem:[%s1 + $0x30] sm:$0xff]
  %v28 = vld [vmem:[%s1 + $0x38] sm:$0xff]
  %v29 = vld [vmem:[%s1 + $0x40] sm:$0xff]
  %v30 = vld [vmem:[%s1 + $0x48] sm:$0xff]
  %v31 = vld [vmem:[%s1 + $0x50] sm:$0xff]
  %v32 = vld [vmem:[%s1 + $0x58] sm:$0xff]
  %v33 = vld [vmem:[%s1 + $0x60] sm:$0xff]
  %v34 = vld [vmem:[%s1 + $0x68] sm:$0xff]
  %v35 = vld [vmem:[%s1 + $0x70] sm:$0xff]
  %v36 = vld [vmem:[%s1 + $0x78] sm:$0xff]
  %v37 = vld [vmem:[%s1 + $0x80] sm:$0xff]
  %v38 = vld [vmem:[%s1 + $0x88] sm:$0xff]
  %v39 = vld [vmem:[%s1 + $0x90] sm:$0xff]
  %v40 = vld [vmem:[%s1 + $0x98] sm:$0xff]
  %v41 = vld [vmem:[%s1 + $0xa0] sm:$0xff]
  %v42 = vld [vmem:[%s1 + $0xa8] sm:$0xff]
  %v43 = vld [vmem:[%s1 + $0xb0] sm:$0xff]
  %v44 = vld [vmem:[%s1 + $0xb8] sm:$0xff]
  %v45 = vld [vmem:[%s1 + $0xc0] sm:$0xff]
  %v46 = vld [vmem:[%s1 + $0xc8] sm:$0xff]
  %v47 = vld [vmem:[%s1 + $0xd0] sm:$0xff]
  %v48 = vld [vmem:[%s1 + $0xd8] sm:$0xff]
  %v49 = vld [vmem:[%s1 + $0xe0] sm:$0xff]
  %v50 = vld [vmem:[%s1 + $0xe8] sm:$0xff]
  %v51 = vld [vmem:[%s1 + $0xf0] sm:$0xff]
  %v52 = vld [vmem:[%s1 + $0xf8] sm:$0xff]
  %v53 = vld [vmem:[%s1 + $0x100] sm:$0xff]
  %v54 = vld [vmem:[%s1 + $0x108] sm:$0xff]
  %v55 = vld [vmem:[%s1 + $0x110] sm:$0xff]
  %v56 = vld [vmem:[%s1 + $0x118] sm:$0xff]
  %v57 = vld [vmem:[%s1 + $0x120] sm:$0xff]
  %v58 = vld [vmem:[%s1 + $0x128] sm:$0xff]
  %v59 = vld [vmem:[%s1 + $0x130] sm:$0xff]
  %v60 = vld [vmem:[%s1 + $0x138] sm:$0xff]
  %v61 = vld [vmem:[%s1 + $0x140] sm:$0xff]
  %v62 = vld [vmem:[%s1 + $0x148] sm:$0xff]
  %v63 = vld [vmem:[%s1 + $0x150] sm:$0xff]
  %v64 = vld [vmem:[%s1 + $0x158] sm:$0xff]
  %v65 = vld [vmem:[%s1 + $0x160] sm:$0xff]
  %v66 = vld [vmem:[%s1 + $0x168] sm:$0xff]
  %v67 = vld [vmem:[%s1 + $0x170] sm:$0xff]
  %v68 = vld [vmem:[%s1 + $0x178] sm:$0xff]
  %v69 = vld [vmem:[%s1 + $0x180] sm:$0xff]
  %v70 = vld [vmem:[%s1 + $0x188] sm:$0xff]
  %v71 = vld [vmem:[%s1 + $0x190] sm:$0xff]
  %v72 = vld [vmem:[%s1 + $0x198] sm:$0xff]
  %v73 = vld [vmem:[%s1 + $0x1a0] sm:$0xff]
  %v74 = vld [vmem:[%s1 + $0x1a8] sm:$0xff]
  %v75 = vld [vmem:[%s1 + $0x1b0] sm:$0xff]
  %v76 = vld [vmem:[%s1 + $0x1b8] sm:$0xff]
  %v77 = vld [vmem:[%s1 + $0x1c0] sm:$0xff]
  %v78 = vld [vmem:[%s1 + $0x1c8] sm:$0xff]
  %v79 = vld [vmem:[%s1 + $0x1d0] sm:$0xff]
  %v80 = vld [vmem:[%s1 + $0x1d8] sm:$0xff]
  %v81 = vld [vmem:[%s1 + $0x1e0] sm:$0xff]
  %v82 = vld [vmem:[%s1 + $0x1e8] sm:$0xff]
  %v83 = vld [vmem:[%s1 + $0x1f0] sm:$0xff]
  %v84 = vld [vmem:[%s1 + $0x1f8] sm:$0xff]
  %v89 = vunpack.c.l.b16 %v17
  %v90 = vunpack.c.h.b16 %v17
  %v91 = vunpack.c.l.b16 %v18
  %v92 = vunpack.c.h.b16 %v18
  %v93 = vunpack.c.l.b16 %v19
  %v94 = vunpack.c.h.b16 %v19
  %v95 = vunpack.c.l.b16 %v20
  %v96 = vunpack.c.h.b16 %v20
  %v97 = vpack.c.b16 %v91, %v89
  %v98 = vpack.c.b16 %v92, %v90
  %v99 = vpack.c.b16 %v95, %v93
  %v100 = vpack.c.b16 %v96, %v94
  %v169 = vunpack.c.l.b16 %v21
  %v170 = vunpack.c.h.b16 %v21
  %v171 = vunpack.c.l.b16 %v22
  %v172 = vunpack.c.h.b16 %v22
  %v173 = vunpack.c.l.b16 %v23
  %v174 = vunpack.c.h.b16 %v23
  %v175 = vunpack.c.l.b16 %v24
  %v176 = vunpack.c.h.b16 %v24
  %v177 = vunpack.c.l.b16 %v25
  %v178 = vunpack.c.h.b16 %v25
  %v179 = vunpack.c.l.b16 %v26
  %v180 = vunpack.c.h.b16 %v26
  %v181 = vunpack.c.l.b16 %v27
  %v182 = vunpack.c.h.b16 %v27
  %v183 = vunpack.c.l.b16 %v28
  %v184 = vunpack.c.h.b16 %v28
  %v185 = vunpack.c.l.b16 %v29
  %v186 = vunpack.c.h.b16 %v29
  %v187 = vunpack.c.l.b16 %v30
  %v188 = vunpack.c.h.b16 %v30
  %v189 = vunpack.c.l.b16 %v31
  %v190 = vunpack.c.h.b16 %v31
  %v191 = vunpack.c.l.b16 %v32
  %v192 = vunpack.c.h.b16 %v32
  %v193 = vunpack.c.l.b16 %v33
  %v194 = vunpack.c.h.b16 %v33
  %v195 = vunpack.c.l.b16 %v34
  %v196 = vunpack.c.h.b16 %v34
  %v197 = vunpack.c.l.b16 %v35
  %v198 = vunpack.c.h.b16 %v35
  %v199 = vunpack.c.l.b16 %v36
  %v200 = vunpack.c.h.b16 %v36
  %v201 = vunpack.c.l.b16 %v37
  %v202 = vunpack.c.h.b16 %v37
  %v203 = vunpack.c.l.b16 %v38
  %v204 = vunpack.c.h.b16 %v38
  %v205 = vunpack.c.l.b16 %v39
  %v206 = vunpack.c.h.b16 %v39
  %v207 = vunpack.c.l.b16 %v40
  %v208 = vunpack.c.h.b16 %v40
  %v209 = vunpack.c.l.b16 %v41
  %v210 = vunpack.c.h.b16 %v41
  %v211 = vunpack.c.l.b16 %v42
  %v212 = vunpack.c.h.b16 %v42
  %v213 = vunpack.c.l.b16 %v43
  %v214 = vunpack.c.h.b16 %v43
  %v215 = vunpack.c.l.b16 %v44
  %v216 = vunpack.c.h.b16 %v44
  %v217 = vunpack.c.l.b16 %v45
  %v218 = vunpack.c.h.b16 %v45
  %v219 = vunpack.c.l.b16 %v46
  %v220 = vunpack.c.h.b16 %v46
  %v221 = vunpack.c.l.b16 %v47
  %v222 = vunpack.c.h.b16 %v47
  %v223 = vunpack.c.l.b16 %v48
  %v224 = vunpack.c.h.b16 %v48
  %v225 = vunpack.c.l.b16 %v49
  %v226 = vunpack.c.h.b16 %v49
  %v227 = vunpack.c.l.b16 %v50
  %v228 = vunpack.c.h.b16 %v50
  %v229 = vunpack.c.l.b16 %v51
  %v230 = vunpack.c.h.b16 %v51
  %v231 = vunpack.c.l.b16 %v52
  %v232 = vunpack.c.h.b16 %v52
  %v233 = vunpack.c.l.b16 %v53
  %v234 = vunpack.c.h.b16 %v53
  %v235 = vunpack.c.l.b16 %v54
  %v236 = vunpack.c.h.b16 %v54
  %v237 = vunpack.c.l.b16 %v55
  %v238 = vunpack.c.h.b16 %v55
  %v239 = vunpack.c.l.b16 %v56
  %v240 = vunpack.c.h.b16 %v56
  %v241 = vunpack.c.l.b16 %v57
  %v242 = vunpack.c.h.b16 %v57
  %v243 = vunpack.c.l.b16 %v58
  %v244 = vunpack.c.h.b16 %v58
  %v245 = vunpack.c.l.b16 %v59
  %v246 = vunpack.c.h.b16 %v59
  %v247 = vunpack.c.l.b16 %v60
  %v248 = vunpack.c.h.b16 %v60
  %v249 = vunpack.c.l.b16 %v61
  %v250 = vunpack.c.h.b16 %v61
  %v251 = vunpack.c.l.b16 %v62
  %v252 = vunpack.c.h.b16 %v62
  %v253 = vunpack.c.l.b16 %v63
  %v254 = vunpack.c.h.b16 %v63
  %v255 = vunpack.c.l.b16 %v64
  %v256 = vunpack.c.h.b16 %v64
  %v257 = vunpack.c.l.b16 %v65
  %v258 = vunpack.c.h.b16 %v65
  %v259 = vunpack.c.l.b16 %v66
  %v260 = vunpack.c.h.b16 %v66
  %v261 = vunpack.c.l.b16 %v67
  %v262 = vunpack.c.h.b16 %v67
  %v263 = vunpack.c.l.b16 %v68
  %v264 = vunpack.c.h.b16 %v68
  %v265 = vunpack.c.l.b16 %v69
  %v266 = vunpack.c.h.b16 %v69
  %v267 = vunpack.c.l.b16 %v70
  %v268 = vunpack.c.h.b16 %v70
  %v269 = vunpack.c.l.b16 %v71
  %v270 = vunpack.c.h.b16 %v71
  %v271 = vunpack.c.l.b16 %v72
  %v272 = vunpack.c.h.b16 %v72
  %v273 = vunpack.c.l.b16 %v73
  %v274 = vunpack.c.h.b16 %v73
  %v275 = vunpack.c.l.b16 %v74
  %v276 = vunpack.c.h.b16 %v74
  %v277 = vunpack.c.l.b16 %v75
  %v278 = vunpack.c.h.b16 %v75
  %v279 = vunpack.c.l.b16 %v76
  %v280 = vunpack.c.h.b16 %v76
  %v281 = vunpack.c.l.b16 %v77
  %v282 = vunpack.c.h.b16 %v77
  %v283 = vunpack.c.l.b16 %v78
  %v284 = vunpack.c.h.b16 %v78
  %v285 = vunpack.c.l.b16 %v79
  %v286 = vunpack.c.h.b16 %v79
  %v287 = vunpack.c.l.b16 %v80
  %v288 = vunpack.c.h.b16 %v80
  %v289 = vunpack.c.l.b16 %v81
  %v290 = vunpack.c.h.b16 %v81
  %v291 = vunpack.c.l.b16 %v82
  %v292 = vunpack.c.h.b16 %v82
  %v293 = vunpack.c.l.b16 %v83
  %v294 = vunpack.c.h.b16 %v83
  %v295 = vunpack.c.l.b16 %v84
  %v296 = vunpack.c.h.b16 %v84
  %v297 = vpack.c.b16 %v173, %v169
  %v298 = vpack.c.b16 %v174, %v170
  %v299 = vpack.c.b16 %v175, %v171
  %v300 = vpack.c.b16 %v176, %v172
  %v301 = vpack.c.b16 %v181, %v177
  %v302 = vpack.c.b16 %v182, %v178
  %v303 = vpack.c.b16 %v183, %v179
  %v304 = vpack.c.b16 %v184, %v180
  %v305 = vpack.c.b16 %v189, %v185
  %v306 = vpack.c.b16 %v190, %v186
  %v307 = vpack.c.b16 %v191, %v187
  %v308 = vpack.c.b16 %v192, %v188
  %v309 = vpack.c.b16 %v197, %v193
  %v310 = vpack.c.b16 %v198, %v194
  %v311 = vpack.c.b16 %v199, %v195
  %v312 = vpack.c.b16 %v200, %v196
  %v313 = vpack.c.b16 %v205, %v201
  %v314 = vpack.c.b16 %v206, %v202
  %v315 = vpack.c.b16 %v207, %v203
  %v316 = vpack.c.b16 %v208, %v204
  %v317 = vpack.c.b16 %v213, %v209
  %v318 = vpack.c.b16 %v214, %v210
  %v319 = vpack.c.b16 %v215, %v211
  %v320 = vpack.c.b16 %v216, %v212
  %v321 = vpack.c.b16 %v221, %v217
  %v322 = vpack.c.b16 %v222, %v218
  %v323 = vpack.c.b16 %v223, %v219
  %v324 = vpack.c.b16 %v224, %v220
  %v325 = vpack.c.b16 %v229, %v225
  %v326 = vpack.c.b16 %v230, %v226
  %v327 = vpack.c.b16 %v231, %v227
  %v328 = vpack.c.b16 %v232, %v228
  %v329 = vpack.c.b16 %v237, %v233
  %v330 = vpack.c.b16 %v238, %v234
  %v331 = vpack.c.b16 %v239, %v235
  %v332 = vpack.c.b16 %v240, %v236
  %v333 = vpack.c.b16 %v245, %v241
  %v334 = vpack.c.b16 %v246, %v242
  %v335 = vpack.c.b16 %v247, %v243
  %v336 = vpack.c.b16 %v248, %v244
  %v337 = vpack.c.b16 %v253, %v249
  %v338 = vpack.c.b16 %v254, %v250
  %v339 = vpack.c.b16 %v255, %v251
  %v340 = vpack.c.b16 %v256, %v252
  %v341 = vpack.c.b16 %v261, %v257
  %v342 = vpack.c.b16 %v262, %v258
  %v343 = vpack.c.b16 %v263, %v259
  %v344 = vpack.c.b16 %v264, %v260
  %v345 = vpack.c.b16 %v269, %v265
  %v346 = vpack.c.b16 %v270, %v266
  %v347 = vpack.c.b16 %v271, %v267
  %v348 = vpack.c.b16 %v272, %v268
  %v349 = vpack.c.b16 %v277, %v273
  %v350 = vpack.c.b16 %v278, %v274
  %v351 = vpack.c.b16 %v279, %v275
  %v352 = vpack.c.b16 %v280, %v276
  %v353 = vpack.c.b16 %v285, %v281
  %v354 = vpack.c.b16 %v286, %v282
  %v355 = vpack.c.b16 %v287, %v283
  %v356 = vpack.c.b16 %v288, %v284
  %v357 = vpack.c.b16 %v293, %v289
  %v358 = vpack.c.b16 %v294, %v290
  %v359 = vpack.c.b16 %v295, %v291
  %v360 = vpack.c.b16 %v296, %v292
  %425 = vmatprep.subr.bf16.mxu0 %v298
  %426 = vmatpush1.bf16.msra.mxu0 %v297
  %427 = vmatprep.subr.bf16.mxu0 %v302
  %428 = vmatpush1.bf16.msra.mxu0 %v301
  %429 = vmatprep.subr.bf16.mxu0 %v306
  %430 = vmatpush1.bf16.msra.mxu0 %v305
  %431 = vmatprep.subr.bf16.mxu0 %v310
  %432 = vmatpush1.bf16.msra.mxu0 %v309
  %433 = vmatprep.subr.bf16.mxu0 %v314
  %434 = vmatpush1.bf16.msra.mxu0 %v313
  %435 = vmatprep.subr.bf16.mxu0 %v318
  %436 = vmatpush1.bf16.msra.mxu0 %v317
  %437 = vmatprep.subr.bf16.mxu0 %v322
  %438 = vmatpush1.bf16.msra.mxu0 %v321
  %439 = vmatprep.subr.bf16.mxu0 %v326
  %440 = vmatpush1.bf16.msra.mxu0 %v325
  %441 = vmatprep.subr.bf16.mxu0 %v330
  %442 = vmatpush1.bf16.msra.mxu0 %v329
  %443 = vmatprep.subr.bf16.mxu0 %v334
  %444 = vmatpush1.bf16.msra.mxu0 %v333
  %445 = vmatprep.subr.bf16.mxu0 %v338
  %446 = vmatpush1.bf16.msra.mxu0 %v337
  %447 = vmatprep.subr.bf16.mxu0 %v342
  %448 = vmatpush1.bf16.msra.mxu0 %v341
  %449 = vmatprep.subr.bf16.mxu0 %v346
  %450 = vmatpush1.bf16.msra.mxu0 %v345
  %451 = vmatprep.subr.bf16.mxu0 %v350
  %452 = vmatpush1.bf16.msra.mxu0 %v349
  %453 = vmatprep.subr.bf16.mxu0 %v354
  %454 = vmatpush1.bf16.msra.mxu0 %v353
  %455 = vmatprep.subr.bf16.mxu0 %v358
  %456 = vmatpush1.bf16.msra.mxu0 %v357
  %457 = vmatprep.mubr.bf16.mxu0 %v98
  %458 = vmatmul.mubr.bf16.gmra.mrb[0].mxu0 %v97
  %v459 = vpop.f32.mrb[0].mxu0
  %v460 = vadd.f32 0.0, %v459
  %v461 = vpop.f32.mrb[0].mxu0
  %v462 = vadd.f32 0.0, %v461
  %v463 = vpop.f32.mrb[0].mxu0
  %v464 = vadd.f32 0.0, %v463
  %v465 = vpop.f32.mrb[0].mxu0
  %v466 = vadd.f32 0.0, %v465
  %467 = vmatprep.mubr.bf16.mxu0 %v100
  %468 = vmatmul.mubr.bf16.gmra.mrb[0].mxu0 %v99
  %v469 = vpop.f32.mrb[0].mxu0
  %v470 = vadd.f32 0.0, %v469
  %v471 = vpop.f32.mrb[0].mxu0
  %v472 = vadd.f32 0.0, %v471
  %v473 = vpop.f32.mrb[0].mxu0
  %v474 = vadd.f32 0.0, %v473
  %v475 = vpop.f32.mrb[0].mxu0
  %v476 = vadd.f32 0.0, %v475
  %477 = vdwg.mxu0
  %478 = vmatprep.subr.bf16.mxu0 %v300
  %479 = vmatpush1.bf16.msra.mxu0 %v299
  %480 = vmatprep.subr.bf16.mxu0 %v304
  %481 = vmatpush1.bf16.msra.mxu0 %v303
  %482 = vmatprep.subr.bf16.mxu0 %v308
  %483 = vmatpush1.bf16.msra.mxu0 %v307
  %484 = vmatprep.subr.bf16.mxu0 %v312
  %485 = vmatpush1.bf16.msra.mxu0 %v311
  %486 = vmatprep.subr.bf16.mxu0 %v316
  %487 = vmatpush1.bf16.msra.mxu0 %v315
  %488 = vmatprep.subr.bf16.mxu0 %v320
  %489 = vmatpush1.bf16.msra.mxu0 %v319
  %490 = vmatprep.subr.bf16.mxu0 %v324
  %491 = vmatpush1.bf16.msra.mxu0 %v323
  %492 = vmatprep.subr.bf16.mxu0 %v328
  %493 = vmatpush1.bf16.msra.mxu0 %v327
  %494 = vmatprep.subr.bf16.mxu0 %v332
  %495 = vmatpush1.bf16.msra.mxu0 %v331
  %496 = vmatprep.subr.bf16.mxu0 %v336
  %497 = vmatpush1.bf16.msra.mxu0 %v335
  %498 = vmatprep.subr.bf16.mxu0 %v340
  %499 = vmatpush1.bf16.msra.mxu0 %v339
  %500 = vmatprep.subr.bf16.mxu0 %v344
  %501 = vmatpush1.bf16.msra.mxu0 %v343
  %502 = vmatprep.subr.bf16.mxu0 %v348
  %503 = vmatpush1.bf16.msra.mxu0 %v347
  %504 = vmatprep.subr.bf16.mxu0 %v352
  %505 = vmatpush1.bf16.msra.mxu0 %v351
  %506 = vmatprep.subr.bf16.mxu0 %v356
  %507 = vmatpush1.bf16.msra.mxu0 %v355
  %508 = vmatprep.subr.bf16.mxu0 %v360
  %509 = vmatpush1.bf16.msra.mxu0 %v359
  %510 = vmatprep.mubr.bf16.mxu0 %v98
  %511 = vmatmul.mubr.bf16.gmra.mrb[0].mxu0 %v97
  %v512 = vpop.f32.mrb[0].mxu0
  %v513 = vadd.f32 0.0, %v512
  %v514 = vpop.f32.mrb[0].mxu0
  %v515 = vadd.f32 0.0, %v514
  %v516 = vpop.f32.mrb[0].mxu0
  %v517 = vadd.f32 0.0, %v516
  %v518 = vpop.f32.mrb[0].mxu0
  %v519 = vadd.f32 0.0, %v518
  %520 = vmatprep.mubr.bf16.mxu0 %v100
  %521 = vmatmul.mubr.bf16.gmra.mrb[0].mxu0 %v99
  %v522 = vpop.f32.mrb[0].mxu0
  %v523 = vadd.f32 0.0, %v522
  %v524 = vpop.f32.mrb[0].mxu0
  %v525 = vadd.f32 0.0, %v524
  %v526 = vpop.f32.mrb[0].mxu0
  %v527 = vadd.f32 0.0, %v526
  %v528 = vpop.f32.mrb[0].mxu0
  %v529 = vadd.f32 0.0, %v528
  %530 = vdwg.mxu0
  %v531 = vadd.f32 %v460, %v462
  %v532 = vadd.f32 %v531, %v513
  %v533 = vadd.f32 %v532, %v515
  %534 = vadd.xlane.f32.xlu0 %v533
  %v535 = vpop.xlane.xlu0 %534
  %v536 = vadd.f32 %v464, %v466
  %v537 = vadd.f32 %v536, %v517
  %v538 = vadd.f32 %v537, %v519
  %539 = vadd.xlane.f32.xlu0 %v538
  %v540 = vpop.xlane.xlu0 %539
  %v541 = vadd.f32 %v470, %v472
  %v542 = vadd.f32 %v541, %v523
  %v543 = vadd.f32 %v542, %v525
  %544 = vadd.xlane.f32.xlu0 %v543
  %v545 = vpop.xlane.xlu0 %544
  %v546 = vadd.f32 %v474, %v476
  %v547 = vadd.f32 %v546, %v527
  %v548 = vadd.f32 %v547, %v529
  %549 = vadd.xlane.f32.xlu0 %v548
  %v550 = vpop.xlane.xlu0 %549
  %v551 = vmul.f32 %v535, 0.001953125
  %v552 = vmul.f32 %v540, 0.001953125
  %v553 = vmul.f32 %v545, 0.001953125
  %v554 = vmul.f32 %v550, 0.001953125
  %v555 = vmul.f32 %v460, %v460
  %v556 = vmul.f32 %v462, %v462
  %v557 = vmul.f32 %v513, %v513
  %v558 = vmul.f32 %v515, %v515
  %v559 = vmul.f32 %v464, %v464
  %v560 = vmul.f32 %v466, %v466
  %v561 = vmul.f32 %v517, %v517
  %v562 = vmul.f32 %v519, %v519
  %v563 = vmul.f32 %v470, %v470
  %v564 = vmul.f32 %v472, %v472
  %v565 = vmul.f32 %v523, %v523
  %v566 = vmul.f32 %v525, %v525
  %v567 = vmul.f32 %v474, %v474
  %v568 = vmul.f32 %v476, %v476
  %v569 = vmul.f32 %v527, %v527
  %v570 = vmul.f32 %v529, %v529
  %v571 = vadd.f32 %v555, %v556
  %v572 = vadd.f32 %v571, %v557
  %v573 = vadd.f32 %v572, %v558
  %574 = vadd.xlane.f32.xlu0 %v573
  %v575 = vpop.xlane.xlu0 %574
  %v576 = vadd.f32 %v559, %v560
  %v577 = vadd.f32 %v576, %v561
  %v578 = vadd.f32 %v577, %v562
  %579 = vadd.xlane.f32.xlu0 %v578
  %v580 = vpop.xlane.xlu0 %579
  %v581 = vadd.f32 %v563, %v564
  %v582 = vadd.f32 %v581, %v565
  %v583 = vadd.f32 %v582, %v566
  %584 = vadd.xlane.f32.xlu0 %v583
  %v585 = vpop.xlane.xlu0 %584
  %v586 = vadd.f32 %v567, %v568
  %v587 = vadd.f32 %v586, %v569
  %v588 = vadd.f32 %v587, %v570
  %589 = vadd.xlane.f32.xlu0 %v588
  %v590 = vpop.xlane.xlu0 %589
  %v591 = vmul.f32 %v575, 0.001953125
  %v592 = vmul.f32 %v580, 0.001953125
  %v593 = vmul.f32 %v585, 0.001953125
  %v594 = vmul.f32 %v590, 0.001953125
  %v595 = vmul.f32 %v551, %v551
  %v596 = vmul.f32 %v552, %v552
  %v597 = vmul.f32 %v553, %v553
  %v598 = vmul.f32 %v554, %v554
  %v599 = vsub.f32 %v591, %v595
  %v600 = vsub.f32 %v592, %v596
  %v601 = vsub.f32 %v593, %v597
  %v602 = vsub.f32 %v594, %v598
  %v603 = vld [vmem:[%s2] sm:$0xff]
  %v604 = vld [vmem:[%s2 + $0x8] sm:$0xff]
  %v605 = vld [vmem:[%s2 + $0x10] sm:$0xff]
  %v606 = vld [vmem:[%s2 + $0x18] sm:$0xff]
  %v607 = vadd.f32 %v599, 1e-05
  %v608 = vadd.f32 %v600, 1e-05
  %v609 = vadd.f32 %v601, 1e-05
  %v610 = vadd.f32 %v602, 1e-05
  %v611 = vrsqrt.pop %v607
  %v612 = vrsqrt.pop %v608
  %v613 = vrsqrt.pop %v609
  %v614 = vrsqrt.pop %v610
  %v615 = vmul.f32 %v603, %v611
  %v616 = vmul.f32 %v604, %v612
  %v617 = vmul.f32 %v605, %v613
  %v618 = vmul.f32 %v606, %v614
  %v619 = vsub.f32 %v460, %v551
  %v620 = vsub.f32 %v462, %v551
  %v621 = vsub.f32 %v513, %v551
  %v622 = vsub.f32 %v515, %v551
  %v623 = vsub.f32 %v464, %v552
  %v624 = vsub.f32 %v466, %v552
  %v625 = vsub.f32 %v517, %v552
  %v626 = vsub.f32 %v519, %v552
  %v627 = vsub.f32 %v470, %v553
  %v628 = vsub.f32 %v472, %v553
  %v629 = vsub.f32 %v523, %v553
  %v630 = vsub.f32 %v525, %v553
  %v631 = vsub.f32 %v474, %v554
  %v632 = vsub.f32 %v476, %v554
  %v633 = vsub.f32 %v527, %v554
  %v634 = vsub.f32 %v529, %v554
  %636 = vset.pattern.permute.xlu0 0
  %637 = vperm.xlu0 %636, %v615
  %v638 = vpop.permute.xlu0 %637
  %641 = vset.pattern.permute.xlu0 0
  %642 = vperm.xlu0 %641, %v616
  %v643 = vpop.permute.xlu0 %642
  %646 = vset.pattern.permute.xlu0 0
  %647 = vperm.xlu0 %646, %v617
  %v648 = vpop.permute.xlu0 %647
  %651 = vset.pattern.permute.xlu0 0
  %652 = vperm.xlu0 %651, %v618
  %v653 = vpop.permute.xlu0 %652
  %v655 = vmul.f32 %v619, %v638
  %v656 = vmul.f32 %v620, %v638
  %v657 = vmul.f32 %v621, %v638
  %v658 = vmul.f32 %v622, %v638
  %v659 = vmul.f32 %v623, %v643
  %v660 = vmul.f32 %v624, %v643
  %v661 = vmul.f32 %v625, %v643
  %v662 = vmul.f32 %v626, %v643
  %v663 = vmul.f32 %v627, %v648
  %v664 = vmul.f32 %v628, %v648
  %v665 = vmul.f32 %v629, %v648
  %v666 = vmul.f32 %v630, %v648
  %v667 = vmul.f32 %v631, %v653
  %v668 = vmul.f32 %v632, %v653
  %v669 = vmul.f32 %v633, %v653
  %v670 = vmul.f32 %v634, %v653
  %v671 = vld [vmem:[%s3] sm:$0xff]
  %v672 = vld [vmem:[%s3 + $0x8] sm:$0xff]
  %v673 = vld [vmem:[%s3 + $0x10] sm:$0xff]
  %v674 = vld [vmem:[%s3 + $0x18] sm:$0xff]
  %676 = vset.pattern.permute.xlu0 0
  %677 = vperm.xlu0 %676, %v671
  %v678 = vpop.permute.xlu0 %677
  %681 = vset.pattern.permute.xlu0 0
  %682 = vperm.xlu0 %681, %v672
  %v683 = vpop.permute.xlu0 %682
  %686 = vset.pattern.permute.xlu0 0
  %687 = vperm.xlu0 %686, %v673
  %v688 = vpop.permute.xlu0 %687
  %691 = vset.pattern.permute.xlu0 0
  %692 = vperm.xlu0 %691, %v674
  %v693 = vpop.permute.xlu0 %692
  %v695 = vadd.f32 %v655, %v678
  %v696 = vadd.f32 %v656, %v678
  %v697 = vadd.f32 %v657, %v678
  %v698 = vadd.f32 %v658, %v678
  %v699 = vadd.f32 %v659, %v683
  %v700 = vadd.f32 %v660, %v683
  %v701 = vadd.f32 %v661, %v683
  %v702 = vadd.f32 %v662, %v683
  %v703 = vadd.f32 %v663, %v688
  %v704 = vadd.f32 %v664, %v688
  %v705 = vadd.f32 %v665, %v688
  %v706 = vadd.f32 %v666, %v688
  %v707 = vadd.f32 %v667, %v693
  %v708 = vadd.f32 %v668, %v693
  %v709 = vadd.f32 %v669, %v693
  %v710 = vadd.f32 %v670, %v693
  %vm711 = vcmp.gt.f32.partialorder %v695, 0.0
  %vm712 = vcmp.gt.f32.partialorder %v696, 0.0
  %vm713 = vcmp.gt.f32.partialorder %v697, 0.0
  %vm714 = vcmp.gt.f32.partialorder %v698, 0.0
  %vm715 = vcmp.gt.f32.partialorder %v699, 0.0
  %vm716 = vcmp.gt.f32.partialorder %v700, 0.0
  %vm717 = vcmp.gt.f32.partialorder %v701, 0.0
  %vm718 = vcmp.gt.f32.partialorder %v702, 0.0
  %vm719 = vcmp.gt.f32.partialorder %v703, 0.0
  %vm720 = vcmp.gt.f32.partialorder %v704, 0.0
  %vm721 = vcmp.gt.f32.partialorder %v705, 0.0
  %vm722 = vcmp.gt.f32.partialorder %v706, 0.0
  %vm723 = vcmp.gt.f32.partialorder %v707, 0.0
  %vm724 = vcmp.gt.f32.partialorder %v708, 0.0
  %vm725 = vcmp.gt.f32.partialorder %v709, 0.0
  %vm726 = vcmp.gt.f32.partialorder %v710, 0.0
  %v727 = vmul.f32 %v695, 0.2
  %v728 = vmul.f32 %v696, 0.2
  %v729 = vmul.f32 %v697, 0.2
  %v730 = vmul.f32 %v698, 0.2
  %v731 = vmul.f32 %v699, 0.2
  %v732 = vmul.f32 %v700, 0.2
  %v733 = vmul.f32 %v701, 0.2
  %v734 = vmul.f32 %v702, 0.2
  %v735 = vmul.f32 %v703, 0.2
  %v736 = vmul.f32 %v704, 0.2
  %v737 = vmul.f32 %v705, 0.2
  %v738 = vmul.f32 %v706, 0.2
  %v739 = vmul.f32 %v707, 0.2
  %v740 = vmul.f32 %v708, 0.2
  %v741 = vmul.f32 %v709, 0.2
  %v742 = vmul.f32 %v710, 0.2
  %v743 = vsel %vm711, %v695, %v727
  %v744 = vsel %vm712, %v696, %v728
  %v745 = vsel %vm713, %v697, %v729
  %v746 = vsel %vm714, %v698, %v730
  %v747 = vsel %vm715, %v699, %v731
  %v748 = vsel %vm716, %v700, %v732
  %v749 = vsel %vm717, %v701, %v733
  %v750 = vsel %vm718, %v702, %v734
  %v751 = vsel %vm719, %v703, %v735
  %v752 = vsel %vm720, %v704, %v736
  %v753 = vsel %vm721, %v705, %v737
  %v754 = vsel %vm722, %v706, %v738
  %v755 = vsel %vm723, %v707, %v739
  %v756 = vsel %vm724, %v708, %v740
  %v757 = vsel %vm725, %v709, %v741
  %v758 = vsel %vm726, %v710, %v742
  %759 = vst [vmem:[%s4] sm:$0xff] %v743
  %760 = vst [vmem:[%s4 + $0x8] sm:$0xff] %v744
  %761 = vst [vmem:[%s4 + $0x10] sm:$0xff] %v745
  %762 = vst [vmem:[%s4 + $0x18] sm:$0xff] %v746
  %763 = vst [vmem:[%s4 + $0x20] sm:$0xff] %v747
  %764 = vst [vmem:[%s4 + $0x28] sm:$0xff] %v748
  %765 = vst [vmem:[%s4 + $0x30] sm:$0xff] %v749
  %766 = vst [vmem:[%s4 + $0x38] sm:$0xff] %v750
  %767 = vst [vmem:[%s4 + $0x40] sm:$0xff] %v751
  %768 = vst [vmem:[%s4 + $0x48] sm:$0xff] %v752
  %769 = vst [vmem:[%s4 + $0x50] sm:$0xff] %v753
  %770 = vst [vmem:[%s4 + $0x58] sm:$0xff] %v754
  %771 = vst [vmem:[%s4 + $0x60] sm:$0xff] %v755
  %772 = vst [vmem:[%s4 + $0x68] sm:$0xff] %v756
  %773 = vst [vmem:[%s4 + $0x70] sm:$0xff] %v757
  %774 = vst [vmem:[%s4 + $0x78] sm:$0xff] %v758
  // Predicated region
  $region18: #{discriminator_stage2.7} parent=0 // pred_check
    _
  $region19: #{discriminator_stage2.7} parent=0 // pred_check_branch
    %776 = sbr.rel (0) target = $region21
  $region20: #{discriminator_stage2.7} parent=0 // pred_region
    _
  $region21: #{discriminator_stage2.7} parent=0 // pred_fallthru
    _
  // Predicated region
  $region22: #{discriminator_stage2.7} parent=0 // pred_check
    _
  $region23: #{discriminator_stage2.7} parent=0 // pred_check_branch
    %778 = sbr.rel (0) target = $region25
  $region24: #{discriminator_stage2.7} parent=0 // pred_region
    _
  $region25: #{discriminator_stage2.7} parent=0 // pred_fallthru
    _

// kernel: discriminator_stage2.8
$region0: #{discriminator_stage2.8}
  #allocation0 [shape = 'u32[]', space=smem, size = 0x4, offset = 0x4, fixed_abs, tag = 'smem constant byte address 0x4 - core index']
  #allocation1 [shape = 'u32[144,128]{1,0:T(1,128)}', space=vmem, size = 0x12000, scoped, tag = 'internal scratch']
  %s0 = inlined_call_operand.vmem [shape: bf16[64,512], index: 0, kind: input, shape index: {}]
  %s1 = inlined_call_operand.vmem [shape: bf16[512,128], index: 1, kind: input, shape index: {}]
  %s2 = inlined_call_operand.vmem [shape: f32[64,1], index: 2, kind: input, shape index: {}]
  %s3 = inlined_call_operand.vmem [shape: f32[64,1], index: 3, kind: input, shape index: {}]
  %s4 = inlined_call_operand.vmem [shape: f32[64,128], index: 4, kind: output, shape index: {}]
  %s5 = sld [smem:[#allocation0]]
  $region26: #{discriminator_stage2.8} parent=0
    _
  %s7 = ssub.s32 1, %s5
  %s8 = scalar_select 0, %s7, %s5
  // Predicated region
  $region2: #{discriminator_stage2.8} parent=0 // pred_check
    _
  $region3: #{discriminator_stage2.8} parent=0 // pred_check_branch
    %10 = sbr.rel (0) target = $region5
  $region4: #{discriminator_stage2.8} parent=0 // pred_region
    _
  $region5: #{discriminator_stage2.8} parent=0 // pred_fallthru
    _
  // Predicated region
  $region6: #{discriminator_stage2.8} parent=0 // pred_check
    _
  $region7: #{discriminator_stage2.8} parent=0 // pred_check_branch
    %12 = sbr.rel (0) target = $region9
  $region8: #{discriminator_stage2.8} parent=0 // pred_region
    _
  $region9: #{discriminator_stage2.8} parent=0 // pred_fallthru
    _
  // Predicated region
  $region10: #{discriminator_stage2.8} parent=0 // pred_check
    _
  $region11: #{discriminator_stage2.8} parent=0 // pred_check_branch
    %14 = sbr.rel (0) target = $region13
  $region12: #{discriminator_stage2.8} parent=0 // pred_region
    _
  $region13: #{discriminator_stage2.8} parent=0 // pred_fallthru
    _
  // Predicated region
  $region14: #{discriminator_stage2.8} parent=0 // pred_check
    _
  $region15: #{discriminator_stage2.8} parent=0 // pred_check_branch
    %16 = sbr.rel (0) target = $region17
  $region16: #{discriminator_stage2.8} parent=0 // pred_region
    _
  $region17: #{discriminator_stage2.8} parent=0 // pred_fallthru
    _
  %v18 = vld [vmem:[%s0] sm:$0xff]
  %v19 = vld [vmem:[%s0 + $0x8] sm:$0xff]
  %v20 = vld [vmem:[%s0 + $0x10] sm:$0xff]
  %v21 = vld [vmem:[%s0 + $0x18] sm:$0xff]
  %v22 = vld [vmem:[%s0 + $0x20] sm:$0xff]
  %v23 = vld [vmem:[%s0 + $0x28] sm:$0xff]
  %v24 = vld [vmem:[%s0 + $0x30] sm:$0xff]
  %v25 = vld [vmem:[%s0 + $0x38] sm:$0xff]
  %v26 = vld [vmem:[%s0 + $0x40] sm:$0xff]
  %v27 = vld [vmem:[%s0 + $0x48] sm:$0xff]
  %v28 = vld [vmem:[%s0 + $0x50] sm:$0xff]
  %v29 = vld [vmem:[%s0 + $0x58] sm:$0xff]
  %v30 = vld [vmem:[%s0 + $0x60] sm:$0xff]
  %v31 = vld [vmem:[%s0 + $0x68] sm:$0xff]
  %v32 = vld [vmem:[%s0 + $0x70] sm:$0xff]
  %v33 = vld [vmem:[%s0 + $0x78] sm:$0xff]
  %v34 = vld [vmem:[%s1] sm:$0xf]
  %v35 = vld [vmem:[%s1 + $0x4] sm:$0xf]
  %v36 = vld [vmem:[%s1 + $0x8] sm:$0xf]
  %v37 = vld [vmem:[%s1 + $0xc] sm:$0xf]
  %v38 = vld [vmem:[%s1 + $0x10] sm:$0xf]
  %v39 = vld [vmem:[%s1 + $0x14] sm:$0xf]
  %v40 = vld [vmem:[%s1 + $0x18] sm:$0xf]
  %v41 = vld [vmem:[%s1 + $0x1c] sm:$0xf]
  %v42 = vld [vmem:[%s1 + $0x20] sm:$0xf]
  %v43 = vld [vmem:[%s1 + $0x24] sm:$0xf]
  %v44 = vld [vmem:[%s1 + $0x28] sm:$0xf]
  %v45 = vld [vmem:[%s1 + $0x2c] sm:$0xf]
  %v46 = vld [vmem:[%s1 + $0x30] sm:$0xf]
  %v47 = vld [vmem:[%s1 + $0x34] sm:$0xf]
  %v48 = vld [vmem:[%s1 + $0x38] sm:$0xf]
  %v49 = vld [vmem:[%s1 + $0x3c] sm:$0xf]
  %v50 = vld [vmem:[%s1 + $0x40] sm:$0xf]
  %v51 = vld [vmem:[%s1 + $0x44] sm:$0xf]
  %v52 = vld [vmem:[%s1 + $0x48] sm:$0xf]
  %v53 = vld [vmem:[%s1 + $0x4c] sm:$0xf]
  %v54 = vld [vmem:[%s1 + $0x50] sm:$0xf]
  %v55 = vld [vmem:[%s1 + $0x54] sm:$0xf]
  %v56 = vld [vmem:[%s1 + $0x58] sm:$0xf]
  %v57 = vld [vmem:[%s1 + $0x5c] sm:$0xf]
  %v58 = vld [vmem:[%s1 + $0x60] sm:$0xf]
  %v59 = vld [vmem:[%s1 + $0x64] sm:$0xf]
  %v60 = vld [vmem:[%s1 + $0x68] sm:$0xf]
  %v61 = vld [vmem:[%s1 + $0x6c] sm:$0xf]
  %v62 = vld [vmem:[%s1 + $0x70] sm:$0xf]
  %v63 = vld [vmem:[%s1 + $0x74] sm:$0xf]
  %v64 = vld [vmem:[%s1 + $0x78] sm:$0xf]
  %v65 = vld [vmem:[%s1 + $0x7c] sm:$0xf]
  %v66 = vld [vmem:[%s1 + $0x80] sm:$0xf]
  %v67 = vld [vmem:[%s1 + $0x84] sm:$0xf]
  %v68 = vld [vmem:[%s1 + $0x88] sm:$0xf]
  %v69 = vld [vmem:[%s1 + $0x8c] sm:$0xf]
  %v70 = vld [vmem:[%s1 + $0x90] sm:$0xf]
  %v71 = vld [vmem:[%s1 + $0x94] sm:$0xf]
  %v72 = vld [vmem:[%s1 + $0x98] sm:$0xf]
  %v73 = vld [vmem:[%s1 + $0x9c] sm:$0xf]
  %v74 = vld [vmem:[%s1 + $0xa0] sm:$0xf]
  %v75 = vld [vmem:[%s1 + $0xa4] sm:$0xf]
  %v76 = vld [vmem:[%s1 + $0xa8] sm:$0xf]
  %v77 = vld [vmem:[%s1 + $0xac] sm:$0xf]
  %v78 = vld [vmem:[%s1 + $0xb0] sm:$0xf]
  %v79 = vld [vmem:[%s1 + $0xb4] sm:$0xf]
  %v80 = vld [vmem:[%s1 + $0xb8] sm:$0xf]
  %v81 = vld [vmem:[%s1 + $0xbc] sm:$0xf]
  %v82 = vld [vmem:[%s1 + $0xc0] sm:$0xf]
  %v83 = vld [vmem:[%s1 + $0xc4] sm:$0xf]
  %v84 = vld [vmem:[%s1 + $0xc8] sm:$0xf]
  %v85 = vld [vmem:[%s1 + $0xcc] sm:$0xf]
  %v86 = vld [vmem:[%s1 + $0xd0] sm:$0xf]
  %v87 = vld [vmem:[%s1 + $0xd4] sm:$0xf]
  %v88 = vld [vmem:[%s1 + $0xd8] sm:$0xf]
  %v89 = vld [vmem:[%s1 + $0xdc] sm:$0xf]
  %v90 = vld [vmem:[%s1 + $0xe0] sm:$0xf]
  %v91 = vld [vmem:[%s1 + $0xe4] sm:$0xf]
  %v92 = vld [vmem:[%s1 + $0xe8] sm:$0xf]
  %v93 = vld [vmem:[%s1 + $0xec] sm:$0xf]
  %v94 = vld [vmem:[%s1 + $0xf0] sm:$0xf]
  %v95 = vld [vmem:[%s1 + $0xf4] sm:$0xf]
  %v96 = vld [vmem:[%s1 + $0xf8] sm:$0xf]
  %v97 = vld [vmem:[%s1 + $0xfc] sm:$0xf]
  %v114 = vunpack.c.l.b16 %v18
  %v115 = vunpack.c.h.b16 %v18
  %v116 = vunpack.c.l.b16 %v19
  %v117 = vunpack.c.h.b16 %v19
  %v118 = vunpack.c.l.b16 %v20
  %v119 = vunpack.c.h.b16 %v20
  %v120 = vunpack.c.l.b16 %v21
  %v121 = vunpack.c.h.b16 %v21
  %v122 = vunpack.c.l.b16 %v22
  %v123 = vunpack.c.h.b16 %v22
  %v124 = vunpack.c.l.b16 %v23
  %v125 = vunpack.c.h.b16 %v23
  %v126 = vunpack.c.l.b16 %v24
  %v127 = vunpack.c.h.b16 %v24
  %v128 = vunpack.c.l.b16 %v25
  %v129 = vunpack.c.h.b16 %v25
  %v130 = vunpack.c.l.b16 %v26
  %v131 = vunpack.c.h.b16 %v26
  %v132 = vunpack.c.l.b16 %v27
  %v133 = vunpack.c.h.b16 %v27
  %v134 = vunpack.c.l.b16 %v28
  %v135 = vunpack.c.h.b16 %v28
  %v136 = vunpack.c.l.b16 %v29
  %v137 = vunpack.c.h.b16 %v29
  %v138 = vunpack.c.l.b16 %v30
  %v139 = vunpack.c.h.b16 %v30
  %v140 = vunpack.c.l.b16 %v31
  %v141 = vunpack.c.h.b16 %v31
  %v142 = vunpack.c.l.b16 %v32
  %v143 = vunpack.c.h.b16 %v32
  %v144 = vunpack.c.l.b16 %v33
  %v145 = vunpack.c.h.b16 %v33
  %v146 = vpack.c.b16 %v118, %v114
  %v147 = vpack.c.b16 %v119, %v115
  %v148 = vpack.c.b16 %v120, %v116
  %v149 = vpack.c.b16 %v121, %v117
  %v150 = vpack.c.b16 %v126, %v122
  %v151 = vpack.c.b16 %v127, %v123
  %v152 = vpack.c.b16 %v128, %v124
  %v153 = vpack.c.b16 %v129, %v125
  %v154 = vpack.c.b16 %v134, %v130
  %v155 = vpack.c.b16 %v135, %v131
  %v156 = vpack.c.b16 %v136, %v132
  %v157 = vpack.c.b16 %v137, %v133
  %v158 = vpack.c.b16 %v142, %v138
  %v159 = vpack.c.b16 %v143, %v139
  %v160 = vpack.c.b16 %v144, %v140
  %v161 = vpack.c.b16 %v145, %v141
  %v242 = vunpack.c.l.b16 %v34
  %v243 = vunpack.c.l.b16 %v35
  %v244 = vunpack.c.l.b16 %v36
  %v245 = vunpack.c.l.b16 %v37
  %v246 = vunpack.c.l.b16 %v38
  %v247 = vunpack.c.l.b16 %v39
  %v248 = vunpack.c.l.b16 %v40
  %v249 = vunpack.c.l.b16 %v41
  %v250 = vunpack.c.l.b16 %v42
  %v251 = vunpack.c.l.b16 %v43
  %v252 = vunpack.c.l.b16 %v44
  %v253 = vunpack.c.l.b16 %v45
  %v254 = vunpack.c.l.b16 %v46
  %v255 = vunpack.c.l.b16 %v47
  %v256 = vunpack.c.l.b16 %v48
  %v257 = vunpack.c.l.b16 %v49
  %v258 = vunpack.c.l.b16 %v50
  %v259 = vunpack.c.l.b16 %v51
  %v260 = vunpack.c.l.b16 %v52
  %v261 = vunpack.c.l.b16 %v53
  %v262 = vunpack.c.l.b16 %v54
  %v263 = vunpack.c.l.b16 %v55
  %v264 = vunpack.c.l.b16 %v56
  %v265 = vunpack.c.l.b16 %v57
  %v266 = vunpack.c.l.b16 %v58
  %v267 = vunpack.c.l.b16 %v59
  %v268 = vunpack.c.l.b16 %v60
  %v269 = vunpack.c.l.b16 %v61
  %v270 = vunpack.c.l.b16 %v62
  %v271 = vunpack.c.l.b16 %v63
  %v272 = vunpack.c.l.b16 %v64
  %v273 = vunpack.c.l.b16 %v65
  %v274 = vunpack.c.l.b16 %v66
  %v275 = vunpack.c.l.b16 %v67
  %v276 = vunpack.c.l.b16 %v68
  %v277 = vunpack.c.l.b16 %v69
  %v278 = vunpack.c.l.b16 %v70
  %v279 = vunpack.c.l.b16 %v71
  %v280 = vunpack.c.l.b16 %v72
  %v281 = vunpack.c.l.b16 %v73
  %v282 = vunpack.c.l.b16 %v74
  %v283 = vunpack.c.l.b16 %v75
  %v284 = vunpack.c.l.b16 %v76
  %v285 = vunpack.c.l.b16 %v77
  %v286 = vunpack.c.l.b16 %v78
  %v287 = vunpack.c.l.b16 %v79
  %v288 = vunpack.c.l.b16 %v80
  %v289 = vunpack.c.l.b16 %v81
  %v290 = vunpack.c.l.b16 %v82
  %v291 = vunpack.c.l.b16 %v83
  %v292 = vunpack.c.l.b16 %v84
  %v293 = vunpack.c.l.b16 %v85
  %v294 = vunpack.c.l.b16 %v86
  %v295 = vunpack.c.l.b16 %v87
  %v296 = vunpack.c.l.b16 %v88
  %v297 = vunpack.c.l.b16 %v89
  %v298 = vunpack.c.l.b16 %v90
  %v299 = vunpack.c.l.b16 %v91
  %v300 = vunpack.c.l.b16 %v92
  %v301 = vunpack.c.l.b16 %v93
  %v302 = vunpack.c.l.b16 %v94
  %v303 = vunpack.c.l.b16 %v95
  %v304 = vunpack.c.l.b16 %v96
  %v305 = vunpack.c.l.b16 %v97
  %v306 = vpack.c.b16 %v243, %v242
  %v307 = vpack.c.b16 %v245, %v244
  %v308 = vpack.c.b16 %v247, %v246
  %v309 = vpack.c.b16 %v249, %v248
  %v310 = vpack.c.b16 %v251, %v250
  %v311 = vpack.c.b16 %v253, %v252
  %v312 = vpack.c.b16 %v255, %v254
  %v313 = vpack.c.b16 %v257, %v256
  %v314 = vpack.c.b16 %v259, %v258
  %v315 = vpack.c.b16 %v261, %v260
  %v316 = vpack.c.b16 %v263, %v262
  %v317 = vpack.c.b16 %v265, %v264
  %v318 = vpack.c.b16 %v267, %v266
  %v319 = vpack.c.b16 %v269, %v268
  %v320 = vpack.c.b16 %v271, %v270
  %v321 = vpack.c.b16 %v273, %v272
  %v322 = vpack.c.b16 %v275, %v274
  %v323 = vpack.c.b16 %v277, %v276
  %v324 = vpack.c.b16 %v279, %v278
  %v325 = vpack.c.b16 %v281, %v280
  %v326 = vpack.c.b16 %v283, %v282
  %v327 = vpack.c.b16 %v285, %v284
  %v328 = vpack.c.b16 %v287, %v286
  %v329 = vpack.c.b16 %v289, %v288
  %v330 = vpack.c.b16 %v291, %v290
  %v331 = vpack.c.b16 %v293, %v292
  %v332 = vpack.c.b16 %v295, %v294
  %v333 = vpack.c.b16 %v297, %v296
  %v334 = vpack.c.b16 %v299, %v298
  %v335 = vpack.c.b16 %v301, %v300
  %v336 = vpack.c.b16 %v303, %v302
  %v337 = vpack.c.b16 %v305, %v304
  %370 = vmatprep.subr.bf16.mxu0 0
  %371 = vmatpush1.bf16.msra.mxu0 %v306
  %372 = vmatprep.subr.bf16.mxu0 0
  %373 = vmatpush1.bf16.msra.mxu0 %v307
  %374 = vmatprep.subr.bf16.mxu0 0
  %375 = vmatpush1.bf16.msra.mxu0 %v308
  %376 = vmatprep.subr.bf16.mxu0 0
  %377 = vmatpush1.bf16.msra.mxu0 %v309
  %378 = vmatprep.subr.bf16.mxu0 0
  %379 = vmatpush1.bf16.msra.mxu0 %v310
  %380 = vmatprep.subr.bf16.mxu0 0
  %381 = vmatpush1.bf16.msra.mxu0 %v311
  %382 = vmatprep.subr.bf16.mxu0 0
  %383 = vmatpush1.bf16.msra.mxu0 %v312
  %384 = vmatprep.subr.bf16.mxu0 0
  %385 = vmatpush1.bf16.msra.mxu0 %v313
  %386 = vmatprep.subr.bf16.mxu0 0
  %387 = vmatpush1.bf16.msra.mxu0 %v314
  %388 = vmatprep.subr.bf16.mxu0 0
  %389 = vmatpush1.bf16.msra.mxu0 %v315
  %390 = vmatprep.subr.bf16.mxu0 0
  %391 = vmatpush1.bf16.msra.mxu0 %v316
  %392 = vmatprep.subr.bf16.mxu0 0
  %393 = vmatpush1.bf16.msra.mxu0 %v317
  %394 = vmatprep.subr.bf16.mxu0 0
  %395 = vmatpush1.bf16.msra.mxu0 %v318
  %396 = vmatprep.subr.bf16.mxu0 0
  %397 = vmatpush1.bf16.msra.mxu0 %v319
  %398 = vmatprep.subr.bf16.mxu0 0
  %399 = vmatpush1.bf16.msra.mxu0 %v320
  %400 = vmatprep.subr.bf16.mxu0 0
  %401 = vmatpush1.bf16.msra.mxu0 %v321
  %402 = vmatprep.mubr.bf16.mxu0 %v147
  %403 = vmatmul.mubr.bf16.gmra.mrb[0].mxu0 %v146
  %v404 = vpop.f32.mrb[0].mxu0
  %v405 = vadd.f32 0.0, %v404
  %v406 = vpop.f32.mrb[0].mxu0
  %v407 = vpop.f32.mrb[0].mxu0
  %v408 = vadd.f32 0.0, %v407
  %v409 = vpop.f32.mrb[0].mxu0
  %410 = vmatprep.mubr.bf16.mxu0 %v151
  %411 = vmatmul.mubr.bf16.gmra.mrb[0].mxu0 %v150
  %v412 = vpop.f32.mrb[0].mxu0
  %v413 = vadd.f32 0.0, %v412
  %v414 = vpop.f32.mrb[0].mxu0
  %v415 = vpop.f32.mrb[0].mxu0
  %v416 = vadd.f32 0.0, %v415
  %v417 = vpop.f32.mrb[0].mxu0
  %418 = vmatprep.mubr.bf16.mxu0 %v155
  %419 = vmatmul.mubr.bf16.gmra.mrb[0].mxu0 %v154
  %v420 = vpop.f32.mrb[0].mxu0
  %v421 = vadd.f32 0.0, %v420
  %v422 = vpop.f32.mrb[0].mxu0
  %v423 = vpop.f32.mrb[0].mxu0
  %v424 = vadd.f32 0.0, %v423
  %v425 = vpop.f32.mrb[0].mxu0
  %426 = vmatprep.mubr.bf16.mxu0 %v159
  %427 = vmatmul.mubr.bf16.gmra.mrb[0].mxu0 %v158
  %v428 = vpop.f32.mrb[0].mxu0
  %v429 = vadd.f32 0.0, %v428
  %v430 = vpop.f32.mrb[0].mxu0
  %v431 = vpop.f32.mrb[0].mxu0
  %v432 = vadd.f32 0.0, %v431
  %v433 = vpop.f32.mrb[0].mxu0
  %434 = vdwg.mxu0
  %435 = vmatprep.subr.bf16.mxu0 0
  %436 = vmatpush1.bf16.msra.mxu0 %v322
  %437 = vmatprep.subr.bf16.mxu0 0
  %438 = vmatpush1.bf16.msra.mxu0 %v323
  %439 = vmatprep.subr.bf16.mxu0 0
  %440 = vmatpush1.bf16.msra.mxu0 %v324
  %441 = vmatprep.subr.bf16.mxu0 0
  %442 = vmatpush1.bf16.msra.mxu0 %v325
  %443 = vmatprep.subr.bf16.mxu0 0
  %444 = vmatpush1.bf16.msra.mxu0 %v326
  %445 = vmatprep.subr.bf16.mxu0 0
  %446 = vmatpush1.bf16.msra.mxu0 %v327
  %447 = vmatprep.subr.bf16.mxu0 0
  %448 = vmatpush1.bf16.msra.mxu0 %v328
  %449 = vmatprep.subr.bf16.mxu0 0
  %450 = vmatpush1.bf16.msra.mxu0 %v329
  %451 = vmatprep.subr.bf16.mxu0 0
  %452 = vmatpush1.bf16.msra.mxu0 %v330
  %453 = vmatprep.subr.bf16.mxu0 0
  %454 = vmatpush1.bf16.msra.mxu0 %v331
  %455 = vmatprep.subr.bf16.mxu0 0
  %456 = vmatpush1.bf16.msra.mxu0 %v332
  %457 = vmatprep.subr.bf16.mxu0 0
  %458 = vmatpush1.bf16.msra.mxu0 %v333
  %459 = vmatprep.subr.bf16.mxu0 0
  %460 = vmatpush1.bf16.msra.mxu0 %v334
  %461 = vmatprep.subr.bf16.mxu0 0
  %462 = vmatpush1.bf16.msra.mxu0 %v335
  %463 = vmatprep.subr.bf16.mxu0 0
  %464 = vmatpush1.bf16.msra.mxu0 %v336
  %465 = vmatprep.subr.bf16.mxu0 0
  %466 = vmatpush1.bf16.msra.mxu0 %v337
  %467 = vmatprep.mubr.bf16.mxu0 %v149
  %468 = vmatmul.mubr.bf16.gmra.mrb[0].mxu0 %v148
  %v469 = vpop.f32.mrb[0].mxu0
  %v470 = vadd.f32 %v405, %v469
  %v471 = vpop.f32.mrb[0].mxu0
  %v472 = vpop.f32.mrb[0].mxu0
  %v473 = vadd.f32 %v408, %v472
  %v474 = vpop.f32.mrb[0].mxu0
  %475 = vmatprep.mubr.bf16.mxu0 %v153
  %476 = vmatmul.mubr.bf16.gmra.mrb[0].mxu0 %v152
  %v477 = vpop.f32.mrb[0].mxu0
  %v478 = vadd.f32 %v413, %v477
  %v479 = vpop.f32.mrb[0].mxu0
  %v480 = vpop.f32.mrb[0].mxu0
  %v481 = vadd.f32 %v416, %v480
  %v482 = vpop.f32.mrb[0].mxu0
  %483 = vmatprep.mubr.bf16.mxu0 %v157
  %484 = vmatmul.mubr.bf16.gmra.mrb[0].mxu0 %v156
  %v485 = vpop.f32.mrb[0].mxu0
  %v486 = vadd.f32 %v421, %v485
  %v487 = vpop.f32.mrb[0].mxu0
  %v488 = vpop.f32.mrb[0].mxu0
  %v489 = vadd.f32 %v424, %v488
  %v490 = vpop.f32.mrb[0].mxu0
  %491 = vmatprep.mubr.bf16.mxu0 %v161
  %492 = vmatmul.mubr.bf16.gmra.mrb[0].mxu0 %v160
  %v493 = vpop.f32.mrb[0].mxu0
  %v494 = vadd.f32 %v429, %v493
  %v495 = vpop.f32.mrb[0].mxu0
  %v496 = vpop.f32.mrb[0].mxu0
  %v497 = vadd.f32 %v432, %v496
  %v498 = vpop.f32.mrb[0].mxu0
  %499 = vdwg.mxu0
  %500 = vadd.xlane.f32.xlu0 %v470
  %v501 = vpop.xlane.xlu0 %500
  %502 = vadd.xlane.f32.xlu0 %v473
  %v503 = vpop.xlane.xlu0 %502
  %504 = vadd.xlane.f32.xlu0 %v478
  %v505 = vpop.xlane.xlu0 %504
  %506 = vadd.xlane.f32.xlu0 %v481
  %v507 = vpop.xlane.xlu0 %506
  %508 = vadd.xlane.f32.xlu0 %v486
  %v509 = vpop.xlane.xlu0 %508
  %510 = vadd.xlane.f32.xlu0 %v489
  %v511 = vpop.xlane.xlu0 %510
  %512 = vadd.xlane.f32.xlu0 %v494
  %v513 = vpop.xlane.xlu0 %512
  %514 = vadd.xlane.f32.xlu0 %v497
  %v515 = vpop.xlane.xlu0 %514
  %v516 = vmul.f32 %v501, 0.0078125
  %v517 = vmul.f32 %v503, 0.0078125
  %v518 = vmul.f32 %v505, 0.0078125
  %v519 = vmul.f32 %v507, 0.0078125
  %v520 = vmul.f32 %v509, 0.0078125
  %v521 = vmul.f32 %v511, 0.0078125
  %v522 = vmul.f32 %v513, 0.0078125
  %v523 = vmul.f32 %v515, 0.0078125
  %v524 = vmul.f32 %v470, %v470
  %v525 = vmul.f32 %v473, %v473
  %v526 = vmul.f32 %v478, %v478
  %v527 = vmul.f32 %v481, %v481
  %v528 = vmul.f32 %v486, %v486
  %v529 = vmul.f32 %v489, %v489
  %v530 = vmul.f32 %v494, %v494
  %v531 = vmul.f32 %v497, %v497
  %532 = vadd.xlane.f32.xlu0 %v524
  %v533 = vpop.xlane.xlu0 %532
  %534 = vadd.xlane.f32.xlu0 %v525
  %v535 = vpop.xlane.xlu0 %534
  %536 = vadd.xlane.f32.xlu0 %v526
  %v537 = vpop.xlane.xlu0 %536
  %538 = vadd.xlane.f32.xlu0 %v527
  %v539 = vpop.xlane.xlu0 %538
  %540 = vadd.xlane.f32.xlu0 %v528
  %v541 = vpop.xlane.xlu0 %540
  %542 = vadd.xlane.f32.xlu0 %v529
  %v543 = vpop.xlane.xlu0 %542
  %544 = vadd.xlane.f32.xlu0 %v530
  %v545 = vpop.xlane.xlu0 %544
  %546 = vadd.xlane.f32.xlu0 %v531
  %v547 = vpop.xlane.xlu0 %546
  %v548 = vmul.f32 %v533, 0.0078125
  %v549 = vmul.f32 %v535, 0.0078125
  %v550 = vmul.f32 %v537, 0.0078125
  %v551 = vmul.f32 %v539, 0.0078125
  %v552 = vmul.f32 %v541, 0.0078125
  %v553 = vmul.f32 %v543, 0.0078125
  %v554 = vmul.f32 %v545, 0.0078125
  %v555 = vmul.f32 %v547, 0.0078125
  %v556 = vmul.f32 %v516, %v516
  %v557 = vmul.f32 %v517, %v517
  %v558 = vmul.f32 %v518, %v518
  %v559 = vmul.f32 %v519, %v519
  %v560 = vmul.f32 %v520, %v520
  %v561 = vmul.f32 %v521, %v521
  %v562 = vmul.f32 %v522, %v522
  %v563 = vmul.f32 %v523, %v523
  %v564 = vsub.f32 %v548, %v556
  %v565 = vsub.f32 %v549, %v557
  %v566 = vsub.f32 %v550, %v558
  %v567 = vsub.f32 %v551, %v559
  %v568 = vsub.f32 %v552, %v560
  %v569 = vsub.f32 %v553, %v561
  %v570 = vsub.f32 %v554, %v562
  %v571 = vsub.f32 %v555, %v563
  %v572 = vld [vmem:[%s2] sm:$0xff]
  %v573 = vld [vmem:[%s2 + $0x8] sm:$0xff]
  %v574 = vld [vmem:[%s2 + $0x10] sm:$0xff]
  %v575 = vld [vmem:[%s2 + $0x18] sm:$0xff]
  %v576 = vld [vmem:[%s2 + $0x20] sm:$0xff]
  %v577 = vld [vmem:[%s2 + $0x28] sm:$0xff]
  %v578 = vld [vmem:[%s2 + $0x30] sm:$0xff]
  %v579 = vld [vmem:[%s2 + $0x38] sm:$0xff]
  %v580 = vadd.f32 %v564, 1e-05
  %v581 = vadd.f32 %v565, 1e-05
  %v582 = vadd.f32 %v566, 1e-05
  %v583 = vadd.f32 %v567, 1e-05
  %v584 = vadd.f32 %v568, 1e-05
  %v585 = vadd.f32 %v569, 1e-05
  %v586 = vadd.f32 %v570, 1e-05
  %v587 = vadd.f32 %v571, 1e-05
  %v588 = vrsqrt.pop %v580
  %v589 = vrsqrt.pop %v581
  %v590 = vrsqrt.pop %v582
  %v591 = vrsqrt.pop %v583
  %v592 = vrsqrt.pop %v584
  %v593 = vrsqrt.pop %v585
  %v594 = vrsqrt.pop %v586
  %v595 = vrsqrt.pop %v587
  %v596 = vmul.f32 %v572, %v588
  %v597 = vmul.f32 %v573, %v589
  %v598 = vmul.f32 %v574, %v590
  %v599 = vmul.f32 %v575, %v591
  %v600 = vmul.f32 %v576, %v592
  %v601 = vmul.f32 %v577, %v593
  %v602 = vmul.f32 %v578, %v594
  %v603 = vmul.f32 %v579, %v595
  %v604 = vsub.f32 %v470, %v516
  %v605 = vsub.f32 %v473, %v517
  %v606 = vsub.f32 %v478, %v518
  %v607 = vsub.f32 %v481, %v519
  %v608 = vsub.f32 %v486, %v520
  %v609 = vsub.f32 %v489, %v521
  %v610 = vsub.f32 %v494, %v522
  %v611 = vsub.f32 %v497, %v523
  %613 = vset.pattern.permute.xlu0 0
  %614 = vperm.xlu0 %613, %v596
  %v615 = vpop.permute.xlu0 %614
  %618 = vset.pattern.permute.xlu0 0
  %619 = vperm.xlu0 %618, %v597
  %v620 = vpop.permute.xlu0 %619
  %623 = vset.pattern.permute.xlu0 0
  %624 = vperm.xlu0 %623, %v598
  %v625 = vpop.permute.xlu0 %624
  %628 = vset.pattern.permute.xlu0 0
  %629 = vperm.xlu0 %628, %v599
  %v630 = vpop.permute.xlu0 %629
  %633 = vset.pattern.permute.xlu0 0
  %634 = vperm.xlu0 %633, %v600
  %v635 = vpop.permute.xlu0 %634
  %638 = vset.pattern.permute.xlu0 0
  %639 = vperm.xlu0 %638, %v601
  %v640 = vpop.permute.xlu0 %639
  %643 = vset.pattern.permute.xlu0 0
  %644 = vperm.xlu0 %643, %v602
  %v645 = vpop.permute.xlu0 %644
  %648 = vset.pattern.permute.xlu0 0
  %649 = vperm.xlu0 %648, %v603
  %v650 = vpop.permute.xlu0 %649
  %v652 = vmul.f32 %v604, %v615
  %v653 = vmul.f32 %v605, %v620
  %v654 = vmul.f32 %v606, %v625
  %v655 = vmul.f32 %v607, %v630
  %v656 = vmul.f32 %v608, %v635
  %v657 = vmul.f32 %v609, %v640
  %v658 = vmul.f32 %v610, %v645
  %v659 = vmul.f32 %v611, %v650
  %v660 = vld [vmem:[%s3] sm:$0xff]
  %v661 = vld [vmem:[%s3 + $0x8] sm:$0xff]
  %v662 = vld [vmem:[%s3 + $0x10] sm:$0xff]
  %v663 = vld [vmem:[%s3 + $0x18] sm:$0xff]
  %v664 = vld [vmem:[%s3 + $0x20] sm:$0xff]
  %v665 = vld [vmem:[%s3 + $0x28] sm:$0xff]
  %v666 = vld [vmem:[%s3 + $0x30] sm:$0xff]
  %v667 = vld [vmem:[%s3 + $0x38] sm:$0xff]
  %669 = vset.pattern.permute.xlu0 0
  %670 = vperm.xlu0 %669, %v660
  %v671 = vpop.permute.xlu0 %670
  %674 = vset.pattern.permute.xlu0 0
  %675 = vperm.xlu0 %674, %v661
  %v676 = vpop.permute.xlu0 %675
  %679 = vset.pattern.permute.xlu0 0
  %680 = vperm.xlu0 %679, %v662
  %v681 = vpop.permute.xlu0 %680
  %684 = vset.pattern.permute.xlu0 0
  %685 = vperm.xlu0 %684, %v663
  %v686 = vpop.permute.xlu0 %685
  %689 = vset.pattern.permute.xlu0 0
  %690 = vperm.xlu0 %689, %v664
  %v691 = vpop.permute.xlu0 %690
  %694 = vset.pattern.permute.xlu0 0
  %695 = vperm.xlu0 %694, %v665
  %v696 = vpop.permute.xlu0 %695
  %699 = vset.pattern.permute.xlu0 0
  %700 = vperm.xlu0 %699, %v666
  %v701 = vpop.permute.xlu0 %700
  %704 = vset.pattern.permute.xlu0 0
  %705 = vperm.xlu0 %704, %v667
  %v706 = vpop.permute.xlu0 %705
  %v708 = vadd.f32 %v652, %v671
  %v709 = vadd.f32 %v653, %v676
  %v710 = vadd.f32 %v654, %v681
  %v711 = vadd.f32 %v655, %v686
  %v712 = vadd.f32 %v656, %v691
  %v713 = vadd.f32 %v657, %v696
  %v714 = vadd.f32 %v658, %v701
  %v715 = vadd.f32 %v659, %v706
  %vm716 = vcmp.gt.f32.partialorder %v708, 0.0
  %vm717 = vcmp.gt.f32.partialorder %v709, 0.0
  %vm718 = vcmp.gt.f32.partialorder %v710, 0.0
  %vm719 = vcmp.gt.f32.partialorder %v711, 0.0
  %vm720 = vcmp.gt.f32.partialorder %v712, 0.0
  %vm721 = vcmp.gt.f32.partialorder %v713, 0.0
  %vm722 = vcmp.gt.f32.partialorder %v714, 0.0
  %vm723 = vcmp.gt.f32.partialorder %v715, 0.0
  %v724 = vmul.f32 %v708, 0.2
  %v725 = vmul.f32 %v709, 0.2
  %v726 = vmul.f32 %v710, 0.2
  %v727 = vmul.f32 %v711, 0.2
  %v728 = vmul.f32 %v712, 0.2
  %v729 = vmul.f32 %v713, 0.2
  %v730 = vmul.f32 %v714, 0.2
  %v731 = vmul.f32 %v715, 0.2
  %v732 = vsel %vm716, %v708, %v724
  %v733 = vsel %vm717, %v709, %v725
  %v734 = vsel %vm718, %v710, %v726
  %v735 = vsel %vm719, %v711, %v727
  %v736 = vsel %vm720, %v712, %v728
  %v737 = vsel %vm721, %v713, %v729
  %v738 = vsel %vm722, %v714, %v730
  %v739 = vsel %vm723, %v715, %v731
  %740 = vst [vmem:[%s4] sm:$0xff] %v732
  %741 = vst [vmem:[%s4 + $0x8] sm:$0xff] %v733
  %742 = vst [vmem:[%s4 + $0x10] sm:$0xff] %v734
  %743 = vst [vmem:[%s4 + $0x18] sm:$0xff] %v735
  %744 = vst [vmem:[%s4 + $0x20] sm:$0xff] %v736
  %745 = vst [vmem:[%s4 + $0x28] sm:$0xff] %v737
  %746 = vst [vmem:[%s4 + $0x30] sm:$0xff] %v738
  %747 = vst [vmem:[%s4 + $0x38] sm:$0xff] %v739
  // Predicated region
  $region18: #{discriminator_stage2.8} parent=0 // pred_check
    _
  $region19: #{discriminator_stage2.8} parent=0 // pred_check_branch
    %749 = sbr.rel (0) target = $region21
  $region20: #{discriminator_stage2.8} parent=0 // pred_region
    _
  $region21: #{discriminator_stage2.8} parent=0 // pred_fallthru
    _
  // Predicated region
  $region22: #{discriminator_stage2.8} parent=0 // pred_check
    _
  $region23: #{discriminator_stage2.8} parent=0 // pred_check_branch
    %751 = sbr.rel (0) target = $region25
  $region24: #{discriminator_stage2.8} parent=0 // pred_region
    _
  $region25: #{discriminator_stage2.8} parent=0 // pred_fallthru
    _

// kernel: discriminator_stage2.9
$region0: #{discriminator_stage2.9}
  #allocation0 [shape = 'u32[]', space=smem, size = 0x4, offset = 0x4, fixed_abs, tag = 'smem constant byte address 0x4 - core index']
  #allocation1 [shape = 'u32[144,128]{1,0:T(1,128)}', space=vmem, size = 0x12000, scoped, tag = 'internal scratch']
  %s0 = inlined_call_operand.vmem [shape: bf16[128,1024], index: 0, kind: input, shape index: {}]
  %s1 = inlined_call_operand.vmem [shape: bf16[1024,32], index: 1, kind: input, shape index: {}]
  %s2 = inlined_call_operand.vmem [shape: f32[128,1], index: 2, kind: input, shape index: {}]
  %s3 = inlined_call_operand.vmem [shape: f32[128,1], index: 3, kind: input, shape index: {}]
  %s4 = inlined_call_operand.vmem [shape: f32[128,32], index: 4, kind: input, shape index: {}]
  %s5 = inlined_call_operand.vmem [shape: f32[32,2], index: 5, kind: input, shape index: {}]
  %s6 = inlined_call_operand.hbm [shape: f32[1,2], index: 6, kind: output, shape index: {}]
  %s7 = sld [smem:[#allocation0]]
  $region34: #{discriminator_stage2.9} parent=0
    _
  %s9 = ssub.s32 1, %s7
  %s10 = scalar_select 0, %s9, %s7
  $region1: #{discriminator_stage2.9} parent=0
    #allocation2 [shape = 'u8[512]{0}', space=vmem, size = 0x400, scoped, tag = 'output window, operand 0, single buffered']
    #allocation3 [shape = 's32[1]{0}', space=sflag, size = 0x4, scoped, tag = 'scoped memory for discriminator_stage2.9']
    %11 = vsyncpa [#allocation3], 0
    // Predicated region
    $region2: #{discriminator_stage2.9} parent=1 // pred_check
      _
    $region3: #{discriminator_stage2.9} parent=1 // pred_check_branch
      %13 = sbr.rel (0) target = $region5
    $region4: #{discriminator_stage2.9} parent=1 // pred_region
      _
    $region5: #{discriminator_stage2.9} parent=1 // pred_fallthru
      _
    // Predicated region
    $region6: #{discriminator_stage2.9} parent=1 // pred_check
      _
    $region7: #{discriminator_stage2.9} parent=1 // pred_check_branch
      %15 = sbr.rel (0) target = $region9
    $region8: #{discriminator_stage2.9} parent=1 // pred_region
      _
    $region9: #{discriminator_stage2.9} parent=1 // pred_fallthru
      _
    // Predicated region
    $region10: #{discriminator_stage2.9} parent=1 // pred_check
      _
    $region11: #{discriminator_stage2.9} parent=1 // pred_check_branch
      %17 = sbr.rel (0) target = $region13
    $region12: #{discriminator_stage2.9} parent=1 // pred_region
      _
    $region13: #{discriminator_stage2.9} parent=1 // pred_fallthru
      _
    // Predicated region
    $region14: #{discriminator_stage2.9} parent=1 // pred_check
      _
    $region15: #{discriminator_stage2.9} parent=1 // pred_check_branch
      %19 = sbr.rel (0) target = $region17
    $region16: #{discriminator_stage2.9} parent=1 // pred_region
      _
    $region17: #{discriminator_stage2.9} parent=1 // pred_fallthru
      _
    // Predicated region
    $region18: #{discriminator_stage2.9} parent=1 // pred_check
      _
    $region19: #{discriminator_stage2.9} parent=1 // pred_check_branch
      %21 = sbr.rel (0) target = $region21
    $region20: #{discriminator_stage2.9} parent=1 // pred_region
      _
    $region21: #{discriminator_stage2.9} parent=1 // pred_fallthru
      _
    // Predicated region
    $region22: #{discriminator_stage2.9} parent=1 // pred_check
      _
    $region23: #{discriminator_stage2.9} parent=1 // pred_check_branch
      %23 = sbr.rel (0) target = $region25
    $region24: #{discriminator_stage2.9} parent=1 // pred_region
      _
    $region25: #{discriminator_stage2.9} parent=1 // pred_fallthru
      _
    %v25 = vld [vmem:[%s0] sm:$0xff]
    %v26 = vld [vmem:[%s0 + $0x8] sm:$0xff]
    %v27 = vld [vmem:[%s0 + $0x10] sm:$0xff]
    %v28 = vld [vmem:[%s0 + $0x18] sm:$0xff]
    %v29 = vld [vmem:[%s0 + $0x20] sm:$0xff]
    %v30 = vld [vmem:[%s0 + $0x28] sm:$0xff]
    %v31 = vld [vmem:[%s0 + $0x30] sm:$0xff]
    %v32 = vld [vmem:[%s0 + $0x38] sm:$0xff]
    %v33 = vld [vmem:[%s0 + $0x40] sm:$0xff]
    %v34 = vld [vmem:[%s0 + $0x48] sm:$0xff]
    %v35 = vld [vmem:[%s0 + $0x50] sm:$0xff]
    %v36 = vld [vmem:[%s0 + $0x58] sm:$0xff]
    %v37 = vld [vmem:[%s0 + $0x60] sm:$0xff]
    %v38 = vld [vmem:[%s0 + $0x68] sm:$0xff]
    %v39 = vld [vmem:[%s0 + $0x70] sm:$0xff]
    %v40 = vld [vmem:[%s0 + $0x78] sm:$0xff]
    %v41 = vld [vmem:[%s0 + $0x80] sm:$0xff]
    %v42 = vld [vmem:[%s0 + $0x88] sm:$0xff]
    %v43 = vld [vmem:[%s0 + $0x90] sm:$0xff]
    %v44 = vld [vmem:[%s0 + $0x98] sm:$0xff]
    %v45 = vld [vmem:[%s0 + $0xa0] sm:$0xff]
    %v46 = vld [vmem:[%s0 + $0xa8] sm:$0xff]
    %v47 = vld [vmem:[%s0 + $0xb0] sm:$0xff]
    %v48 = vld [vmem:[%s0 + $0xb8] sm:$0xff]
    %v49 = vld [vmem:[%s0 + $0xc0] sm:$0xff]
    %v50 = vld [vmem:[%s0 + $0xc8] sm:$0xff]
    %v51 = vld [vmem:[%s0 + $0xd0] sm:$0xff]
    %v52 = vld [vmem:[%s0 + $0xd8] sm:$0xff]
    %v53 = vld [vmem:[%s0 + $0xe0] sm:$0xff]
    %v54 = vld [vmem:[%s0 + $0xe8] sm:$0xff]
    %v55 = vld [vmem:[%s0 + $0xf0] sm:$0xff]
    %v56 = vld [vmem:[%s0 + $0xf8] sm:$0xff]
    %v57 = vld [vmem:[%s0 + $0x100] sm:$0xff]
    %v58 = vld [vmem:[%s0 + $0x108] sm:$0xff]
    %v59 = vld [vmem:[%s0 + $0x110] sm:$0xff]
    %v60 = vld [vmem:[%s0 + $0x118] sm:$0xff]
    %v61 = vld [vmem:[%s0 + $0x120] sm:$0xff]
    %v62 = vld [vmem:[%s0 + $0x128] sm:$0xff]
    %v63 = vld [vmem:[%s0 + $0x130] sm:$0xff]
    %v64 = vld [vmem:[%s0 + $0x138] sm:$0xff]
    %v65 = vld [vmem:[%s0 + $0x140] sm:$0xff]
    %v66 = vld [vmem:[%s0 + $0x148] sm:$0xff]
    %v67 = vld [vmem:[%s0 + $0x150] sm:$0xff]
    %v68 = vld [vmem:[%s0 + $0x158] sm:$0xff]
    %v69 = vld [vmem:[%s0 + $0x160] sm:$0xff]
    %v70 = vld [vmem:[%s0 + $0x168] sm:$0xff]
    %v71 = vld [vmem:[%s0 + $0x170] sm:$0xff]
    %v72 = vld [vmem:[%s0 + $0x178] sm:$0xff]
    %v73 = vld [vmem:[%s0 + $0x180] sm:$0xff]
    %v74 = vld [vmem:[%s0 + $0x188] sm:$0xff]
    %v75 = vld [vmem:[%s0 + $0x190] sm:$0xff]
    %v76 = vld [vmem:[%s0 + $0x198] sm:$0xff]
    %v77 = vld [vmem:[%s0 + $0x1a0] sm:$0xff]
    %v78 = vld [vmem:[%s0 + $0x1a8] sm:$0xff]
    %v79 = vld [vmem:[%s0 + $0x1b0] sm:$0xff]
    %v80 = vld [vmem:[%s0 + $0x1b8] sm:$0xff]
    %v81 = vld [vmem:[%s0 + $0x1c0] sm:$0xff]
    %v82 = vld [vmem:[%s0 + $0x1c8] sm:$0xff]
    %v83 = vld [vmem:[%s0 + $0x1d0] sm:$0xff]
    %v84 = vld [vmem:[%s0 + $0x1d8] sm:$0xff]
    %v85 = vld [vmem:[%s0 + $0x1e0] sm:$0xff]
    %v86 = vld [vmem:[%s0 + $0x1e8] sm:$0xff]
    %v87 = vld [vmem:[%s0 + $0x1f0] sm:$0xff]
    %v88 = vld [vmem:[%s0 + $0x1f8] sm:$0xff]
    %v89 = vld [vmem:[%s1] sm:$0xf]
    %v90 = vld [vmem:[%s1 + $0x4] sm:$0xf]
    %v91 = vld [vmem:[%s1 + $0x8] sm:$0xf]
    %v92 = vld [vmem:[%s1 + $0xc] sm:$0xf]
    %v93 = vld [vmem:[%s1 + $0x10] sm:$0xf]
    %v94 = vld [vmem:[%s1 + $0x14] sm:$0xf]
    %v95 = vld [vmem:[%s1 + $0x18] sm:$0xf]
    %v96 = vld [vmem:[%s1 + $0x1c] sm:$0xf]
    %v97 = vld [vmem:[%s1 + $0x20] sm:$0xf]
    %v98 = vld [vmem:[%s1 + $0x24] sm:$0xf]
    %v99 = vld [vmem:[%s1 + $0x28] sm:$0xf]
    %v100 = vld [vmem:[%s1 + $0x2c] sm:$0xf]
    %v101 = vld [vmem:[%s1 + $0x30] sm:$0xf]
    %v102 = vld [vmem:[%s1 + $0x34] sm:$0xf]
    %v103 = vld [vmem:[%s1 + $0x38] sm:$0xf]
    %v104 = vld [vmem:[%s1 + $0x3c] sm:$0xf]
    %v105 = vld [vmem:[%s1 + $0x40] sm:$0xf]
    %v106 = vld [vmem:[%s1 + $0x44] sm:$0xf]
    %v107 = vld [vmem:[%s1 + $0x48] sm:$0xf]
    %v108 = vld [vmem:[%s1 + $0x4c] sm:$0xf]
    %v109 = vld [vmem:[%s1 + $0x50] sm:$0xf]
    %v110 = vld [vmem:[%s1 + $0x54] sm:$0xf]
    %v111 = vld [vmem:[%s1 + $0x58] sm:$0xf]
    %v112 = vld [vmem:[%s1 + $0x5c] sm:$0xf]
    %v113 = vld [vmem:[%s1 + $0x60] sm:$0xf]
    %v114 = vld [vmem:[%s1 + $0x64] sm:$0xf]
    %v115 = vld [vmem:[%s1 + $0x68] sm:$0xf]
    %v116 = vld [vmem:[%s1 + $0x6c] sm:$0xf]
    %v117 = vld [vmem:[%s1 + $0x70] sm:$0xf]
    %v118 = vld [vmem:[%s1 + $0x74] sm:$0xf]
    %v119 = vld [vmem:[%s1 + $0x78] sm:$0xf]
    %v120 = vld [vmem:[%s1 + $0x7c] sm:$0xf]
    %v121 = vld [vmem:[%s1 + $0x80] sm:$0xf]
    %v122 = vld [vmem:[%s1 + $0x84] sm:$0xf]
    %v123 = vld [vmem:[%s1 + $0x88] sm:$0xf]
    %v124 = vld [vmem:[%s1 + $0x8c] sm:$0xf]
    %v125 = vld [vmem:[%s1 + $0x90] sm:$0xf]
    %v126 = vld [vmem:[%s1 + $0x94] sm:$0xf]
    %v127 = vld [vmem:[%s1 + $0x98] sm:$0xf]
    %v128 = vld [vmem:[%s1 + $0x9c] sm:$0xf]
    %v129 = vld [vmem:[%s1 + $0xa0] sm:$0xf]
    %v130 = vld [vmem:[%s1 + $0xa4] sm:$0xf]
    %v131 = vld [vmem:[%s1 + $0xa8] sm:$0xf]
    %v132 = vld [vmem:[%s1 + $0xac] sm:$0xf]
    %v133 = vld [vmem:[%s1 + $0xb0] sm:$0xf]
    %v134 = vld [vmem:[%s1 + $0xb4] sm:$0xf]
    %v135 = vld [vmem:[%s1 + $0xb8] sm:$0xf]
    %v136 = vld [vmem:[%s1 + $0xbc] sm:$0xf]
    %v137 = vld [vmem:[%s1 + $0xc0] sm:$0xf]
    %v138 = vld [vmem:[%s1 + $0xc4] sm:$0xf]
    %v139 = vld [vmem:[%s1 + $0xc8] sm:$0xf]
    %v140 = vld [vmem:[%s1 + $0xcc] sm:$0xf]
    %v141 = vld [vmem:[%s1 + $0xd0] sm:$0xf]
    %v142 = vld [vmem:[%s1 + $0xd4] sm:$0xf]
    %v143 = vld [vmem:[%s1 + $0xd8] sm:$0xf]
    %v144 = vld [vmem:[%s1 + $0xdc] sm:$0xf]
    %v145 = vld [vmem:[%s1 + $0xe0] sm:$0xf]
    %v146 = vld [vmem:[%s1 + $0xe4] sm:$0xf]
    %v147 = vld [vmem:[%s1 + $0xe8] sm:$0xf]
    %v148 = vld [vmem:[%s1 + $0xec] sm:$0xf]
    %v149 = vld [vmem:[%s1 + $0xf0] sm:$0xf]
    %v150 = vld [vmem:[%s1 + $0xf4] sm:$0xf]
    %v151 = vld [vmem:[%s1 + $0xf8] sm:$0xf]
    %v152 = vld [vmem:[%s1 + $0xfc] sm:$0xf]
    %v153 = vld [vmem:[%s1 + $0x100] sm:$0xf]
    %v154 = vld [vmem:[%s1 + $0x104] sm:$0xf]
    %v155 = vld [vmem:[%s1 + $0x108] sm:$0xf]
    %v156 = vld [vmem:[%s1 + $0x10c] sm:$0xf]
    %v157 = vld [vmem:[%s1 + $0x110] sm:$0xf]
    %v158 = vld [vmem:[%s1 + $0x114] sm:$0xf]
    %v159 = vld [vmem:[%s1 + $0x118] sm:$0xf]
    %v160 = vld [vmem:[%s1 + $0x11c] sm:$0xf]
    %v161 = vld [vmem:[%s1 + $0x120] sm:$0xf]
    %v162 = vld [vmem:[%s1 + $0x124] sm:$0xf]
    %v163 = vld [vmem:[%s1 + $0x128] sm:$0xf]
    %v164 = vld [vmem:[%s1 + $0x12c] sm:$0xf]
    %v165 = vld [vmem:[%s1 + $0x130] sm:$0xf]
    %v166 = vld [vmem:[%s1 + $0x134] sm:$0xf]
    %v167 = vld [vmem:[%s1 + $0x138] sm:$0xf]
    %v168 = vld [vmem:[%s1 + $0x13c] sm:$0xf]
    %v169 = vld [vmem:[%s1 + $0x140] sm:$0xf]
    %v170 = vld [vmem:[%s1 + $0x144] sm:$0xf]
    %v171 = vld [vmem:[%s1 + $0x148] sm:$0xf]
    %v172 = vld [vmem:[%s1 + $0x14c] sm:$0xf]
    %v173 = vld [vmem:[%s1 + $0x150] sm:$0xf]
    %v174 = vld [vmem:[%s1 + $0x154] sm:$0xf]
    %v175 = vld [vmem:[%s1 + $0x158] sm:$0xf]
    %v176 = vld [vmem:[%s1 + $0x15c] sm:$0xf]
    %v177 = vld [vmem:[%s1 + $0x160] sm:$0xf]
    %v178 = vld [vmem:[%s1 + $0x164] sm:$0xf]
    %v179 = vld [vmem:[%s1 + $0x168] sm:$0xf]
    %v180 = vld [vmem:[%s1 + $0x16c] sm:$0xf]
    %v181 = vld [vmem:[%s1 + $0x170] sm:$0xf]
    %v182 = vld [vmem:[%s1 + $0x174] sm:$0xf]
    %v183 = vld [vmem:[%s1 + $0x178] sm:$0xf]
    %v184 = vld [vmem:[%s1 + $0x17c] sm:$0xf]
    %v185 = vld [vmem:[%s1 + $0x180] sm:$0xf]
    %v186 = vld [vmem:[%s1 + $0x184] sm:$0xf]
    %v187 = vld [vmem:[%s1 + $0x188] sm:$0xf]
    %v188 = vld [vmem:[%s1 + $0x18c] sm:$0xf]
    %v189 = vld [vmem:[%s1 + $0x190] sm:$0xf]
    %v190 = vld [vmem:[%s1 + $0x194] sm:$0xf]
    %v191 = vld [vmem:[%s1 + $0x198] sm:$0xf]
    %v192 = vld [vmem:[%s1 + $0x19c] sm:$0xf]
    %v193 = vld [vmem:[%s1 + $0x1a0] sm:$0xf]
    %v194 = vld [vmem:[%s1 + $0x1a4] sm:$0xf]
    %v195 = vld [vmem:[%s1 + $0x1a8] sm:$0xf]
    %v196 = vld [vmem:[%s1 + $0x1ac] sm:$0xf]
    %v197 = vld [vmem:[%s1 + $0x1b0] sm:$0xf]
    %v198 = vld [vmem:[%s1 + $0x1b4] sm:$0xf]
    %v199 = vld [vmem:[%s1 + $0x1b8] sm:$0xf]
    %v200 = vld [vmem:[%s1 + $0x1bc] sm:$0xf]
    %v201 = vld [vmem:[%s1 + $0x1c0] sm:$0xf]
    %v202 = vld [vmem:[%s1 + $0x1c4] sm:$0xf]
    %v203 = vld [vmem:[%s1 + $0x1c8] sm:$0xf]
    %v204 = vld [vmem:[%s1 + $0x1cc] sm:$0xf]
    %v205 = vld [vmem:[%s1 + $0x1d0] sm:$0xf]
    %v206 = vld [vmem:[%s1 + $0x1d4] sm:$0xf]
    %v207 = vld [vmem:[%s1 + $0x1d8] sm:$0xf]
    %v208 = vld [vmem:[%s1 + $0x1dc] sm:$0xf]
    %v209 = vld [vmem:[%s1 + $0x1e0] sm:$0xf]
    %v210 = vld [vmem:[%s1 + $0x1e4] sm:$0xf]
    %v211 = vld [vmem:[%s1 + $0x1e8] sm:$0xf]
    %v212 = vld [vmem:[%s1 + $0x1ec] sm:$0xf]
    %v213 = vld [vmem:[%s1 + $0x1f0] sm:$0xf]
    %v214 = vld [vmem:[%s1 + $0x1f4] sm:$0xf]
    %v215 = vld [vmem:[%s1 + $0x1f8] sm:$0xf]
    %v216 = vld [vmem:[%s1 + $0x1fc] sm:$0xf]
    %v281 = vunpack.c.l.b16 %v25
    %v282 = vunpack.c.h.b16 %v25
    %v283 = vunpack.c.l.b16 %v26
    %v284 = vunpack.c.h.b16 %v26
    %v285 = vunpack.c.l.b16 %v27
    %v286 = vunpack.c.h.b16 %v27
    %v287 = vunpack.c.l.b16 %v28
    %v288 = vunpack.c.h.b16 %v28
    %v289 = vunpack.c.l.b16 %v29
    %v290 = vunpack.c.h.b16 %v29
    %v291 = vunpack.c.l.b16 %v30
    %v292 = vunpack.c.h.b16 %v30
    %v293 = vunpack.c.l.b16 %v31
    %v294 = vunpack.c.h.b16 %v31
    %v295 = vunpack.c.l.b16 %v32
    %v296 = vunpack.c.h.b16 %v32
    %v297 = vunpack.c.l.b16 %v33
    %v298 = vunpack.c.h.b16 %v33
    %v299 = vunpack.c.l.b16 %v34
    %v300 = vunpack.c.h.b16 %v34
    %v301 = vunpack.c.l.b16 %v35
    %v302 = vunpack.c.h.b16 %v35
    %v303 = vunpack.c.l.b16 %v36
    %v304 = vunpack.c.h.b16 %v36
    %v305 = vunpack.c.l.b16 %v37
    %v306 = vunpack.c.h.b16 %v37
    %v307 = vunpack.c.l.b16 %v38
    %v308 = vunpack.c.h.b16 %v38
    %v309 = vunpack.c.l.b16 %v39
    %v310 = vunpack.c.h.b16 %v39
    %v311 = vunpack.c.l.b16 %v40
    %v312 = vunpack.c.h.b16 %v40
    %v313 = vunpack.c.l.b16 %v41
    %v314 = vunpack.c.h.b16 %v41
    %v315 = vunpack.c.l.b16 %v42
    %v316 = vunpack.c.h.b16 %v42
    %v317 = vunpack.c.l.b16 %v43
    %v318 = vunpack.c.h.b16 %v43
    %v319 = vunpack.c.l.b16 %v44
    %v320 = vunpack.c.h.b16 %v44
    %v321 = vunpack.c.l.b16 %v45
    %v322 = vunpack.c.h.b16 %v45
    %v323 = vunpack.c.l.b16 %v46
    %v324 = vunpack.c.h.b16 %v46
    %v325 = vunpack.c.l.b16 %v47
    %v326 = vunpack.c.h.b16 %v47
    %v327 = vunpack.c.l.b16 %v48
    %v328 = vunpack.c.h.b16 %v48
    %v329 = vunpack.c.l.b16 %v49
    %v330 = vunpack.c.h.b16 %v49
    %v331 = vunpack.c.l.b16 %v50
    %v332 = vunpack.c.h.b16 %v50
    %v333 = vunpack.c.l.b16 %v51
    %v334 = vunpack.c.h.b16 %v51
    %v335 = vunpack.c.l.b16 %v52
    %v336 = vunpack.c.h.b16 %v52
    %v337 = vunpack.c.l.b16 %v53
    %v338 = vunpack.c.h.b16 %v53
    %v339 = vunpack.c.l.b16 %v54
    %v340 = vunpack.c.h.b16 %v54
    %v341 = vunpack.c.l.b16 %v55
    %v342 = vunpack.c.h.b16 %v55
    %v343 = vunpack.c.l.b16 %v56
    %v344 = vunpack.c.h.b16 %v56
    %v345 = vunpack.c.l.b16 %v57
    %v346 = vunpack.c.h.b16 %v57
    %v347 = vunpack.c.l.b16 %v58
    %v348 = vunpack.c.h.b16 %v58
    %v349 = vunpack.c.l.b16 %v59
    %v350 = vunpack.c.h.b16 %v59
    %v351 = vunpack.c.l.b16 %v60
    %v352 = vunpack.c.h.b16 %v60
    %v353 = vunpack.c.l.b16 %v61
    %v354 = vunpack.c.h.b16 %v61
    %v355 = vunpack.c.l.b16 %v62
    %v356 = vunpack.c.h.b16 %v62
    %v357 = vunpack.c.l.b16 %v63
    %v358 = vunpack.c.h.b16 %v63
    %v359 = vunpack.c.l.b16 %v64
    %v360 = vunpack.c.h.b16 %v64
    %v361 = vunpack.c.l.b16 %v65
    %v362 = vunpack.c.h.b16 %v65
    %v363 = vunpack.c.l.b16 %v66
    %v364 = vunpack.c.h.b16 %v66
    %v365 = vunpack.c.l.b16 %v67
    %v366 = vunpack.c.h.b16 %v67
    %v367 = vunpack.c.l.b16 %v68
    %v368 = vunpack.c.h.b16 %v68
    %v369 = vunpack.c.l.b16 %v69
    %v370 = vunpack.c.h.b16 %v69
    %v371 = vunpack.c.l.b16 %v70
    %v372 = vunpack.c.h.b16 %v70
    %v373 = vunpack.c.l.b16 %v71
    %v374 = vunpack.c.h.b16 %v71
    %v375 = vunpack.c.l.b16 %v72
    %v376 = vunpack.c.h.b16 %v72
    %v377 = vunpack.c.l.b16 %v73
    %v378 = vunpack.c.h.b16 %v73
    %v379 = vunpack.c.l.b16 %v74
    %v380 = vunpack.c.h.b16 %v74
    %v381 = vunpack.c.l.b16 %v75
    %v382 = vunpack.c.h.b16 %v75
    %v383 = vunpack.c.l.b16 %v76
    %v384 = vunpack.c.h.b16 %v76
    %v385 = vunpack.c.l.b16 %v77
    %v386 = vunpack.c.h.b16 %v77
    %v387 = vunpack.c.l.b16 %v78
    %v388 = vunpack.c.h.b16 %v78
    %v389 = vunpack.c.l.b16 %v79
    %v390 = vunpack.c.h.b16 %v79
    %v391 = vunpack.c.l.b16 %v80
    %v392 = vunpack.c.h.b16 %v80
    %v393 = vunpack.c.l.b16 %v81
    %v394 = vunpack.c.h.b16 %v81
    %v395 = vunpack.c.l.b16 %v82
    %v396 = vunpack.c.h.b16 %v82
    %v397 = vunpack.c.l.b16 %v83
    %v398 = vunpack.c.h.b16 %v83
    %v399 = vunpack.c.l.b16 %v84
    %v400 = vunpack.c.h.b16 %v84
    %v401 = vunpack.c.l.b16 %v85
    %v402 = vunpack.c.h.b16 %v85
    %v403 = vunpack.c.l.b16 %v86
    %v404 = vunpack.c.h.b16 %v86
    %v405 = vunpack.c.l.b16 %v87
    %v406 = vunpack.c.h.b16 %v87
    %v407 = vunpack.c.l.b16 %v88
    %v408 = vunpack.c.h.b16 %v88
    %v409 = vpack.c.b16 %v289, %v281
    %v410 = vpack.c.b16 %v290, %v282
    %v411 = vpack.c.b16 %v291, %v283
    %v412 = vpack.c.b16 %v292, %v284
    %v413 = vpack.c.b16 %v293, %v285
    %v414 = vpack.c.b16 %v294, %v286
    %v415 = vpack.c.b16 %v295, %v287
    %v416 = vpack.c.b16 %v296, %v288
    %v417 = vpack.c.b16 %v305, %v297
    %v418 = vpack.c.b16 %v306, %v298
    %v419 = vpack.c.b16 %v307, %v299
    %v420 = vpack.c.b16 %v308, %v300
    %v421 = vpack.c.b16 %v309, %v301
    %v422 = vpack.c.b16 %v310, %v302
    %v423 = vpack.c.b16 %v311, %v303
    %v424 = vpack.c.b16 %v312, %v304
    %v425 = vpack.c.b16 %v321, %v313
    %v426 = vpack.c.b16 %v322, %v314
    %v427 = vpack.c.b16 %v323, %v315
    %v428 = vpack.c.b16 %v324, %v316
    %v429 = vpack.c.b16 %v325, %v317
    %v430 = vpack.c.b16 %v326, %v318
    %v431 = vpack.c.b16 %v327, %v319
    %v432 = vpack.c.b16 %v328, %v320
    %v433 = vpack.c.b16 %v337, %v329
    %v434 = vpack.c.b16 %v338, %v330
    %v435 = vpack.c.b16 %v339, %v331
    %v436 = vpack.c.b16 %v340, %v332
    %v437 = vpack.c.b16 %v341, %v333
    %v438 = vpack.c.b16 %v342, %v334
    %v439 = vpack.c.b16 %v343, %v335
    %v440 = vpack.c.b16 %v344, %v336
    %v441 = vpack.c.b16 %v353, %v345
    %v442 = vpack.c.b16 %v354, %v346
    %v443 = vpack.c.b16 %v355, %v347
    %v444 = vpack.c.b16 %v356, %v348
    %v445 = vpack.c.b16 %v357, %v349
    %v446 = vpack.c.b16 %v358, %v350
    %v447 = vpack.c.b16 %v359, %v351
    %v448 = vpack.c.b16 %v360, %v352
    %v449 = vpack.c.b16 %v369, %v361
    %v450 = vpack.c.b16 %v370, %v362
    %v451 = vpack.c.b16 %v371, %v363
    %v452 = vpack.c.b16 %v372, %v364
    %v453 = vpack.c.b16 %v373, %v365
    %v454 = vpack.c.b16 %v374, %v366
    %v455 = vpack.c.b16 %v375, %v367
    %v456 = vpack.c.b16 %v376, %v368
    %v457 = vpack.c.b16 %v385, %v377
    %v458 = vpack.c.b16 %v386, %v378
    %v459 = vpack.c.b16 %v387, %v379
    %v460 = vpack.c.b16 %v388, %v380
    %v461 = vpack.c.b16 %v389, %v381
    %v462 = vpack.c.b16 %v390, %v382
    %v463 = vpack.c.b16 %v391, %v383
    %v464 = vpack.c.b16 %v392, %v384
    %v465 = vpack.c.b16 %v401, %v393
    %v466 = vpack.c.b16 %v402, %v394
    %v467 = vpack.c.b16 %v403, %v395
    %v468 = vpack.c.b16 %v404, %v396
    %v469 = vpack.c.b16 %v405, %v397
    %v470 = vpack.c.b16 %v406, %v398
    %v471 = vpack.c.b16 %v407, %v399
    %v472 = vpack.c.b16 %v408, %v400
    %v665 = vunpack.c.l.b16 %v89
    %v666 = vunpack.c.l.b16 %v90
    %v667 = vunpack.c.l.b16 %v91
    %v668 = vunpack.c.l.b16 %v92
    %v669 = vunpack.c.l.b16 %v93
    %v670 = vunpack.c.l.b16 %v94
    %v671 = vunpack.c.l.b16 %v95
    %v672 = vunpack.c.l.b16 %v96
    %v673 = vunpack.c.l.b16 %v97
    %v674 = vunpack.c.l.b16 %v98
    %v675 = vunpack.c.l.b16 %v99
    %v676 = vunpack.c.l.b16 %v100
    %v677 = vunpack.c.l.b16 %v101
    %v678 = vunpack.c.l.b16 %v102
    %v679 = vunpack.c.l.b16 %v103
    %v680 = vunpack.c.l.b16 %v104
    %v681 = vunpack.c.l.b16 %v105
    %v682 = vunpack.c.l.b16 %v106
    %v683 = vunpack.c.l.b16 %v107
    %v684 = vunpack.c.l.b16 %v108
    %v685 = vunpack.c.l.b16 %v109
    %v686 = vunpack.c.l.b16 %v110
    %v687 = vunpack.c.l.b16 %v111
    %v688 = vunpack.c.l.b16 %v112
    %v689 = vunpack.c.l.b16 %v113
    %v690 = vunpack.c.l.b16 %v114
    %v691 = vunpack.c.l.b16 %v115
    %v692 = vunpack.c.l.b16 %v116
    %v693 = vunpack.c.l.b16 %v117
    %v694 = vunpack.c.l.b16 %v118
    %v695 = vunpack.c.l.b16 %v119
    %v696 = vunpack.c.l.b16 %v120
    %v697 = vunpack.c.l.b16 %v121
    %v698 = vunpack.c.l.b16 %v122
    %v699 = vunpack.c.l.b16 %v123
    %v700 = vunpack.c.l.b16 %v124
    %v701 = vunpack.c.l.b16 %v125
    %v702 = vunpack.c.l.b16 %v126
    %v703 = vunpack.c.l.b16 %v127
    %v704 = vunpack.c.l.b16 %v128
    %v705 = vunpack.c.l.b16 %v129
    %v706 = vunpack.c.l.b16 %v130
    %v707 = vunpack.c.l.b16 %v131
    %v708 = vunpack.c.l.b16 %v132
    %v709 = vunpack.c.l.b16 %v133
    %v710 = vunpack.c.l.b16 %v134
    %v711 = vunpack.c.l.b16 %v135
    %v712 = vunpack.c.l.b16 %v136
    %v713 = vunpack.c.l.b16 %v137
    %v714 = vunpack.c.l.b16 %v138
    %v715 = vunpack.c.l.b16 %v139
    %v716 = vunpack.c.l.b16 %v140
    %v717 = vunpack.c.l.b16 %v141
    %v718 = vunpack.c.l.b16 %v142
    %v719 = vunpack.c.l.b16 %v143
    %v720 = vunpack.c.l.b16 %v144
    %v721 = vunpack.c.l.b16 %v145
    %v722 = vunpack.c.l.b16 %v146
    %v723 = vunpack.c.l.b16 %v147
    %v724 = vunpack.c.l.b16 %v148
    %v725 = vunpack.c.l.b16 %v149
    %v726 = vunpack.c.l.b16 %v150
    %v727 = vunpack.c.l.b16 %v151
    %v728 = vunpack.c.l.b16 %v152
    %v729 = vunpack.c.l.b16 %v153
    %v730 = vunpack.c.l.b16 %v154
    %v731 = vunpack.c.l.b16 %v155
    %v732 = vunpack.c.l.b16 %v156
    %v733 = vunpack.c.l.b16 %v157
    %v734 = vunpack.c.l.b16 %v158
    %v735 = vunpack.c.l.b16 %v159
    %v736 = vunpack.c.l.b16 %v160
    %v737 = vunpack.c.l.b16 %v161
    %v738 = vunpack.c.l.b16 %v162
    %v739 = vunpack.c.l.b16 %v163
    %v740 = vunpack.c.l.b16 %v164
    %v741 = vunpack.c.l.b16 %v165
    %v742 = vunpack.c.l.b16 %v166
    %v743 = vunpack.c.l.b16 %v167
    %v744 = vunpack.c.l.b16 %v168
    %v745 = vunpack.c.l.b16 %v169
    %v746 = vunpack.c.l.b16 %v170
    %v747 = vunpack.c.l.b16 %v171
    %v748 = vunpack.c.l.b16 %v172
    %v749 = vunpack.c.l.b16 %v173
    %v750 = vunpack.c.l.b16 %v174
    %v751 = vunpack.c.l.b16 %v175
    %v752 = vunpack.c.l.b16 %v176
    %v753 = vunpack.c.l.b16 %v177
    %v754 = vunpack.c.l.b16 %v178
    %v755 = vunpack.c.l.b16 %v179
    %v756 = vunpack.c.l.b16 %v180
    %v757 = vunpack.c.l.b16 %v181
    %v758 = vunpack.c.l.b16 %v182
    %v759 = vunpack.c.l.b16 %v183
    %v760 = vunpack.c.l.b16 %v184
    %v761 = vunpack.c.l.b16 %v185
    %v762 = vunpack.c.l.b16 %v186
    %v763 = vunpack.c.l.b16 %v187
    %v764 = vunpack.c.l.b16 %v188
    %v765 = vunpack.c.l.b16 %v189
    %v766 = vunpack.c.l.b16 %v190
    %v767 = vunpack.c.l.b16 %v191
    %v768 = vunpack.c.l.b16 %v192
    %v769 = vunpack.c.l.b16 %v193
    %v770 = vunpack.c.l.b16 %v194
    %v771 = vunpack.c.l.b16 %v195
    %v772 = vunpack.c.l.b16 %v196
    %v773 = vunpack.c.l.b16 %v197
    %v774 = vunpack.c.l.b16 %v198
    %v775 = vunpack.c.l.b16 %v199
    %v776 = vunpack.c.l.b16 %v200
    %v777 = vunpack.c.l.b16 %v201
    %v778 = vunpack.c.l.b16 %v202
    %v779 = vunpack.c.l.b16 %v203
    %v780 = vunpack.c.l.b16 %v204
    %v781 = vunpack.c.l.b16 %v205
    %v782 = vunpack.c.l.b16 %v206
    %v783 = vunpack.c.l.b16 %v207
    %v784 = vunpack.c.l.b16 %v208
    %v785 = vunpack.c.l.b16 %v209
    %v786 = vunpack.c.l.b16 %v210
    %v787 = vunpack.c.l.b16 %v211
    %v788 = vunpack.c.l.b16 %v212
    %v789 = vunpack.c.l.b16 %v213
    %v790 = vunpack.c.l.b16 %v214
    %v791 = vunpack.c.l.b16 %v215
    %v792 = vunpack.c.l.b16 %v216
    %v793 = vpack.c.b16 %v666, %v665
    %v794 = vpack.c.b16 %v668, %v667
    %v795 = vpack.c.b16 %v670, %v669
    %v796 = vpack.c.b16 %v672, %v671
    %v797 = vpack.c.b16 %v674, %v673
    %v798 = vpack.c.b16 %v676, %v675
    %v799 = vpack.c.b16 %v678, %v677
    %v800 = vpack.c.b16 %v680, %v679
    %v801 = vpack.c.b16 %v682, %v681
    %v802 = vpack.c.b16 %v684, %v683
    %v803 = vpack.c.b16 %v686, %v685
    %v804 = vpack.c.b16 %v688, %v687
    %v805 = vpack.c.b16 %v690, %v689
    %v806 = vpack.c.b16 %v692, %v691
    %v807 = vpack.c.b16 %v694, %v693
    %v808 = vpack.c.b16 %v696, %v695
    %v809 = vpack.c.b16 %v698, %v697
    %v810 = vpack.c.b16 %v700, %v699
    %v811 = vpack.c.b16 %v702, %v701
    %v812 = vpack.c.b16 %v704, %v703
    %v813 = vpack.c.b16 %v706, %v705
    %v814 = vpack.c.b16 %v708, %v707
    %v815 = vpack.c.b16 %v710, %v709
    %v816 = vpack.c.b16 %v712, %v711
    %v817 = vpack.c.b16 %v714, %v713
    %v818 = vpack.c.b16 %v716, %v715
    %v819 = vpack.c.b16 %v718, %v717
    %v820 = vpack.c.b16 %v720, %v719
    %v821 = vpack.c.b16 %v722, %v721
    %v822 = vpack.c.b16 %v724, %v723
    %v823 = vpack.c.b16 %v726, %v725
    %v824 = vpack.c.b16 %v728, %v727
    %v825 = vpack.c.b16 %v730, %v729
    %v826 = vpack.c.b16 %v732, %v731
    %v827 = vpack.c.b16 %v734, %v733
    %v828 = vpack.c.b16 %v736, %v735
    %v829 = vpack.c.b16 %v738, %v737
    %v830 = vpack.c.b16 %v740, %v739
    %v831 = vpack.c.b16 %v742, %v741
    %v832 = vpack.c.b16 %v744, %v743
    %v833 = vpack.c.b16 %v746, %v745
    %v834 = vpack.c.b16 %v748, %v747
    %v835 = vpack.c.b16 %v750, %v749
    %v836 = vpack.c.b16 %v752, %v751
    %v837 = vpack.c.b16 %v754, %v753
    %v838 = vpack.c.b16 %v756, %v755
    %v839 = vpack.c.b16 %v758, %v757
    %v840 = vpack.c.b16 %v760, %v759
    %v841 = vpack.c.b16 %v762, %v761
    %v842 = vpack.c.b16 %v764, %v763
    %v843 = vpack.c.b16 %v766, %v765
    %v844 = vpack.c.b16 %v768, %v767
    %v845 = vpack.c.b16 %v770, %v769
    %v846 = vpack.c.b16 %v772, %v771
    %v847 = vpack.c.b16 %v774, %v773
    %v848 = vpack.c.b16 %v776, %v775
    %v849 = vpack.c.b16 %v778, %v777
    %v850 = vpack.c.b16 %v780, %v779
    %v851 = vpack.c.b16 %v782, %v781
    %v852 = vpack.c.b16 %v784, %v783
    %v853 = vpack.c.b16 %v786, %v785
    %v854 = vpack.c.b16 %v788, %v787
    %v855 = vpack.c.b16 %v790, %v789
    %v856 = vpack.c.b16 %v792, %v791
    %921 = vmatprep.subr.bf16.mxu0 0
    %922 = vmatpush1.bf16.msra.mxu0 %v793
    %923 = vmatprep.subr.bf16.mxu0 0
    %924 = vmatpush1.bf16.msra.mxu0 %v794
    %925 = vmatprep.subr.bf16.mxu0 0
    %926 = vmatpush1.bf16.msra.mxu0 %v795
    %927 = vmatprep.subr.bf16.mxu0 0
    %928 = vmatpush1.bf16.msra.mxu0 %v796
    %929 = vmatprep.subr.bf16.mxu0 0
    %930 = vmatpush1.bf16.msra.mxu0 %v797
    %931 = vmatprep.subr.bf16.mxu0 0
    %932 = vmatpush1.bf16.msra.mxu0 %v798
    %933 = vmatprep.subr.bf16.mxu0 0
    %934 = vmatpush1.bf16.msra.mxu0 %v799
    %935 = vmatprep.subr.bf16.mxu0 0
    %936 = vmatpush1.bf16.msra.mxu0 %v800
    %937 = vmatprep.subr.bf16.mxu0 0
    %938 = vmatpush1.bf16.msra.mxu0 %v801
    %939 = vmatprep.subr.bf16.mxu0 0
    %940 = vmatpush1.bf16.msra.mxu0 %v802
    %941 = vmatprep.subr.bf16.mxu0 0
    %942 = vmatpush1.bf16.msra.mxu0 %v803
    %943 = vmatprep.subr.bf16.mxu0 0
    %944 = vmatpush1.bf16.msra.mxu0 %v804
    %945 = vmatprep.subr.bf16.mxu0 0
    %946 = vmatpush1.bf16.msra.mxu0 %v805
    %947 = vmatprep.subr.bf16.mxu0 0
    %948 = vmatpush1.bf16.msra.mxu0 %v806
    %949 = vmatprep.subr.bf16.mxu0 0
    %950 = vmatpush1.bf16.msra.mxu0 %v807
    %951 = vmatprep.subr.bf16.mxu0 0
    %952 = vmatpush1.bf16.msra.mxu0 %v808
    %953 = vmatprep.mubr.bf16.mxu0 %v410
    %954 = vmatmul.mubr.bf16.gmra.mrb[0].mxu0 %v409
    %v955 = vpop.f32.mrb[0].mxu0
    %v956 = vadd.f32 0.0, %v955
    %v957 = vpop.f32.mrb[0].mxu0
    %v958 = vpop.f32.mrb[0].mxu0
    %v959 = vadd.f32 0.0, %v958
    %v960 = vpop.f32.mrb[0].mxu0
    %961 = vmatprep.mubr.bf16.mxu0 %v418
    %962 = vmatmul.mubr.bf16.gmra.mrb[0].mxu0 %v417
    %v963 = vpop.f32.mrb[0].mxu0
    %v964 = vadd.f32 0.0, %v963
    %v965 = vpop.f32.mrb[0].mxu0
    %v966 = vpop.f32.mrb[0].mxu0
    %v967 = vadd.f32 0.0, %v966
    %v968 = vpop.f32.mrb[0].mxu0
    %969 = vmatprep.mubr.bf16.mxu0 %v426
    %970 = vmatmul.mubr.bf16.gmra.mrb[0].mxu0 %v425
    %v971 = vpop.f32.mrb[0].mxu0
    %v972 = vadd.f32 0.0, %v971
    %v973 = vpop.f32.mrb[0].mxu0
    %v974 = vpop.f32.mrb[0].mxu0
    %v975 = vadd.f32 0.0, %v974
    %v976 = vpop.f32.mrb[0].mxu0
    %977 = vmatprep.mubr.bf16.mxu0 %v434
    %978 = vmatmul.mubr.bf16.gmra.mrb[0].mxu0 %v433
    %v979 = vpop.f32.mrb[0].mxu0
    %v980 = vadd.f32 0.0, %v979
    %v981 = vpop.f32.mrb[0].mxu0
    %v982 = vpop.f32.mrb[0].mxu0
    %v983 = vadd.f32 0.0, %v982
    %v984 = vpop.f32.mrb[0].mxu0
    %985 = vmatprep.mubr.bf16.mxu0 %v442
    %986 = vmatmul.mubr.bf16.gmra.mrb[0].mxu0 %v441
    %v987 = vpop.f32.mrb[0].mxu0
    %v988 = vadd.f32 0.0, %v987
    %v989 = vpop.f32.mrb[0].mxu0
    %v990 = vpop.f32.mrb[0].mxu0
    %v991 = vadd.f32 0.0, %v990
    %v992 = vpop.f32.mrb[0].mxu0
    %993 = vmatprep.mubr.bf16.mxu0 %v450
    %994 = vmatmul.mubr.bf16.gmra.mrb[0].mxu0 %v449
    %v995 = vpop.f32.mrb[0].mxu0
    %v996 = vadd.f32 0.0, %v995
    %v997 = vpop.f32.mrb[0].mxu0
    %v998 = vpop.f32.mrb[0].mxu0
    %v999 = vadd.f32 0.0, %v998
    %v1000 = vpop.f32.mrb[0].mxu0
    %1001 = vmatprep.mubr.bf16.mxu0 %v458
    %1002 = vmatmul.mubr.bf16.gmra.mrb[0].mxu0 %v457
    %v1003 = vpop.f32.mrb[0].mxu0
    %v1004 = vadd.f32 0.0, %v1003
    %v1005 = vpop.f32.mrb[0].mxu0
    %v1006 = vpop.f32.mrb[0].mxu0
    %v1007 = vadd.f32 0.0, %v1006
    %v1008 = vpop.f32.mrb[0].mxu0
    %1009 = vmatprep.mubr.bf16.mxu0 %v466
    %1010 = vmatmul.mubr.bf16.gmra.mrb[0].mxu0 %v465
    %v1011 = vpop.f32.mrb[0].mxu0
    %v1012 = vadd.f32 0.0, %v1011
    %v1013 = vpop.f32.mrb[0].mxu0
    %v1014 = vpop.f32.mrb[0].mxu0
    %v1015 = vadd.f32 0.0, %v1014
    %v1016 = vpop.f32.mrb[0].mxu0
    %1017 = vdwg.mxu0
    %1018 = vmatprep.subr.bf16.mxu0 0
    %1019 = vmatpush1.bf16.msra.mxu0 %v809
    %1020 = vmatprep.subr.bf16.mxu0 0
    %1021 = vmatpush1.bf16.msra.mxu0 %v810
    %1022 = vmatprep.subr.bf16.mxu0 0
    %1023 = vmatpush1.bf16.msra.mxu0 %v811
    %1024 = vmatprep.subr.bf16.mxu0 0
    %1025 = vmatpush1.bf16.msra.mxu0 %v812
    %1026 = vmatprep.subr.bf16.mxu0 0
    %1027 = vmatpush1.bf16.msra.mxu0 %v813
    %1028 = vmatprep.subr.bf16.mxu0 0
    %1029 = vmatpush1.bf16.msra.mxu0 %v814
    %1030 = vmatprep.subr.bf16.mxu0 0
    %1031 = vmatpush1.bf16.msra.mxu0 %v815
    %1032 = vmatprep.subr.bf16.mxu0 0
    %1033 = vmatpush1.bf16.msra.mxu0 %v816
    %1034 = vmatprep.subr.bf16.mxu0 0
    %1035 = vmatpush1.bf16.msra.mxu0 %v817
    %1036 = vmatprep.subr.bf16.mxu0 0
    %1037 = vmatpush1.bf16.msra.mxu0 %v818
    %1038 = vmatprep.subr.bf16.mxu0 0
    %1039 = vmatpush1.bf16.msra.mxu0 %v819
    %1040 = vmatprep.subr.bf16.mxu0 0
    %1041 = vmatpush1.bf16.msra.mxu0 %v820
    %1042 = vmatprep.subr.bf16.mxu0 0
    %1043 = vmatpush1.bf16.msra.mxu0 %v821
    %1044 = vmatprep.subr.bf16.mxu0 0
    %1045 = vmatpush1.bf16.msra.mxu0 %v822
    %1046 = vmatprep.subr.bf16.mxu0 0
    %1047 = vmatpush1.bf16.msra.mxu0 %v823
    %1048 = vmatprep.subr.bf16.mxu0 0
    %1049 = vmatpush1.bf16.msra.mxu0 %v824
    %1050 = vmatprep.mubr.bf16.mxu0 %v412
    %1051 = vmatmul.mubr.bf16.gmra.mrb[0].mxu0 %v411
    %v1052 = vpop.f32.mrb[0].mxu0
    %v1053 = vadd.f32 %v956, %v1052
    %v1054 = vpop.f32.mrb[0].mxu0
    %v1055 = vpop.f32.mrb[0].mxu0
    %v1056 = vadd.f32 %v959, %v1055
    %v1057 = vpop.f32.mrb[0].mxu0
    %1058 = vmatprep.mubr.bf16.mxu0 %v420
    %1059 = vmatmul.mubr.bf16.gmra.mrb[0].mxu0 %v419
    %v1060 = vpop.f32.mrb[0].mxu0
    %v1061 = vadd.f32 %v964, %v1060
    %v1062 = vpop.f32.mrb[0].mxu0
    %v1063 = vpop.f32.mrb[0].mxu0
    %v1064 = vadd.f32 %v967, %v1063
    %v1065 = vpop.f32.mrb[0].mxu0
    %1066 = vmatprep.mubr.bf16.mxu0 %v428
    %1067 = vmatmul.mubr.bf16.gmra.mrb[0].mxu0 %v427
    %v1068 = vpop.f32.mrb[0].mxu0
    %v1069 = vadd.f32 %v972, %v1068
    %v1070 = vpop.f32.mrb[0].mxu0
    %v1071 = vpop.f32.mrb[0].mxu0
    %v1072 = vadd.f32 %v975, %v1071
    %v1073 = vpop.f32.mrb[0].mxu0
    %1074 = vmatprep.mubr.bf16.mxu0 %v436
    %1075 = vmatmul.mubr.bf16.gmra.mrb[0].mxu0 %v435
    %v1076 = vpop.f32.mrb[0].mxu0
    %v1077 = vadd.f32 %v980, %v1076
    %v1078 = vpop.f32.mrb[0].mxu0
    %v1079 = vpop.f32.mrb[0].mxu0
    %v1080 = vadd.f32 %v983, %v1079
    %v1081 = vpop.f32.mrb[0].mxu0
    %1082 = vmatprep.mubr.bf16.mxu0 %v444
    %1083 = vmatmul.mubr.bf16.gmra.mrb[0].mxu0 %v443
    %v1084 = vpop.f32.mrb[0].mxu0
    %v1085 = vadd.f32 %v988, %v1084
    %v1086 = vpop.f32.mrb[0].mxu0
    %v1087 = vpop.f32.mrb[0].mxu0
    %v1088 = vadd.f32 %v991, %v1087
    %v1089 = vpop.f32.mrb[0].mxu0
    %1090 = vmatprep.mubr.bf16.mxu0 %v452
    %1091 = vmatmul.mubr.bf16.gmra.mrb[0].mxu0 %v451
    %v1092 = vpop.f32.mrb[0].mxu0
    %v1093 = vadd.f32 %v996, %v1092
    %v1094 = vpop.f32.mrb[0].mxu0
    %v1095 = vpop.f32.mrb[0].mxu0
    %v1096 = vadd.f32 %v999, %v1095
    %v1097 = vpop.f32.mrb[0].mxu0
    %1098 = vmatprep.mubr.bf16.mxu0 %v460
    %1099 = vmatmul.mubr.bf16.gmra.mrb[0].mxu0 %v459
    %v1100 = vpop.f32.mrb[0].mxu0
    %v1101 = vadd.f32 %v1004, %v1100
    %v1102 = vpop.f32.mrb[0].mxu0
    %v1103 = vpop.f32.mrb[0].mxu0
    %v1104 = vadd.f32 %v1007, %v1103
    %v1105 = vpop.f32.mrb[0].mxu0
    %1106 = vmatprep.mubr.bf16.mxu0 %v468
    %1107 = vmatmul.mubr.bf16.gmra.mrb[0].mxu0 %v467
    %v1108 = vpop.f32.mrb[0].mxu0
    %v1109 = vadd.f32 %v1012, %v1108
    %v1110 = vpop.f32.mrb[0].mxu0
    %v1111 = vpop.f32.mrb[0].mxu0
    %v1112 = vadd.f32 %v1015, %v1111
    %v1113 = vpop.f32.mrb[0].mxu0
    %1114 = vdwg.mxu0
    %1115 = vmatprep.subr.bf16.mxu0 0
    %1116 = vmatpush1.bf16.msra.mxu0 %v825
    %1117 = vmatprep.subr.bf16.mxu0 0
    %1118 = vmatpush1.bf16.msra.mxu0 %v826
    %1119 = vmatprep.subr.bf16.mxu0 0
    %1120 = vmatpush1.bf16.msra.mxu0 %v827
    %1121 = vmatprep.subr.bf16.mxu0 0
    %1122 = vmatpush1.bf16.msra.mxu0 %v828
    %1123 = vmatprep.subr.bf16.mxu0 0
    %1124 = vmatpush1.bf16.msra.mxu0 %v829
    %1125 = vmatprep.subr.bf16.mxu0 0
    %1126 = vmatpush1.bf16.msra.mxu0 %v830
    %1127 = vmatprep.subr.bf16.mxu0 0
    %1128 = vmatpush1.bf16.msra.mxu0 %v831
    %1129 = vmatprep.subr.bf16.mxu0 0
    %1130 = vmatpush1.bf16.msra.mxu0 %v832
    %1131 = vmatprep.subr.bf16.mxu0 0
    %1132 = vmatpush1.bf16.msra.mxu0 %v833
    %1133 = vmatprep.subr.bf16.mxu0 0
    %1134 = vmatpush1.bf16.msra.mxu0 %v834
    %1135 = vmatprep.subr.bf16.mxu0 0
    %1136 = vmatpush1.bf16.msra.mxu0 %v835
    %1137 = vmatprep.subr.bf16.mxu0 0
    %1138 = vmatpush1.bf16.msra.mxu0 %v836
    %1139 = vmatprep.subr.bf16.mxu0 0
    %1140 = vmatpush1.bf16.msra.mxu0 %v837
    %1141 = vmatprep.subr.bf16.mxu0 0
    %1142 = vmatpush1.bf16.msra.mxu0 %v838
    %1143 = vmatprep.subr.bf16.mxu0 0
    %1144 = vmatpush1.bf16.msra.mxu0 %v839
    %1145 = vmatprep.subr.bf16.mxu0 0
    %1146 = vmatpush1.bf16.msra.mxu0 %v840
    %1147 = vmatprep.mubr.bf16.mxu0 %v414
    %1148 = vmatmul.mubr.bf16.gmra.mrb[0].mxu0 %v413
    %v1149 = vpop.f32.mrb[0].mxu0
    %v1150 = vadd.f32 %v1053, %v1149
    %v1151 = vpop.f32.mrb[0].mxu0
    %v1152 = vpop.f32.mrb[0].mxu0
    %v1153 = vadd.f32 %v1056, %v1152
    %v1154 = vpop.f32.mrb[0].mxu0
    %1155 = vmatprep.mubr.bf16.mxu0 %v422
    %1156 = vmatmul.mubr.bf16.gmra.mrb[0].mxu0 %v421
    %v1157 = vpop.f32.mrb[0].mxu0
    %v1158 = vadd.f32 %v1061, %v1157
    %v1159 = vpop.f32.mrb[0].mxu0
    %v1160 = vpop.f32.mrb[0].mxu0
    %v1161 = vadd.f32 %v1064, %v1160
    %v1162 = vpop.f32.mrb[0].mxu0
    %1163 = vmatprep.mubr.bf16.mxu0 %v430
    %1164 = vmatmul.mubr.bf16.gmra.mrb[0].mxu0 %v429
    %v1165 = vpop.f32.mrb[0].mxu0
    %v1166 = vadd.f32 %v1069, %v1165
    %v1167 = vpop.f32.mrb[0].mxu0
    %v1168 = vpop.f32.mrb[0].mxu0
    %v1169 = vadd.f32 %v1072, %v1168
    %v1170 = vpop.f32.mrb[0].mxu0
    %1171 = vmatprep.mubr.bf16.mxu0 %v438
    %1172 = vmatmul.mubr.bf16.gmra.mrb[0].mxu0 %v437
    %v1173 = vpop.f32.mrb[0].mxu0
    %v1174 = vadd.f32 %v1077, %v1173
    %v1175 = vpop.f32.mrb[0].mxu0
    %v1176 = vpop.f32.mrb[0].mxu0
    %v1177 = vadd.f32 %v1080, %v1176
    %v1178 = vpop.f32.mrb[0].mxu0
    %1179 = vmatprep.mubr.bf16.mxu0 %v446
    %1180 = vmatmul.mubr.bf16.gmra.mrb[0].mxu0 %v445
    %v1181 = vpop.f32.mrb[0].mxu0
    %v1182 = vadd.f32 %v1085, %v1181
    %v1183 = vpop.f32.mrb[0].mxu0
    %v1184 = vpop.f32.mrb[0].mxu0
    %v1185 = vadd.f32 %v1088, %v1184
    %v1186 = vpop.f32.mrb[0].mxu0
    %1187 = vmatprep.mubr.bf16.mxu0 %v454
    %1188 = vmatmul.mubr.bf16.gmra.mrb[0].mxu0 %v453
    %v1189 = vpop.f32.mrb[0].mxu0
    %v1190 = vadd.f32 %v1093, %v1189
    %v1191 = vpop.f32.mrb[0].mxu0
    %v1192 = vpop.f32.mrb[0].mxu0
    %v1193 = vadd.f32 %v1096, %v1192
    %v1194 = vpop.f32.mrb[0].mxu0
    %1195 = vmatprep.mubr.bf16.mxu0 %v462
    %1196 = vmatmul.mubr.bf16.gmra.mrb[0].mxu0 %v461
    %v1197 = vpop.f32.mrb[0].mxu0
    %v1198 = vadd.f32 %v1101, %v1197
    %v1199 = vpop.f32.mrb[0].mxu0
    %v1200 = vpop.f32.mrb[0].mxu0
    %v1201 = vadd.f32 %v1104, %v1200
    %v1202 = vpop.f32.mrb[0].mxu0
    %1203 = vmatprep.mubr.bf16.mxu0 %v470
    %1204 = vmatmul.mubr.bf16.gmra.mrb[0].mxu0 %v469
    %v1205 = vpop.f32.mrb[0].mxu0
    %v1206 = vadd.f32 %v1109, %v1205
    %v1207 = vpop.f32.mrb[0].mxu0
    %v1208 = vpop.f32.mrb[0].mxu0
    %v1209 = vadd.f32 %v1112, %v1208
    %v1210 = vpop.f32.mrb[0].mxu0
    %1211 = vdwg.mxu0
    %1212 = vmatprep.subr.bf16.mxu0 0
    %1213 = vmatpush1.bf16.msra.mxu0 %v841
    %1214 = vmatprep.subr.bf16.mxu0 0
    %1215 = vmatpush1.bf16.msra.mxu0 %v842
    %1216 = vmatprep.subr.bf16.mxu0 0
    %1217 = vmatpush1.bf16.msra.mxu0 %v843
    %1218 = vmatprep.subr.bf16.mxu0 0
    %1219 = vmatpush1.bf16.msra.mxu0 %v844
    %1220 = vmatprep.subr.bf16.mxu0 0
    %1221 = vmatpush1.bf16.msra.mxu0 %v845
    %1222 = vmatprep.subr.bf16.mxu0 0
    %1223 = vmatpush1.bf16.msra.mxu0 %v846
    %1224 = vmatprep.subr.bf16.mxu0 0
    %1225 = vmatpush1.bf16.msra.mxu0 %v847
    %1226 = vmatprep.subr.bf16.mxu0 0
    %1227 = vmatpush1.bf16.msra.mxu0 %v848
    %1228 = vmatprep.subr.bf16.mxu0 0
    %1229 = vmatpush1.bf16.msra.mxu0 %v849
    %1230 = vmatprep.subr.bf16.mxu0 0
    %1231 = vmatpush1.bf16.msra.mxu0 %v850
    %1232 = vmatprep.subr.bf16.mxu0 0
    %1233 = vmatpush1.bf16.msra.mxu0 %v851
    %1234 = vmatprep.subr.bf16.mxu0 0
    %1235 = vmatpush1.bf16.msra.mxu0 %v852
    %1236 = vmatprep.subr.bf16.mxu0 0
    %1237 = vmatpush1.bf16.msra.mxu0 %v853
    %1238 = vmatprep.subr.bf16.mxu0 0
    %1239 = vmatpush1.bf16.msra.mxu0 %v854
    %1240 = vmatprep.subr.bf16.mxu0 0
    %1241 = vmatpush1.bf16.msra.mxu0 %v855
    %1242 = vmatprep.subr.bf16.mxu0 0
    %1243 = vmatpush1.bf16.msra.mxu0 %v856
    %1244 = vmatprep.mubr.bf16.mxu0 %v416
    %1245 = vmatmul.mubr.bf16.gmra.mrb[0].mxu0 %v415
    %v1246 = vpop.f32.mrb[0].mxu0
    %v1247 = vadd.f32 %v1150, %v1246
    %v1248 = vpop.f32.mrb[0].mxu0
    %v1249 = vpop.f32.mrb[0].mxu0
    %v1250 = vadd.f32 %v1153, %v1249
    %v1251 = vpop.f32.mrb[0].mxu0
    %1252 = vmatprep.mubr.bf16.mxu0 %v424
    %1253 = vmatmul.mubr.bf16.gmra.mrb[0].mxu0 %v423
    %v1254 = vpop.f32.mrb[0].mxu0
    %v1255 = vadd.f32 %v1158, %v1254
    %v1256 = vpop.f32.mrb[0].mxu0
    %v1257 = vpop.f32.mrb[0].mxu0
    %v1258 = vadd.f32 %v1161, %v1257
    %v1259 = vpop.f32.mrb[0].mxu0
    %1260 = vmatprep.mubr.bf16.mxu0 %v432
    %1261 = vmatmul.mubr.bf16.gmra.mrb[0].mxu0 %v431
    %v1262 = vpop.f32.mrb[0].mxu0
    %v1263 = vadd.f32 %v1166, %v1262
    %v1264 = vpop.f32.mrb[0].mxu0
    %v1265 = vpop.f32.mrb[0].mxu0
    %v1266 = vadd.f32 %v1169, %v1265
    %v1267 = vpop.f32.mrb[0].mxu0
    %1268 = vmatprep.mubr.bf16.mxu0 %v440
    %1269 = vmatmul.mubr.bf16.gmra.mrb[0].mxu0 %v439
    %v1270 = vpop.f32.mrb[0].mxu0
    %v1271 = vadd.f32 %v1174, %v1270
    %v1272 = vpop.f32.mrb[0].mxu0
    %v1273 = vpop.f32.mrb[0].mxu0
    %v1274 = vadd.f32 %v1177, %v1273
    %v1275 = vpop.f32.mrb[0].mxu0
    %1276 = vmatprep.mubr.bf16.mxu0 %v448
    %1277 = vmatmul.mubr.bf16.gmra.mrb[0].mxu0 %v447
    %v1278 = vpop.f32.mrb[0].mxu0
    %v1279 = vadd.f32 %v1182, %v1278
    %v1280 = vpop.f32.mrb[0].mxu0
    %v1281 = vpop.f32.mrb[0].mxu0
    %v1282 = vadd.f32 %v1185, %v1281
    %v1283 = vpop.f32.mrb[0].mxu0
    %1284 = vmatprep.mubr.bf16.mxu0 %v456
    %1285 = vmatmul.mubr.bf16.gmra.mrb[0].mxu0 %v455
    %v1286 = vpop.f32.mrb[0].mxu0
    %v1287 = vadd.f32 %v1190, %v1286
    %v1288 = vpop.f32.mrb[0].mxu0
    %v1289 = vpop.f32.mrb[0].mxu0
    %v1290 = vadd.f32 %v1193, %v1289
    %v1291 = vpop.f32.mrb[0].mxu0
    %1292 = vmatprep.mubr.bf16.mxu0 %v464
    %1293 = vmatmul.mubr.bf16.gmra.mrb[0].mxu0 %v463
    %v1294 = vpop.f32.mrb[0].mxu0
    %v1295 = vadd.f32 %v1198, %v1294
    %v1296 = vpop.f32.mrb[0].mxu0
    %v1297 = vpop.f32.mrb[0].mxu0
    %v1298 = vadd.f32 %v1201, %v1297
    %v1299 = vpop.f32.mrb[0].mxu0
    %1300 = vmatprep.mubr.bf16.mxu0 %v472
    %1301 = vmatmul.mubr.bf16.gmra.mrb[0].mxu0 %v471
    %v1302 = vpop.f32.mrb[0].mxu0
    %v1303 = vadd.f32 %v1206, %v1302
    %v1304 = vpop.f32.mrb[0].mxu0
    %v1305 = vpop.f32.mrb[0].mxu0
    %v1306 = vadd.f32 %v1209, %v1305
    %v1307 = vpop.f32.mrb[0].mxu0
    %1308 = vdwg.mxu0
    %vm1309 = vcmask 261120
    %v1310 = vsel %vm1309, %v1247, 0.0
    %1311 = vadd.xlane.f32.xlu0 %v1310
    %v1312 = vpop.xlane.xlu0 %1311
    %v1313 = vsel %vm1309, %v1250, 0.0
    %1314 = vadd.xlane.f32.xlu0 %v1313
    %v1315 = vpop.xlane.xlu0 %1314
    %v1316 = vsel %vm1309, %v1255, 0.0
    %1317 = vadd.xlane.f32.xlu0 %v1316
    %v1318 = vpop.xlane.xlu0 %1317
    %v1319 = vsel %vm1309, %v1258, 0.0
    %1320 = vadd.xlane.f32.xlu0 %v1319
    %v1321 = vpop.xlane.xlu0 %1320
    %v1322 = vsel %vm1309, %v1263, 0.0
    %1323 = vadd.xlane.f32.xlu0 %v1322
    %v1324 = vpop.xlane.xlu0 %1323
    %v1325 = vsel %vm1309, %v1266, 0.0
    %1326 = vadd.xlane.f32.xlu0 %v1325
    %v1327 = vpop.xlane.xlu0 %1326
    %v1328 = vsel %vm1309, %v1271, 0.0
    %1329 = vadd.xlane.f32.xlu0 %v1328
    %v1330 = vpop.xlane.xlu0 %1329
    %v1331 = vsel %vm1309, %v1274, 0.0
    %1332 = vadd.xlane.f32.xlu0 %v1331
    %v1333 = vpop.xlane.xlu0 %1332
    %v1334 = vsel %vm1309, %v1279, 0.0
    %1335 = vadd.xlane.f32.xlu0 %v1334
    %v1336 = vpop.xlane.xlu0 %1335
    %v1337 = vsel %vm1309, %v1282, 0.0
    %1338 = vadd.xlane.f32.xlu0 %v1337
    %v1339 = vpop.xlane.xlu0 %1338
    %v1340 = vsel %vm1309, %v1287, 0.0
    %1341 = vadd.xlane.f32.xlu0 %v1340
    %v1342 = vpop.xlane.xlu0 %1341
    %v1343 = vsel %vm1309, %v1290, 0.0
    %1344 = vadd.xlane.f32.xlu0 %v1343
    %v1345 = vpop.xlane.xlu0 %1344
    %v1346 = vsel %vm1309, %v1295, 0.0
    %1347 = vadd.xlane.f32.xlu0 %v1346
    %v1348 = vpop.xlane.xlu0 %1347
    %v1349 = vsel %vm1309, %v1298, 0.0
    %1350 = vadd.xlane.f32.xlu0 %v1349
    %v1351 = vpop.xlane.xlu0 %1350
    %v1352 = vsel %vm1309, %v1303, 0.0
    %1353 = vadd.xlane.f32.xlu0 %v1352
    %v1354 = vpop.xlane.xlu0 %1353
    %v1355 = vsel %vm1309, %v1306, 0.0
    %1356 = vadd.xlane.f32.xlu0 %v1355
    %v1357 = vpop.xlane.xlu0 %1356
    %v1358 = vmul.f32 %v1312, 0.03125
    %v1359 = vmul.f32 %v1315, 0.03125
    %v1360 = vmul.f32 %v1318, 0.03125
    %v1361 = vmul.f32 %v1321, 0.03125
    %v1362 = vmul.f32 %v1324, 0.03125
    %v1363 = vmul.f32 %v1327, 0.03125
    %v1364 = vmul.f32 %v1330, 0.03125
    %v1365 = vmul.f32 %v1333, 0.03125
    %v1366 = vmul.f32 %v1336, 0.03125
    %v1367 = vmul.f32 %v1339, 0.03125
    %v1368 = vmul.f32 %v1342, 0.03125
    %v1369 = vmul.f32 %v1345, 0.03125
    %v1370 = vmul.f32 %v1348, 0.03125
    %v1371 = vmul.f32 %v1351, 0.03125
    %v1372 = vmul.f32 %v1354, 0.03125
    %v1373 = vmul.f32 %v1357, 0.03125
    %v1374 = vmul.f32 %v1247, %v1247
    %v1375 = vmul.f32 %v1250, %v1250
    %v1376 = vmul.f32 %v1255, %v1255
    %v1377 = vmul.f32 %v1258, %v1258
    %v1378 = vmul.f32 %v1263, %v1263
    %v1379 = vmul.f32 %v1266, %v1266
    %v1380 = vmul.f32 %v1271, %v1271
    %v1381 = vmul.f32 %v1274, %v1274
    %v1382 = vmul.f32 %v1279, %v1279
    %v1383 = vmul.f32 %v1282, %v1282
    %v1384 = vmul.f32 %v1287, %v1287
    %v1385 = vmul.f32 %v1290, %v1290
    %v1386 = vmul.f32 %v1295, %v1295
    %v1387 = vmul.f32 %v1298, %v1298
    %v1388 = vmul.f32 %v1303, %v1303
    %v1389 = vmul.f32 %v1306, %v1306
    %v1390 = vsel %vm1309, %v1374, 0.0
    %1391 = vadd.xlane.f32.xlu0 %v1390
    %v1392 = vpop.xlane.xlu0 %1391
    %v1393 = vsel %vm1309, %v1375, 0.0
    %1394 = vadd.xlane.f32.xlu0 %v1393
    %v1395 = vpop.xlane.xlu0 %1394
    %v1396 = vsel %vm1309, %v1376, 0.0
    %1397 = vadd.xlane.f32.xlu0 %v1396
    %v1398 = vpop.xlane.xlu0 %1397
    %v1399 = vsel %vm1309, %v1377, 0.0
    %1400 = vadd.xlane.f32.xlu0 %v1399
    %v1401 = vpop.xlane.xlu0 %1400
    %v1402 = vsel %vm1309, %v1378, 0.0
    %1403 = vadd.xlane.f32.xlu0 %v1402
    %v1404 = vpop.xlane.xlu0 %1403
    %v1405 = vsel %vm1309, %v1379, 0.0
    %1406 = vadd.xlane.f32.xlu0 %v1405
    %v1407 = vpop.xlane.xlu0 %1406
    %v1408 = vsel %vm1309, %v1380, 0.0
    %1409 = vadd.xlane.f32.xlu0 %v1408
    %v1410 = vpop.xlane.xlu0 %1409
    %v1411 = vsel %vm1309, %v1381, 0.0
    %1412 = vadd.xlane.f32.xlu0 %v1411
    %v1413 = vpop.xlane.xlu0 %1412
    %v1414 = vsel %vm1309, %v1382, 0.0
    %1415 = vadd.xlane.f32.xlu0 %v1414
    %v1416 = vpop.xlane.xlu0 %1415
    %v1417 = vsel %vm1309, %v1383, 0.0
    %1418 = vadd.xlane.f32.xlu0 %v1417
    %v1419 = vpop.xlane.xlu0 %1418
    %v1420 = vsel %vm1309, %v1384, 0.0
    %1421 = vadd.xlane.f32.xlu0 %v1420
    %v1422 = vpop.xlane.xlu0 %1421
    %v1423 = vsel %vm1309, %v1385, 0.0
    %1424 = vadd.xlane.f32.xlu0 %v1423
    %v1425 = vpop.xlane.xlu0 %1424
    %v1426 = vsel %vm1309, %v1386, 0.0
    %1427 = vadd.xlane.f32.xlu0 %v1426
    %v1428 = vpop.xlane.xlu0 %1427
    %v1429 = vsel %vm1309, %v1387, 0.0
    %1430 = vadd.xlane.f32.xlu0 %v1429
    %v1431 = vpop.xlane.xlu0 %1430
    %v1432 = vsel %vm1309, %v1388, 0.0
    %1433 = vadd.xlane.f32.xlu0 %v1432
    %v1434 = vpop.xlane.xlu0 %1433
    %v1435 = vsel %vm1309, %v1389, 0.0
    %1436 = vadd.xlane.f32.xlu0 %v1435
    %v1437 = vpop.xlane.xlu0 %1436
    %v1438 = vmul.f32 %v1392, 0.03125
    %v1439 = vmul.f32 %v1395, 0.03125
    %v1440 = vmul.f32 %v1398, 0.03125
    %v1441 = vmul.f32 %v1401, 0.03125
    %v1442 = vmul.f32 %v1404, 0.03125
    %v1443 = vmul.f32 %v1407, 0.03125
    %v1444 = vmul.f32 %v1410, 0.03125
    %v1445 = vmul.f32 %v1413, 0.03125
    %v1446 = vmul.f32 %v1416, 0.03125
    %v1447 = vmul.f32 %v1419, 0.03125
    %v1448 = vmul.f32 %v1422, 0.03125
    %v1449 = vmul.f32 %v1425, 0.03125
    %v1450 = vmul.f32 %v1428, 0.03125
    %v1451 = vmul.f32 %v1431, 0.03125
    %v1452 = vmul.f32 %v1434, 0.03125
    %v1453 = vmul.f32 %v1437, 0.03125
    %v1454 = vmul.f32 %v1358, %v1358
    %v1455 = vmul.f32 %v1359, %v1359
    %v1456 = vmul.f32 %v1360, %v1360
    %v1457 = vmul.f32 %v1361, %v1361
    %v1458 = vmul.f32 %v1362, %v1362
    %v1459 = vmul.f32 %v1363, %v1363
    %v1460 = vmul.f32 %v1364, %v1364
    %v1461 = vmul.f32 %v1365, %v1365
    %v1462 = vmul.f32 %v1366, %v1366
    %v1463 = vmul.f32 %v1367, %v1367
    %v1464 = vmul.f32 %v1368, %v1368
    %v1465 = vmul.f32 %v1369, %v1369
    %v1466 = vmul.f32 %v1370, %v1370
    %v1467 = vmul.f32 %v1371, %v1371
    %v1468 = vmul.f32 %v1372, %v1372
    %v1469 = vmul.f32 %v1373, %v1373
    %v1470 = vsub.f32 %v1438, %v1454
    %v1471 = vsub.f32 %v1439, %v1455
    %v1472 = vsub.f32 %v1440, %v1456
    %v1473 = vsub.f32 %v1441, %v1457
    %v1474 = vsub.f32 %v1442, %v1458
    %v1475 = vsub.f32 %v1443, %v1459
    %v1476 = vsub.f32 %v1444, %v1460
    %v1477 = vsub.f32 %v1445, %v1461
    %v1478 = vsub.f32 %v1446, %v1462
    %v1479 = vsub.f32 %v1447, %v1463
    %v1480 = vsub.f32 %v1448, %v1464
    %v1481 = vsub.f32 %v1449, %v1465
    %v1482 = vsub.f32 %v1450, %v1466
    %v1483 = vsub.f32 %v1451, %v1467
    %v1484 = vsub.f32 %v1452, %v1468
    %v1485 = vsub.f32 %v1453, %v1469
    %v1486 = vld [vmem:[%s2] sm:$0xff]
    %v1487 = vld [vmem:[%s2 + $0x8] sm:$0xff]
    %v1488 = vld [vmem:[%s2 + $0x10] sm:$0xff]
    %v1489 = vld [vmem:[%s2 + $0x18] sm:$0xff]
    %v1490 = vld [vmem:[%s2 + $0x20] sm:$0xff]
    %v1491 = vld [vmem:[%s2 + $0x28] sm:$0xff]
    %v1492 = vld [vmem:[%s2 + $0x30] sm:$0xff]
    %v1493 = vld [vmem:[%s2 + $0x38] sm:$0xff]
    %v1494 = vld [vmem:[%s2 + $0x40] sm:$0xff]
    %v1495 = vld [vmem:[%s2 + $0x48] sm:$0xff]
    %v1496 = vld [vmem:[%s2 + $0x50] sm:$0xff]
    %v1497 = vld [vmem:[%s2 + $0x58] sm:$0xff]
    %v1498 = vld [vmem:[%s2 + $0x60] sm:$0xff]
    %v1499 = vld [vmem:[%s2 + $0x68] sm:$0xff]
    %v1500 = vld [vmem:[%s2 + $0x70] sm:$0xff]
    %v1501 = vld [vmem:[%s2 + $0x78] sm:$0xff]
    %v1502 = vadd.f32 %v1470, 1e-05
    %v1503 = vadd.f32 %v1471, 1e-05
    %v1504 = vadd.f32 %v1472, 1e-05
    %v1505 = vadd.f32 %v1473, 1e-05
    %v1506 = vadd.f32 %v1474, 1e-05
    %v1507 = vadd.f32 %v1475, 1e-05
    %v1508 = vadd.f32 %v1476, 1e-05
    %v1509 = vadd.f32 %v1477, 1e-05
    %v1510 = vadd.f32 %v1478, 1e-05
    %v1511 = vadd.f32 %v1479, 1e-05
    %v1512 = vadd.f32 %v1480, 1e-05
    %v1513 = vadd.f32 %v1481, 1e-05
    %v1514 = vadd.f32 %v1482, 1e-05
    %v1515 = vadd.f32 %v1483, 1e-05
    %v1516 = vadd.f32 %v1484, 1e-05
    %v1517 = vadd.f32 %v1485, 1e-05
    %v1518 = vrsqrt.pop %v1502
    %v1519 = vrsqrt.pop %v1503
    %v1520 = vrsqrt.pop %v1504
    %v1521 = vrsqrt.pop %v1505
    %v1522 = vrsqrt.pop %v1506
    %v1523 = vrsqrt.pop %v1507
    %v1524 = vrsqrt.pop %v1508
    %v1525 = vrsqrt.pop %v1509
    %v1526 = vrsqrt.pop %v1510
    %v1527 = vrsqrt.pop %v1511
    %v1528 = vrsqrt.pop %v1512
    %v1529 = vrsqrt.pop %v1513
    %v1530 = vrsqrt.pop %v1514
    %v1531 = vrsqrt.pop %v1515
    %v1532 = vrsqrt.pop %v1516
    %v1533 = vrsqrt.pop %v1517
    %v1534 = vmul.f32 %v1486, %v1518
    %v1535 = vmul.f32 %v1487, %v1519
    %v1536 = vmul.f32 %v1488, %v1520
    %v1537 = vmul.f32 %v1489, %v1521
    %v1538 = vmul.f32 %v1490, %v1522
    %v1539 = vmul.f32 %v1491, %v1523
    %v1540 = vmul.f32 %v1492, %v1524
    %v1541 = vmul.f32 %v1493, %v1525
    %v1542 = vmul.f32 %v1494, %v1526
    %v1543 = vmul.f32 %v1495, %v1527
    %v1544 = vmul.f32 %v1496, %v1528
    %v1545 = vmul.f32 %v1497, %v1529
    %v1546 = vmul.f32 %v1498, %v1530
    %v1547 = vmul.f32 %v1499, %v1531
    %v1548 = vmul.f32 %v1500, %v1532
    %v1549 = vmul.f32 %v1501, %v1533
    %v1550 = vsub.f32 %v1247, %v1358
    %v1551 = vsub.f32 %v1250, %v1359
    %v1552 = vsub.f32 %v1255, %v1360
    %v1553 = vsub.f32 %v1258, %v1361
    %v1554 = vsub.f32 %v1263, %v1362
    %v1555 = vsub.f32 %v1266, %v1363
    %v1556 = vsub.f32 %v1271, %v1364
    %v1557 = vsub.f32 %v1274, %v1365
    %v1558 = vsub.f32 %v1279, %v1366
    %v1559 = vsub.f32 %v1282, %v1367
    %v1560 = vsub.f32 %v1287, %v1368
    %v1561 = vsub.f32 %v1290, %v1369
    %v1562 = vsub.f32 %v1295, %v1370
    %v1563 = vsub.f32 %v1298, %v1371
    %v1564 = vsub.f32 %v1303, %v1372
    %v1565 = vsub.f32 %v1306, %v1373
    %1567 = vset.pattern.permute.xlu0 0
    %1568 = vperm.xlu0 %1567, %v1534
    %v1569 = vpop.permute.xlu0 %1568
    %1572 = vset.pattern.permute.xlu0 0
    %1573 = vperm.xlu0 %1572, %v1535
    %v1574 = vpop.permute.xlu0 %1573
    %1577 = vset.pattern.permute.xlu0 0
    %1578 = vperm.xlu0 %1577, %v1536
    %v1579 = vpop.permute.xlu0 %1578
    %1582 = vset.pattern.permute.xlu0 0
    %1583 = vperm.xlu0 %1582, %v1537
    %v1584 = vpop.permute.xlu0 %1583
    %1587 = vset.pattern.permute.xlu0 0
    %1588 = vperm.xlu0 %1587, %v1538
    %v1589 = vpop.permute.xlu0 %1588
    %1592 = vset.pattern.permute.xlu0 0
    %1593 = vperm.xlu0 %1592, %v1539
    %v1594 = vpop.permute.xlu0 %1593
    %1597 = vset.pattern.permute.xlu0 0
    %1598 = vperm.xlu0 %1597, %v1540
    %v1599 = vpop.permute.xlu0 %1598
    %1602 = vset.pattern.permute.xlu0 0
    %1603 = vperm.xlu0 %1602, %v1541
    %v1604 = vpop.permute.xlu0 %1603
    %1607 = vset.pattern.permute.xlu0 0
    %1608 = vperm.xlu0 %1607, %v1542
    %v1609 = vpop.permute.xlu0 %1608
    %1612 = vset.pattern.permute.xlu0 0
    %1613 = vperm.xlu0 %1612, %v1543
    %v1614 = vpop.permute.xlu0 %1613
    %1617 = vset.pattern.permute.xlu0 0
    %1618 = vperm.xlu0 %1617, %v1544
    %v1619 = vpop.permute.xlu0 %1618
    %1622 = vset.pattern.permute.xlu0 0
    %1623 = vperm.xlu0 %1622, %v1545
    %v1624 = vpop.permute.xlu0 %1623
    %1627 = vset.pattern.permute.xlu0 0
    %1628 = vperm.xlu0 %1627, %v1546
    %v1629 = vpop.permute.xlu0 %1628
    %1632 = vset.pattern.permute.xlu0 0
    %1633 = vperm.xlu0 %1632, %v1547
    %v1634 = vpop.permute.xlu0 %1633
    %1637 = vset.pattern.permute.xlu0 0
    %1638 = vperm.xlu0 %1637, %v1548
    %v1639 = vpop.permute.xlu0 %1638
    %1642 = vset.pattern.permute.xlu0 0
    %1643 = vperm.xlu0 %1642, %v1549
    %v1644 = vpop.permute.xlu0 %1643
    %v1646 = vmul.f32 %v1550, %v1569
    %v1647 = vmul.f32 %v1551, %v1574
    %v1648 = vmul.f32 %v1552, %v1579
    %v1649 = vmul.f32 %v1553, %v1584
    %v1650 = vmul.f32 %v1554, %v1589
    %v1651 = vmul.f32 %v1555, %v1594
    %v1652 = vmul.f32 %v1556, %v1599
    %v1653 = vmul.f32 %v1557, %v1604
    %v1654 = vmul.f32 %v1558, %v1609
    %v1655 = vmul.f32 %v1559, %v1614
    %v1656 = vmul.f32 %v1560, %v1619
    %v1657 = vmul.f32 %v1561, %v1624
    %v1658 = vmul.f32 %v1562, %v1629
    %v1659 = vmul.f32 %v1563, %v1634
    %v1660 = vmul.f32 %v1564, %v1639
    %v1661 = vmul.f32 %v1565, %v1644
    %v1662 = vld [vmem:[%s3] sm:$0xff]
    %v1663 = vld [vmem:[%s3 + $0x8] sm:$0xff]
    %v1664 = vld [vmem:[%s3 + $0x10] sm:$0xff]
    %v1665 = vld [vmem:[%s3 + $0x18] sm:$0xff]
    %v1666 = vld [vmem:[%s3 + $0x20] sm:$0xff]
    %v1667 = vld [vmem:[%s3 + $0x28] sm:$0xff]
    %v1668 = vld [vmem:[%s3 + $0x30] sm:$0xff]
    %v1669 = vld [vmem:[%s3 + $0x38] sm:$0xff]
    %v1670 = vld [vmem:[%s3 + $0x40] sm:$0xff]
    %v1671 = vld [vmem:[%s3 + $0x48] sm:$0xff]
    %v1672 = vld [vmem:[%s3 + $0x50] sm:$0xff]
    %v1673 = vld [vmem:[%s3 + $0x58] sm:$0xff]
    %v1674 = vld [vmem:[%s3 + $0x60] sm:$0xff]
    %v1675 = vld [vmem:[%s3 + $0x68] sm:$0xff]
    %v1676 = vld [vmem:[%s3 + $0x70] sm:$0xff]
    %v1677 = vld [vmem:[%s3 + $0x78] sm:$0xff]
    %1679 = vset.pattern.permute.xlu0 0
    %1680 = vperm.xlu0 %1679, %v1662
    %v1681 = vpop.permute.xlu0 %1680
    %1684 = vset.pattern.permute.xlu0 0
    %1685 = vperm.xlu0 %1684, %v1663
    %v1686 = vpop.permute.xlu0 %1685
    %1689 = vset.pattern.permute.xlu0 0
    %1690 = vperm.xlu0 %1689, %v1664
    %v1691 = vpop.permute.xlu0 %1690
    %1694 = vset.pattern.permute.xlu0 0
    %1695 = vperm.xlu0 %1694, %v1665
    %v1696 = vpop.permute.xlu0 %1695
    %1699 = vset.pattern.permute.xlu0 0
    %1700 = vperm.xlu0 %1699, %v1666
    %v1701 = vpop.permute.xlu0 %1700
    %1704 = vset.pattern.permute.xlu0 0
    %1705 = vperm.xlu0 %1704, %v1667
    %v1706 = vpop.permute.xlu0 %1705
    %1709 = vset.pattern.permute.xlu0 0
    %1710 = vperm.xlu0 %1709, %v1668
    %v1711 = vpop.permute.xlu0 %1710
    %1714 = vset.pattern.permute.xlu0 0
    %1715 = vperm.xlu0 %1714, %v1669
    %v1716 = vpop.permute.xlu0 %1715
    %1719 = vset.pattern.permute.xlu0 0
    %1720 = vperm.xlu0 %1719, %v1670
    %v1721 = vpop.permute.xlu0 %1720
    %1724 = vset.pattern.permute.xlu0 0
    %1725 = vperm.xlu0 %1724, %v1671
    %v1726 = vpop.permute.xlu0 %1725
    %1729 = vset.pattern.permute.xlu0 0
    %1730 = vperm.xlu0 %1729, %v1672
    %v1731 = vpop.permute.xlu0 %1730
    %1734 = vset.pattern.permute.xlu0 0
    %1735 = vperm.xlu0 %1734, %v1673
    %v1736 = vpop.permute.xlu0 %1735
    %1739 = vset.pattern.permute.xlu0 0
    %1740 = vperm.xlu0 %1739, %v1674
    %v1741 = vpop.permute.xlu0 %1740
    %1744 = vset.pattern.permute.xlu0 0
    %1745 = vperm.xlu0 %1744, %v1675
    %v1746 = vpop.permute.xlu0 %1745
    %1749 = vset.pattern.permute.xlu0 0
    %1750 = vperm.xlu0 %1749, %v1676
    %v1751 = vpop.permute.xlu0 %1750
    %1754 = vset.pattern.permute.xlu0 0
    %1755 = vperm.xlu0 %1754, %v1677
    %v1756 = vpop.permute.xlu0 %1755
    %v1758 = vadd.f32 %v1646, %v1681
    %v1759 = vadd.f32 %v1647, %v1686
    %v1760 = vadd.f32 %v1648, %v1691
    %v1761 = vadd.f32 %v1649, %v1696
    %v1762 = vadd.f32 %v1650, %v1701
    %v1763 = vadd.f32 %v1651, %v1706
    %v1764 = vadd.f32 %v1652, %v1711
    %v1765 = vadd.f32 %v1653, %v1716
    %v1766 = vadd.f32 %v1654, %v1721
    %v1767 = vadd.f32 %v1655, %v1726
    %v1768 = vadd.f32 %v1656, %v1731
    %v1769 = vadd.f32 %v1657, %v1736
    %v1770 = vadd.f32 %v1658, %v1741
    %v1771 = vadd.f32 %v1659, %v1746
    %v1772 = vadd.f32 %v1660, %v1751
    %v1773 = vadd.f32 %v1661, %v1756
    %vm1774 = vcmp.gt.f32.partialorder %v1758, 0.0
    %vm1775 = vcmp.gt.f32.partialorder %v1759, 0.0
    %vm1776 = vcmp.gt.f32.partialorder %v1760, 0.0
    %vm1777 = vcmp.gt.f32.partialorder %v1761, 0.0
    %vm1778 = vcmp.gt.f32.partialorder %v1762, 0.0
    %vm1779 = vcmp.gt.f32.partialorder %v1763, 0.0
    %vm1780 = vcmp.gt.f32.partialorder %v1764, 0.0
    %vm1781 = vcmp.gt.f32.partialorder %v1765, 0.0
    %vm1782 = vcmp.gt.f32.partialorder %v1766, 0.0
    %vm1783 = vcmp.gt.f32.partialorder %v1767, 0.0
    %vm1784 = vcmp.gt.f32.partialorder %v1768, 0.0
    %vm1785 = vcmp.gt.f32.partialorder %v1769, 0.0
    %vm1786 = vcmp.gt.f32.partialorder %v1770, 0.0
    %vm1787 = vcmp.gt.f32.partialorder %v1771, 0.0
    %vm1788 = vcmp.gt.f32.partialorder %v1772, 0.0
    %vm1789 = vcmp.gt.f32.partialorder %v1773, 0.0
    %v1790 = vmul.f32 %v1758, 0.2
    %v1791 = vmul.f32 %v1759, 0.2
    %v1792 = vmul.f32 %v1760, 0.2
    %v1793 = vmul.f32 %v1761, 0.2
    %v1794 = vmul.f32 %v1762, 0.2
    %v1795 = vmul.f32 %v1763, 0.2
    %v1796 = vmul.f32 %v1764, 0.2
    %v1797 = vmul.f32 %v1765, 0.2
    %v1798 = vmul.f32 %v1766, 0.2
    %v1799 = vmul.f32 %v1767, 0.2
    %v1800 = vmul.f32 %v1768, 0.2
    %v1801 = vmul.f32 %v1769, 0.2
    %v1802 = vmul.f32 %v1770, 0.2
    %v1803 = vmul.f32 %v1771, 0.2
    %v1804 = vmul.f32 %v1772, 0.2
    %v1805 = vmul.f32 %v1773, 0.2
    %v1806 = vsel %vm1774, %v1758, %v1790
    %v1807 = vsel %vm1775, %v1759, %v1791
    %v1808 = vsel %vm1776, %v1760, %v1792
    %v1809 = vsel %vm1777, %v1761, %v1793
    %v1810 = vsel %vm1778, %v1762, %v1794
    %v1811 = vsel %vm1779, %v1763, %v1795
    %v1812 = vsel %vm1780, %v1764, %v1796
    %v1813 = vsel %vm1781, %v1765, %v1797
    %v1814 = vsel %vm1782, %v1766, %v1798
    %v1815 = vsel %vm1783, %v1767, %v1799
    %v1816 = vsel %vm1784, %v1768, %v1800
    %v1817 = vsel %vm1785, %v1769, %v1801
    %v1818 = vsel %vm1786, %v1770, %v1802
    %v1819 = vsel %vm1787, %v1771, %v1803
    %v1820 = vsel %vm1788, %v1772, %v1804
    %v1821 = vsel %vm1789, %v1773, %v1805
    %v1822 = vld [vmem:[%s4] sm:$0xff]
    %v1823 = vld [vmem:[%s4 + $0x8] sm:$0xff]
    %v1824 = vld [vmem:[%s4 + $0x10] sm:$0xff]
    %v1825 = vld [vmem:[%s4 + $0x18] sm:$0xff]
    %v1826 = vld [vmem:[%s4 + $0x20] sm:$0xff]
    %v1827 = vld [vmem:[%s4 + $0x28] sm:$0xff]
    %v1828 = vld [vmem:[%s4 + $0x30] sm:$0xff]
    %v1829 = vld [vmem:[%s4 + $0x38] sm:$0xff]
    %v1830 = vld [vmem:[%s4 + $0x40] sm:$0xff]
    %v1831 = vld [vmem:[%s4 + $0x48] sm:$0xff]
    %v1832 = vld [vmem:[%s4 + $0x50] sm:$0xff]
    %v1833 = vld [vmem:[%s4 + $0x58] sm:$0xff]
    %v1834 = vld [vmem:[%s4 + $0x60] sm:$0xff]
    %v1835 = vld [vmem:[%s4 + $0x68] sm:$0xff]
    %v1836 = vld [vmem:[%s4 + $0x70] sm:$0xff]
    %v1837 = vld [vmem:[%s4 + $0x78] sm:$0xff]
    %v1838 = vmul.f32 %v1806, %v1822
    %v1839 = vmul.f32 %v1807, %v1823
    %v1840 = vmul.f32 %v1808, %v1824
    %v1841 = vmul.f32 %v1809, %v1825
    %v1842 = vmul.f32 %v1810, %v1826
    %v1843 = vmul.f32 %v1811, %v1827
    %v1844 = vmul.f32 %v1812, %v1828
    %v1845 = vmul.f32 %v1813, %v1829
    %v1846 = vmul.f32 %v1814, %v1830
    %v1847 = vmul.f32 %v1815, %v1831
    %v1848 = vmul.f32 %v1816, %v1832
    %v1849 = vmul.f32 %v1817, %v1833
    %v1850 = vmul.f32 %v1818, %v1834
    %v1851 = vmul.f32 %v1819, %v1835
    %v1852 = vmul.f32 %v1820, %v1836
    %v1853 = vmul.f32 %v1821, %v1837
    %v1854 = vld [vmem:[%s5] sm:$0xff]
    %v1855 = vld [vmem:[%s5 + $0x8] sm:$0xff]
    %v1856 = vld [vmem:[%s5 + $0x10] sm:$0xff]
    %v1857 = vld [vmem:[%s5 + $0x18] sm:$0xff]
    %v1859 = vsel %vm1309, %v1838, 0
    %v1862 = vsel %vm1309, %v1839, 0
    %v1865 = vsel %vm1309, %v1840, 0
    %v1868 = vsel %vm1309, %v1841, 0
    %v1871 = vsel %vm1309, %v1842, 0
    %v1874 = vsel %vm1309, %v1843, 0
    %v1877 = vsel %vm1309, %v1844, 0
    %v1880 = vsel %vm1309, %v1845, 0
    %v1883 = vsel %vm1309, %v1846, 0
    %v1886 = vsel %vm1309, %v1847, 0
    %v1889 = vsel %vm1309, %v1848, 0
    %v1892 = vsel %vm1309, %v1849, 0
    %v1895 = vsel %vm1309, %v1850, 0
    %v1898 = vsel %vm1309, %v1851, 0
    %v1901 = vsel %vm1309, %v1852, 0
    %v1904 = vsel %vm1309, %v1853, 0
    %1906 = vmatprep.subr.mxu0 0.0
    %1907 = vmatpush1.msra.mxu0 %v1854
    %1908 = vmatprep.subr.mxu0 0.0
    %1909 = vmatpush1.msra.mxu0 %v1855
    %1910 = vmatprep.subr.mxu0 0.0
    %1911 = vmatpush1.msra.mxu0 %v1856
    %1912 = vmatprep.subr.mxu0 0.0
    %1913 = vmatpush1.msra.mxu0 %v1857
    %1914 = vmatprep.subr.mxu0 0.0
    %1915 = vmatpush1.msra.mxu0 0.0
    %1916 = vmatprep.subr.mxu0 0.0
    %1917 = vmatpush1.msra.mxu0 0.0
    %1918 = vmatprep.subr.mxu0 0.0
    %1919 = vmatpush1.msra.mxu0 0.0
    %1920 = vmatprep.subr.mxu0 0.0
    %1921 = vmatpush1.msra.mxu0 0.0
    %1922 = vmatprep.subr.mxu0 0.0
    %1923 = vmatpush1.msra.mxu0 0.0
    %1924 = vmatprep.subr.mxu0 0.0
    %1925 = vmatpush1.msra.mxu0 0.0
    %1926 = vmatprep.subr.mxu0 0.0
    %1927 = vmatpush1.msra.mxu0 0.0
    %1928 = vmatprep.subr.mxu0 0.0
    %1929 = vmatpush1.msra.mxu0 0.0
    %1930 = vmatprep.subr.mxu0 0.0
    %1931 = vmatpush1.msra.mxu0 0.0
    %1932 = vmatprep.subr.mxu0 0.0
    %1933 = vmatpush1.msra.mxu0 0.0
    %1934 = vmatprep.subr.mxu0 0.0
    %1935 = vmatpush1.msra.mxu0 0.0
    %1936 = vmatprep.subr.mxu0 0.0
    %1937 = vmatpush1.msra.mxu0 0.0
    %1938 = vmatprep.subr.mxu0 0.0
    %1939 = vmatpush1.msra.mxu0 0.0
    %1940 = vmatprep.subr.mxu0 0.0
    %1941 = vmatpush1.msra.mxu0 0.0
    %1942 = vmatprep.subr.mxu0 0.0
    %1943 = vmatpush1.msra.mxu0 0.0
    %1944 = vmatprep.subr.mxu0 0.0
    %1945 = vmatpush1.msra.mxu0 0.0
    %1946 = vmatprep.subr.mxu0 0.0
    %1947 = vmatpush1.msra.mxu0 0.0
    %1948 = vmatprep.subr.mxu0 0.0
    %1949 = vmatpush1.msra.mxu0 0.0
    %1950 = vmatprep.subr.mxu0 0.0
    %1951 = vmatpush1.msra.mxu0 0.0
    %1952 = vmatprep.subr.mxu0 0.0
    %1953 = vmatpush1.msra.mxu0 0.0
    %1954 = vmatprep.subr.mxu0 0.0
    %1955 = vmatpush1.msra.mxu0 0.0
    %1956 = vmatprep.subr.mxu0 0.0
    %1957 = vmatpush1.msra.mxu0 0.0
    %1958 = vmatprep.subr.mxu0 0.0
    %1959 = vmatpush1.msra.mxu0 0.0
    %1960 = vmatprep.subr.mxu0 0.0
    %1961 = vmatpush1.msra.mxu0 0.0
    %1962 = vmatprep.subr.mxu0 0.0
    %1963 = vmatpush1.msra.mxu0 0.0
    %1964 = vmatprep.subr.mxu0 0.0
    %1965 = vmatpush1.msra.mxu0 0.0
    %1966 = vmatprep.subr.mxu0 0.0
    %1967 = vmatpush1.msra.mxu0 0.0
    %1968 = vmatprep.subr.mxu0 0.0
    %1969 = vmatpush1.msra.mxu0 0.0
    %1970 = vmatprep.mubr.f32.mxu0 0.0
    %1971 = vmatmul.mubr.f32.gmra.mrb[0].mxu0 %v1859
    %v1972 = vpop.f32.mrb[0].mxu0
    %v1973 = vadd.f32 0.0, %v1972
    %v1974 = vpop.f32.mrb[0].mxu0
    %1975 = vmatprep.mubr.f32.mxu0 0.0
    %1976 = vmatmul.mubr.f32.gmra.mrb[0].mxu0 %v1862
    %v1977 = vpop.f32.mrb[0].mxu0
    %v1978 = vadd.f32 0.0, %v1977
    %v1979 = vpop.f32.mrb[0].mxu0
    %1980 = vmatprep.mubr.f32.mxu0 0.0
    %1981 = vmatmul.mubr.f32.gmra.mrb[0].mxu0 %v1865
    %v1982 = vpop.f32.mrb[0].mxu0
    %v1983 = vadd.f32 0.0, %v1982
    %v1984 = vpop.f32.mrb[0].mxu0
    %1985 = vmatprep.mubr.f32.mxu0 0.0
    %1986 = vmatmul.mubr.f32.gmra.mrb[0].mxu0 %v1868
    %v1987 = vpop.f32.mrb[0].mxu0
    %v1988 = vadd.f32 0.0, %v1987
    %v1989 = vpop.f32.mrb[0].mxu0
    %1990 = vmatprep.mubr.f32.mxu0 0.0
    %1991 = vmatmul.mubr.f32.gmra.mrb[0].mxu0 %v1871
    %v1992 = vpop.f32.mrb[0].mxu0
    %v1993 = vadd.f32 0.0, %v1992
    %v1994 = vpop.f32.mrb[0].mxu0
    %1995 = vmatprep.mubr.f32.mxu0 0.0
    %1996 = vmatmul.mubr.f32.gmra.mrb[0].mxu0 %v1874
    %v1997 = vpop.f32.mrb[0].mxu0
    %v1998 = vadd.f32 0.0, %v1997
    %v1999 = vpop.f32.mrb[0].mxu0
    %2000 = vmatprep.mubr.f32.mxu0 0.0
    %2001 = vmatmul.mubr.f32.gmra.mrb[0].mxu0 %v1877
    %v2002 = vpop.f32.mrb[0].mxu0
    %v2003 = vadd.f32 0.0, %v2002
    %v2004 = vpop.f32.mrb[0].mxu0
    %2005 = vmatprep.mubr.f32.mxu0 0.0
    %2006 = vmatmul.mubr.f32.gmra.mrb[0].mxu0 %v1880
    %v2007 = vpop.f32.mrb[0].mxu0
    %v2008 = vadd.f32 0.0, %v2007
    %v2009 = vpop.f32.mrb[0].mxu0
    %2010 = vmatprep.mubr.f32.mxu0 0.0
    %2011 = vmatmul.mubr.f32.gmra.mrb[0].mxu0 %v1883
    %v2012 = vpop.f32.mrb[0].mxu0
    %v2013 = vadd.f32 0.0, %v2012
    %v2014 = vpop.f32.mrb[0].mxu0
    %2015 = vmatprep.mubr.f32.mxu0 0.0
    %2016 = vmatmul.mubr.f32.gmra.mrb[0].mxu0 %v1886
    %v2017 = vpop.f32.mrb[0].mxu0
    %v2018 = vadd.f32 0.0, %v2017
    %v2019 = vpop.f32.mrb[0].mxu0
    %2020 = vmatprep.mubr.f32.mxu0 0.0
    %2021 = vmatmul.mubr.f32.gmra.mrb[0].mxu0 %v1889
    %v2022 = vpop.f32.mrb[0].mxu0
    %v2023 = vadd.f32 0.0, %v2022
    %v2024 = vpop.f32.mrb[0].mxu0
    %2025 = vmatprep.mubr.f32.mxu0 0.0
    %2026 = vmatmul.mubr.f32.gmra.mrb[0].mxu0 %v1892
    %v2027 = vpop.f32.mrb[0].mxu0
    %v2028 = vadd.f32 0.0, %v2027
    %v2029 = vpop.f32.mrb[0].mxu0
    %2030 = vmatprep.mubr.f32.mxu0 0.0
    %2031 = vmatmul.mubr.f32.gmra.mrb[0].mxu0 %v1895
    %v2032 = vpop.f32.mrb[0].mxu0
    %v2033 = vadd.f32 0.0, %v2032
    %v2034 = vpop.f32.mrb[0].mxu0
    %2035 = vmatprep.mubr.f32.mxu0 0.0
    %2036 = vmatmul.mubr.f32.gmra.mrb[0].mxu0 %v1898
    %v2037 = vpop.f32.mrb[0].mxu0
    %v2038 = vadd.f32 0.0, %v2037
    %v2039 = vpop.f32.mrb[0].mxu0
    %2040 = vmatprep.mubr.f32.mxu0 0.0
    %2041 = vmatmul.mubr.f32.gmra.mrb[0].mxu0 %v1901
    %v2042 = vpop.f32.mrb[0].mxu0
    %v2043 = vadd.f32 0.0, %v2042
    %v2044 = vpop.f32.mrb[0].mxu0
    %2045 = vmatprep.mubr.f32.mxu0 0.0
    %2046 = vmatmul.mubr.f32.gmra.mrb[0].mxu0 %v1904
    %v2047 = vpop.f32.mrb[0].mxu0
    %v2048 = vadd.f32 0.0, %v2047
    %v2049 = vpop.f32.mrb[0].mxu0
    %2050 = vdwg.mxu0
    %vm2051 = vcmask 15360
    %v2052 = vsel %vm2051, %v1973, 0.0
    %v2053 = vsel %vm2051, %v1978, 0.0
    %v2054 = vadd.f32 %v2052, %v2053
    %v2055 = vsel %vm2051, %v1983, 0.0
    %v2056 = vadd.f32 %v2054, %v2055
    %v2057 = vsel %vm2051, %v1988, 0.0
    %v2058 = vadd.f32 %v2056, %v2057
    %v2059 = vsel %vm2051, %v1993, 0.0
    %v2060 = vadd.f32 %v2058, %v2059
    %v2061 = vsel %vm2051, %v1998, 0.0
    %v2062 = vadd.f32 %v2060, %v2061
    %v2063 = vsel %vm2051, %v2003, 0.0
    %v2064 = vadd.f32 %v2062, %v2063
    %v2065 = vsel %vm2051, %v2008, 0.0
    %v2066 = vadd.f32 %v2064, %v2065
    %v2067 = vsel %vm2051, %v2013, 0.0
    %v2068 = vadd.f32 %v2066, %v2067
    %v2069 = vsel %vm2051, %v2018, 0.0
    %v2070 = vadd.f32 %v2068, %v2069
    %v2071 = vsel %vm2051, %v2023, 0.0
    %v2072 = vadd.f32 %v2070, %v2071
    %v2073 = vsel %vm2051, %v2028, 0.0
    %v2074 = vadd.f32 %v2072, %v2073
    %v2075 = vsel %vm2051, %v2033, 0.0
    %v2076 = vadd.f32 %v2074, %v2075
    %v2077 = vsel %vm2051, %v2038, 0.0
    %v2078 = vadd.f32 %v2076, %v2077
    %v2079 = vsel %vm2051, %v2043, 0.0
    %v2080 = vadd.f32 %v2078, %v2079
    %v2081 = vsel %vm2051, %v2048, 0.0
    %v2082 = vadd.f32 %v2080, %v2081
    %v2083 = vrot.slane %v2082, 4
    %v2084 = vadd.f32 %v2082, %v2083
    %v2085 = vrot.slane %v2084, 2
    %v2086 = vadd.f32 %v2084, %v2085
    %v2087 = vrot.slane %v2086, 1
    %v2088 = vadd.f32 %v2086, %v2087
    %v2089 = vxor.u32 %v2088, 2147483648
    %v2090 = vmul.f32 %v2089, 1.442695
    %v2091 = vpow.pop %v2090
    %v2092 = vadd.f32 %v2091, 1.0
    %v2093 = vrcp.pop %v2092
    %v2094 = vmul.f32 1.0, %v2093
    %vm2095 = vcmask 8192
    %2096 = vst.msk [vmem:[#allocation2] sm:$0x1] %vm2095, %v2094
    // Predicated region
    $region26: #{discriminator_stage2.9} parent=1 // pred_check
      _
    $region27: #{discriminator_stage2.9} parent=1 // pred_check_branch
      %2098 = sbr.rel (0) target = $region29
    $region28: #{discriminator_stage2.9} parent=1 // pred_region
      %s2100 = ssub.s32 16, 16
      %2101 = vsyncadd [#allocation3], %s2100
      %s2103 = sshll.u32 [#allocation2], 4
      %s2104 = int_to_ptr.vmem [resolvable:$true] %s2103
      %2106 = dma.vmem_to_hbm [thread:$0]  %s2104, 16, %s6, [#allocation3]
    $region29: #{discriminator_stage2.9} parent=1 // pred_fallthru
      _
    // Predicated region
    $region30: #{discriminator_stage2.9} parent=1 // pred_check
      _
    $region31: #{discriminator_stage2.9} parent=1 // pred_check_branch
      %2108 = sbr.rel (0) target = $region33
    $region32: #{discriminator_stage2.9} parent=1 // pred_region
      %2109 = dma.done [#allocation3], 16
    $region33: #{discriminator_stage2.9} parent=1 // pred_fallthru
      _
    %2110 = vsyncpa [#allocation3], 1

</llo_original>
